<compile_context>
chip_gen: v7x
topology: tpu7x:2x2x1
jax: 0.10.0
libtpu: 0.0.40
codegen_flags: <defaults>
</compile_context>

<pallas_src>
import functools

import jax
import jax.numpy as jnp
from jax import lax
from jax.experimental import pallas as pl
from jax.experimental.pallas import tpu as pltpu

CPAD = 128       # every channel dimension zero-padded to one full vreg lane width
HEAD_PAD = 128   # fused head columns: [adv | aux | zero-pad] -> 128 lanes
NEG_INF = -1e30


# ----------------------------------------------------------------------------
# In-kernel conv block: Conv(3, stride 2, pad 1) + LeakyReLU(0.2) (+ BN shift)
# ----------------------------------------------------------------------------
def _conv_block(x, pad_ref, slab_ref, w_ref, b_ref, shift_ref, n, h_in):
    """x: (n*h_in*h_in, CPAD) f32 value, rows ordered (n, h, w).  Returns the
    same layout at the output resolution, fully inside VMEM."""
    w_in = h_in
    hp = h_in + 2                       # zero-padded spatial extent
    ho = h_in // 2
    wo = ho

    # 1) scatter the activation into a zero-bordered padded image buffer (f32)
    pad_ref[...] = jnp.zeros(pad_ref.shape, pad_ref.dtype)
    for nn in range(n):
        for h in range(h_in):
            src = (nn * h_in + h) * w_in
            dst = (nn * hp + h + 1) * hp + 1
            pad_ref[dst:dst + w_in, :] = x[src:src + w_in, :]

    # 2) gather the nine 3x3/stride-2 taps with STATIC STRIDED SLICES into a
    #    lane-concatenated (M_out, 9*128) patch slab (no MXU gather matmuls)
    for di in range(3):
        for dj in range(3):
            t = di * 3 + dj
            for nn in range(n):
                for oh in range(ho):
                    base = (nn * hp + 2 * oh + di) * hp + dj
                    if wo == 1:
                        rows = pad_ref[base:base + 1, :]
                    else:
                        rows = pad_ref[pl.ds(base, wo, stride=2), :]
                    dst = (nn * ho + oh) * wo
                    slab_ref[dst:dst + wo, t * CPAD:(t + 1) * CPAD] = rows

    # 3) ONE long-K matmul (M_out, 9*128) @ (9*128, 128), f32 accumulation
    y = jnp.dot(slab_ref[...].astype(jnp.bfloat16), w_ref[...],
                preferred_element_type=jnp.float32)
    y = y + b_ref[...]
    y = jnp.maximum(y, 0.2 * y)          # LeakyReLU(0.2); Dropout2d = identity (eval)
    return y + shift_ref[...]            # BatchNorm shift (scale folded into W/b)


# ----------------------------------------------------------------------------
# Fused kernel: 4 conv blocks + (Linear+Sigmoid, Linear+Softmax) heads
# ----------------------------------------------------------------------------
def _disc_kernel(p1_ref, w1_ref, b1_ref,
                 w2_ref, b2_ref, s2_ref,
                 w3_ref, b3_ref, s3_ref,
                 w4_ref, b4_ref, s4_ref,
                 wh_ref, bh_ref,
                 out_ref,
                 p1pad_ref, pad2_ref, slab2_ref, pad3_ref, slab3_ref,
                 pad4_ref, slab4_ref,
                 *, n_batch, img_size, n_classes):
    h1 = img_size // 2

    # ---- block 1: lane-pad the raw (M, 9*C) im2col patches in VMEM ----------
    p1pad_ref[...] = jnp.zeros(p1pad_ref.shape, p1pad_ref.dtype)
    p1pad_ref[:, :p1_ref.shape[1]] = p1_ref[...]
    y = jnp.dot(p1pad_ref[...], w1_ref[...], preferred_element_type=jnp.float32)
    y = y + b1_ref[...]
    x = jnp.maximum(y, 0.2 * y)          # LeakyReLU(0.2); no BN in block 1

    # ---- blocks 2-4: conv done fully inside VMEM ----------------------------
    x = _conv_block(x, pad2_ref, slab2_ref, w2_ref, b2_ref, s2_ref, n_batch, h1)
    x = _conv_block(x, pad3_ref, slab3_ref, w3_ref, b3_ref, s3_ref, n_batch, h1 // 2)
    x = _conv_block(x, pad4_ref, slab4_ref, w4_ref, b4_ref, s4_ref, n_batch, h1 // 4)

    # ---- fused heads: lane-dense matmul; col 0 = adv, 1..n_cls = aux --------
    s_taps = wh_ref.shape[0]
    xb = x.astype(jnp.bfloat16)
    if s_taps == 1:                      # img_size == 16: NCHW flatten is identity
        logits = jnp.dot(xb, wh_ref[0], preferred_element_type=jnp.float32)
    else:                                # general ds > 1: static row regroup, no gather matmul
        logits = jnp.zeros((n_batch, HEAD_PAD), jnp.float32)
        for s in range(s_taps):
            rows = jnp.concatenate(
                [xb[nn * s_taps + s: nn * s_taps + s + 1, :] for nn in range(n_batch)],
                axis=0)
            logits = logits + jnp.dot(rows, wh_ref[s], preferred_element_type=jnp.float32)
    logits = logits + bh_ref[...]

    col = lax.broadcasted_iota(jnp.int32, (n_batch, HEAD_PAD), 1)
    is_cls = (col >= 1) & (col <= n_classes)
    sig = 1.0 / (1.0 + jnp.exp(-logits))                 # adv head: Sigmoid
    masked = jnp.where(is_cls, logits, NEG_INF)          # aux head: Softmax(dim=1)
    mx = jnp.max(masked, axis=-1, keepdims=True)
    e = jnp.exp(masked - mx)                             # pad lanes underflow to 0
    probs = e / jnp.sum(e, axis=-1, keepdims=True)       # exact divide (torch parity)
    out_ref[...] = jnp.where(col == 0, sig, probs)       # lane-dense (N, 128) store


# ----------------------------------------------------------------------------
# Host/XLA-side helpers (run once at init / on the tiny raw input)
# ----------------------------------------------------------------------------
def im2col(x_nhwc, k=3, stride=2, pad=1):
    """Block-1 patch matrix: rows = N*Ho*Wo, cols = k*k*C (tap-major, ch-minor)."""
    n, h, w, c = x_nhwc.shape
    xp = jnp.pad(x_nhwc, ((0, 0), (pad, pad), (pad, pad), (0, 0)))
    ho = (h + 2 * pad - k) // stride + 1
    wo = (w + 2 * pad - k) // stride + 1
    pats = []
    for di in range(k):
        for dj in range(k):
            pats.append(xp[:, di:di + stride * ho:stride, dj:dj + stride * wo:stride, :])
    p = jnp.stack(pats, axis=3)                       # (N, Ho, Wo, k*k, C)
    return p.reshape(n * ho * wo, k * k * c)


def init_params(key, channels, img_size, n_classes):
    assert img_size % 16 == 0, "kernel assumes img_size divisible by 16"
    assert 9 * channels <= CPAD
    dims = [channels, 16, 32, 64, 128]
    has_bn = [False, True, True, True]
    eps = 0.8                                 # nn.BatchNorm2d(out, 0.8) -> eps = 0.8
    blocks = []
    h = img_size
    for i in range(4):
        key, kw, kb = jax.random.split(key, 3)
        cin, cout = dims[i], dims[i + 1]
        ho = (h + 2 - 3) // 2 + 1
        w_t = jax.random.normal(kw, (cout, cin, 3, 3), jnp.float32) * 0.05   # torch layout
        bias = jax.random.normal(kb, (cout,), jnp.float32) * 0.05
        if has_bn[i]:
            gamma = jnp.ones((cout,), jnp.float32)
            beta = jnp.zeros((cout,), jnp.float32)
            r_mean = jnp.zeros((cout,), jnp.float32)
            r_var = jnp.ones((cout,), jnp.float32)
            scale = gamma / jnp.sqrt(r_var + eps)
            shift = beta - r_mean * scale
        else:
            scale = jnp.ones((cout,), jnp.float32)
            shift = jnp.zeros((cout,), jnp.float32)
        # Fold BN scale into W and bias (valid while scale > 0; LeakyReLU is
        # positively homogeneous).  TODO(synk): for trained params with
        # gamma <= 0, keep the scale as a separate epilogue multiply instead.
        b_pad = jnp.zeros((1, CPAD), jnp.float32).at[0, :cout].set(bias * scale)
        s_pad = jnp.zeros((1, CPAD), jnp.float32).at[0, :cout].set(shift)
        if i == 0:
            k_real = 9 * cin
            w_mat = jnp.transpose(w_t, (2, 3, 1, 0)).reshape(k_real, cout) * scale[None, :]
            w_pad = jnp.zeros((CPAD, CPAD), jnp.float32).at[:k_real, :cout].set(w_mat)
            blocks.append(dict(w=w_pad.astype(jnp.bfloat16), b=b_pad))
        else:
            # One long-K weight: rows [t*128, t*128+cin) hold tap t = 3*di+dj.
            w_big = jnp.zeros((9 * CPAD, CPAD), jnp.float32)
            for di in range(3):
                for dj in range(3):
                    t = di * 3 + dj
                    wt = w_t[:, :, di, dj].T * scale[None, :]          # (cin, cout)
                    w_big = w_big.at[t * CPAD:t * CPAD + cin, :cout].set(wt)
            blocks.append(dict(w=w_big.astype(jnp.bfloat16), b=b_pad, shift=s_pad))
        h = ho

    ds = img_size // (2 ** 4)
    s_taps = ds * ds
    f_dim = 128 * s_taps
    key, ka, kb, kc, kd = jax.random.split(key, 5)
    adv_w = jax.random.normal(ka, (1, f_dim), jnp.float32) * 0.05            # torch (out, in)
    adv_b = jax.random.normal(kb, (1,), jnp.float32) * 0.05
    aux_w = jax.random.normal(kc, (n_classes, f_dim), jnp.float32) * 0.05
    aux_b = jax.random.normal(kd, (n_classes,), jnp.float32) * 0.05

    # Fused head weight, pre-permuted to the kernel's (n, spatial)-row layout so
    # the NCHW flatten + two separate Linears become one lane-dense matmul.
    comb_w = jnp.concatenate([adv_w, aux_w], axis=0)                         # (1+ncls, F)
    comb_b = jnp.concatenate([adv_b, aux_b], axis=0)                         # (1+ncls,)
    wh = jnp.zeros((s_taps, CPAD, HEAD_PAD), jnp.float32)
    for s in range(s_taps):
        wh = wh.at[s, :128, :1 + n_classes].set(comb_w[:, s::s_taps].T)
    bh = jnp.zeros((1, HEAD_PAD), jnp.float32).at[0, :1 + n_classes].set(comb_b)

    return dict(blocks=blocks, head_w=wh.astype(jnp.bfloat16), head_b=bh,
                n_classes=n_classes)


def discriminator_forward(img_nchw, params):
    n_batch, _, img_size, _ = img_nchw.shape
    n_classes = params["n_classes"]
    h1, h2, h3 = img_size // 2, img_size // 4, img_size // 8
    ds = img_size // 16

    # Block-1 patches built by XLA from the tiny raw input; shipped UN-padded
    # (no HBM DMA of 92 zero lanes per row) and lane-padded inside the kernel.
    x_nhwc = jnp.transpose(img_nchw, (0, 2, 3, 1))
    patches = im2col(x_nhwc).astype(jnp.bfloat16)                  # (N*h1*h1, 9*C)

    blocks = params["blocks"]
    operands = [patches, blocks[0]["w"], blocks[0]["b"]]
    for blk in blocks[1:]:
        operands += [blk["w"], blk["b"], blk["shift"]]
    operands += [params["head_w"], params["head_b"]]

    scratch = [
        pltpu.VMEM((n_batch * h1 * h1, CPAD), jnp.bfloat16),              # block-1 lane-padded patches
        pltpu.VMEM((n_batch * (h1 + 2) * (h1 + 2), CPAD), jnp.float32),   # block-2 padded activation
        pltpu.VMEM((n_batch * h2 * h2, 9 * CPAD), jnp.float32),           # block-2 patch slab
        pltpu.VMEM((n_batch * (h2 + 2) * (h2 + 2), CPAD), jnp.float32),   # block-3 padded activation
        pltpu.VMEM((n_batch * h3 * h3, 9 * CPAD), jnp.float32),           # block-3 patch slab
        pltpu.VMEM((n_batch * (h3 + 2) * (h3 + 2), CPAD), jnp.float32),   # block-4 padded activation
        pltpu.VMEM((n_batch * ds * ds, 9 * CPAD), jnp.float32),           # block-4 patch slab
    ]

    out = pl.pallas_call(
        functools.partial(_disc_kernel, n_batch=n_batch, img_size=img_size,
                          n_classes=n_classes),
        out_shape=jax.ShapeDtypeStruct((n_batch, HEAD_PAD), jnp.float32),
        scratch_shapes=scratch,
        compiler_params=pltpu.CompilerParams(vmem_limit_bytes=32 * 1024 * 1024),
    )(*operands)

    validity = out[:, 0:1]
    label = out[:, 1:1 + n_classes]
    return validity, label


if __name__ == "__main__":
    B, C, IMG, NCLS = 2, 4, 16, 10
    key = jax.random.PRNGKey(0)
    k_img, k_params = jax.random.split(key)
    img = jax.random.normal(k_img, (B, C, IMG, IMG), jnp.float32)
    params = init_params(k_params, C, IMG, NCLS)

    validity, label = discriminator_forward(img, params)
    jax.block_until_ready((validity, label))

    assert validity.shape == (B, 1)
    assert label.shape == (B, NCLS)
    # eval-mode sanity: sigmoid output in (0,1); softmax rows sum to ~1
    assert bool(jnp.all((validity > 0.0) & (validity < 1.0)))
    assert bool(jnp.all(jnp.abs(jnp.sum(label, axis=1) - 1.0) < 1e-3))
    print("KERNEL_OK")
</pallas_src>

<mosaic_0001>
module attributes {stable_mosaic.version = 11 : i64} {
  func.func @_disc_kernel(%arg0: memref<128x36xbf16, #tpu.memory_space<vmem>>, %arg1: memref<128x128xbf16, #tpu.memory_space<vmem>>, %arg2: memref<1x128xf32, #tpu.memory_space<vmem>>, %arg3: memref<1152x128xbf16, #tpu.memory_space<vmem>>, %arg4: memref<1x128xf32, #tpu.memory_space<vmem>>, %arg5: memref<1x128xf32, #tpu.memory_space<vmem>>, %arg6: memref<1152x128xbf16, #tpu.memory_space<vmem>>, %arg7: memref<1x128xf32, #tpu.memory_space<vmem>>, %arg8: memref<1x128xf32, #tpu.memory_space<vmem>>, %arg9: memref<1152x128xbf16, #tpu.memory_space<vmem>>, %arg10: memref<1x128xf32, #tpu.memory_space<vmem>>, %arg11: memref<1x128xf32, #tpu.memory_space<vmem>>, %arg12: memref<1x128x128xbf16, #tpu.memory_space<vmem>>, %arg13: memref<1x128xf32, #tpu.memory_space<vmem>>, %arg14: memref<2x128xf32, #tpu.memory_space<vmem>>, %arg15: memref<128x128xbf16, #tpu.memory_space<vmem>>, %arg16: memref<200x128xf32, #tpu.memory_space<vmem>>, %arg17: memref<32x1152xf32, #tpu.memory_space<vmem>>, %arg18: memref<72x128xf32, #tpu.memory_space<vmem>>, %arg19: memref<8x1152xf32, #tpu.memory_space<vmem>>, %arg20: memref<32x128xf32, #tpu.memory_space<vmem>>, %arg21: memref<2x1152xf32, #tpu.memory_space<vmem>>) attributes {dimension_semantics = [], scalar_prefetch = 0 : i64, scratch_operands = 7 : i64, tpu.core_type = #tpu.core_type<tc>} {
    %cst = arith.constant 0.000000e+00 : bf16
    %0 = vector.broadcast %cst : bf16 to vector<128x128xbf16>
    %c0 = arith.constant 0 : index
    %c0_0 = arith.constant 0 : index
    %1 = vector.load %arg15[%c0, %c0_0] : memref<128x128xbf16, #tpu.memory_space<vmem>>, vector<128x128xbf16>
    tpu.vector_store %arg15[%c0, %c0_0], %0 {strides = array<i32>} : memref<128x128xbf16, #tpu.memory_space<vmem>>, vector<128x128xbf16>,
    %c0_1 = arith.constant 0 : index
    %c0_2 = arith.constant 0 : index
    %2 = vector.load %arg0[%c0_1, %c0_2] : memref<128x36xbf16, #tpu.memory_space<vmem>>, vector<128x36xbf16>
    %c0_3 = arith.constant 0 : index
    %c0_4 = arith.constant 0 : index
    %3 = vector.load %arg15[%c0_3, %c0_4] : memref<128x128xbf16, #tpu.memory_space<vmem>>, vector<128x36xbf16>
    tpu.vector_store %arg15[%c0_3, %c0_4], %2 {strides = array<i32>} : memref<128x128xbf16, #tpu.memory_space<vmem>>, vector<128x36xbf16>,
    %c0_5 = arith.constant 0 : index
    %c0_6 = arith.constant 0 : index
    %4 = vector.load %arg15[%c0_5, %c0_6] : memref<128x128xbf16, #tpu.memory_space<vmem>>, vector<128x128xbf16>
    %c0_7 = arith.constant 0 : index
    %c0_8 = arith.constant 0 : index
    %5 = vector.load %arg1[%c0_7, %c0_8] : memref<128x128xbf16, #tpu.memory_space<vmem>>, vector<128x128xbf16>
    %cst_9 = arith.constant dense<0.000000e+00> : vector<128x128xf32>
    %6 = tpu.matmul %4, %5, %cst_9 {dimension_numbers = #tpu.dot_dimension_numbers<[1], [0], [0], [1], [0, 0, 1, 1], [], []>} : vector<128x128xbf16>, vector<128x128xbf16>, vector<128x128xf32> -> vector<128x128xf32>
    %c0_10 = arith.constant 0 : index
    %c0_11 = arith.constant 0 : index
    %7 = vector.load %arg2[%c0_10, %c0_11] : memref<1x128xf32, #tpu.memory_space<vmem>>, vector<1x128xf32>
    %8 = vector.broadcast %7 : vector<1x128xf32> to vector<128x128xf32>
    %9 = arith.addf %6, %8 : vector<128x128xf32>
    %cst_12 = arith.constant 2.000000e-01 : f32
    %10 = vector.broadcast %cst_12 : f32 to vector<128x128xf32>
    %11 = arith.mulf %10, %9 : vector<128x128xf32>
    %12 = arith.maximumf %9, %11 : vector<128x128xf32>
    %cst_13 = arith.constant 0.000000e+00 : f32
    %13 = vector.broadcast %cst_13 : f32 to vector<200x128xf32>
    %c0_14 = arith.constant 0 : index
    %c0_15 = arith.constant 0 : index
    %14 = vector.load %arg16[%c0_14, %c0_15] : memref<200x128xf32, #tpu.memory_space<vmem>>, vector<200x128xf32>
    tpu.vector_store %arg16[%c0_14, %c0_15], %13 {strides = array<i32>} : memref<200x128xf32, #tpu.memory_space<vmem>>, vector<200x128xf32>,
    %15 = vector.extract_strided_slice %12 {offsets = [0, 0], sizes = [8, 128], strides = [1, 1]} : vector<128x128xf32> to vector<8x128xf32>
    %c11 = arith.constant 11 : index
    %c0_16 = arith.constant 0 : index
    %16 = vector.load %arg16[%c11, %c0_16] : memref<200x128xf32, #tpu.memory_space<vmem>>, vector<8x128xf32>
    tpu.vector_store %arg16[%c11, %c0_16], %15 {strides = array<i32>} : memref<200x128xf32, #tpu.memory_space<vmem>>, vector<8x128xf32>,
    %17 = vector.extract_strided_slice %12 {offsets = [8, 0], sizes = [8, 128], strides = [1, 1]} : vector<128x128xf32> to vector<8x128xf32>
    %c21 = arith.constant 21 : index
    %c0_17 = arith.constant 0 : index
    %18 = vector.load %arg16[%c21, %c0_17] : memref<200x128xf32, #tpu.memory_space<vmem>>, vector<8x128xf32>
    tpu.vector_store %arg16[%c21, %c0_17], %17 {strides = array<i32>} : memref<200x128xf32, #tpu.memory_space<vmem>>, vector<8x128xf32>,
    %19 = vector.extract_strided_slice %12 {offsets = [16, 0], sizes = [8, 128], strides = [1, 1]} : vector<128x128xf32> to vector<8x128xf32>
    %c31 = arith.constant 31 : index
    %c0_18 = arith.constant 0 : index
    %20 = vector.load %arg16[%c31, %c0_18] : memref<200x128xf32, #tpu.memory_space<vmem>>, vector<8x128xf32>
    tpu.vector_store %arg16[%c31, %c0_18], %19 {strides = array<i32>} : memref<200x128xf32, #tpu.memory_space<vmem>>, vector<8x128xf32>,
    %21 = vector.extract_strided_slice %12 {offsets = [24, 0], sizes = [8, 128], strides = [1, 1]} : vector<128x128xf32> to vector<8x128xf32>
    %c41 = arith.constant 41 : index
    %c0_19 = arith.constant 0 : index
    %22 = vector.load %arg16[%c41, %c0_19] : memref<200x128xf32, #tpu.memory_space<vmem>>, vector<8x128xf32>
    tpu.vector_store %arg16[%c41, %c0_19], %21 {strides = array<i32>} : memref<200x128xf32, #tpu.memory_space<vmem>>, vector<8x128xf32>,
    %23 = vector.extract_strided_slice %12 {offsets = [32, 0], sizes = [8, 128], strides = [1, 1]} : vector<128x128xf32> to vector<8x128xf32>
    %c51 = arith.constant 51 : index
    %c0_20 = arith.constant 0 : index
    %24 = vector.load %arg16[%c51, %c0_20] : memref<200x128xf32, #tpu.memory_space<vmem>>, vector<8x128xf32>
    tpu.vector_store %arg16[%c51, %c0_20], %23 {strides = array<i32>} : memref<200x128xf32, #tpu.memory_space<vmem>>, vector<8x128xf32>,
    %25 = vector.extract_strided_slice %12 {offsets = [40, 0], sizes = [8, 128], strides = [1, 1]} : vector<128x128xf32> to vector<8x128xf32>
    %c61 = arith.constant 61 : index
    %c0_21 = arith.constant 0 : index
    %26 = vector.load %arg16[%c61, %c0_21] : memref<200x128xf32, #tpu.memory_space<vmem>>, vector<8x128xf32>
    tpu.vector_store %arg16[%c61, %c0_21], %25 {strides = array<i32>} : memref<200x128xf32, #tpu.memory_space<vmem>>, vector<8x128xf32>,
    %27 = vector.extract_strided_slice %12 {offsets = [48, 0], sizes = [8, 128], strides = [1, 1]} : vector<128x128xf32> to vector<8x128xf32>
    %c71 = arith.constant 71 : index
    %c0_22 = arith.constant 0 : index
    %28 = vector.load %arg16[%c71, %c0_22] : memref<200x128xf32, #tpu.memory_space<vmem>>, vector<8x128xf32>
    tpu.vector_store %arg16[%c71, %c0_22], %27 {strides = array<i32>} : memref<200x128xf32, #tpu.memory_space<vmem>>, vector<8x128xf32>,
    %29 = vector.extract_strided_slice %12 {offsets = [56, 0], sizes = [8, 128], strides = [1, 1]} : vector<128x128xf32> to vector<8x128xf32>
    %c81 = arith.constant 81 : index
    %c0_23 = arith.constant 0 : index
    %30 = vector.load %arg16[%c81, %c0_23] : memref<200x128xf32, #tpu.memory_space<vmem>>, vector<8x128xf32>
    tpu.vector_store %arg16[%c81, %c0_23], %29 {strides = array<i32>} : memref<200x128xf32, #tpu.memory_space<vmem>>, vector<8x128xf32>,
    %31 = vector.extract_strided_slice %12 {offsets = [64, 0], sizes = [8, 128], strides = [1, 1]} : vector<128x128xf32> to vector<8x128xf32>
    %c111 = arith.constant 111 : index
    %c0_24 = arith.constant 0 : index
    %32 = vector.load %arg16[%c111, %c0_24] : memref<200x128xf32, #tpu.memory_space<vmem>>, vector<8x128xf32>
    tpu.vector_store %arg16[%c111, %c0_24], %31 {strides = array<i32>} : memref<200x128xf32, #tpu.memory_space<vmem>>, vector<8x128xf32>,
    %33 = vector.extract_strided_slice %12 {offsets = [72, 0], sizes = [8, 128], strides = [1, 1]} : vector<128x128xf32> to vector<8x128xf32>
    %c121 = arith.constant 121 : index
    %c0_25 = arith.constant 0 : index
    %34 = vector.load %arg16[%c121, %c0_25] : memref<200x128xf32, #tpu.memory_space<vmem>>, vector<8x128xf32>
    tpu.vector_store %arg16[%c121, %c0_25], %33 {strides = array<i32>} : memref<200x128xf32, #tpu.memory_space<vmem>>, vector<8x128xf32>,
    %35 = vector.extract_strided_slice %12 {offsets = [80, 0], sizes = [8, 128], strides = [1, 1]} : vector<128x128xf32> to vector<8x128xf32>
    %c131 = arith.constant 131 : index
    %c0_26 = arith.constant 0 : index
    %36 = vector.load %arg16[%c131, %c0_26] : memref<200x128xf32, #tpu.memory_space<vmem>>, vector<8x128xf32>
    tpu.vector_store %arg16[%c131, %c0_26], %35 {strides = array<i32>} : memref<200x128xf32, #tpu.memory_space<vmem>>, vector<8x128xf32>,
    %37 = vector.extract_strided_slice %12 {offsets = [88, 0], sizes = [8, 128], strides = [1, 1]} : vector<128x128xf32> to vector<8x128xf32>
    %c141 = arith.constant 141 : index
    %c0_27 = arith.constant 0 : index
    %38 = vector.load %arg16[%c141, %c0_27] : memref<200x128xf32, #tpu.memory_space<vmem>>, vector<8x128xf32>
    tpu.vector_store %arg16[%c141, %c0_27], %37 {strides = array<i32>} : memref<200x128xf32, #tpu.memory_space<vmem>>, vector<8x128xf32>,
    %39 = vector.extract_strided_slice %12 {offsets = [96, 0], sizes = [8, 128], strides = [1, 1]} : vector<128x128xf32> to vector<8x128xf32>
    %c151 = arith.constant 151 : index
    %c0_28 = arith.constant 0 : index
    %40 = vector.load %arg16[%c151, %c0_28] : memref<200x128xf32, #tpu.memory_space<vmem>>, vector<8x128xf32>
    tpu.vector_store %arg16[%c151, %c0_28], %39 {strides = array<i32>} : memref<200x128xf32, #tpu.memory_space<vmem>>, vector<8x128xf32>,
    %41 = vector.extract_strided_slice %12 {offsets = [104, 0], sizes = [8, 128], strides = [1, 1]} : vector<128x128xf32> to vector<8x128xf32>
    %c161 = arith.constant 161 : index
    %c0_29 = arith.constant 0 : index
    %42 = vector.load %arg16[%c161, %c0_29] : memref<200x128xf32, #tpu.memory_space<vmem>>, vector<8x128xf32>
    tpu.vector_store %arg16[%c161, %c0_29], %41 {strides = array<i32>} : memref<200x128xf32, #tpu.memory_space<vmem>>, vector<8x128xf32>,
    %43 = vector.extract_strided_slice %12 {offsets = [112, 0], sizes = [8, 128], strides = [1, 1]} : vector<128x128xf32> to vector<8x128xf32>
    %c171 = arith.constant 171 : index
    %c0_30 = arith.constant 0 : index
    %44 = vector.load %arg16[%c171, %c0_30] : memref<200x128xf32, #tpu.memory_space<vmem>>, vector<8x128xf32>
    tpu.vector_store %arg16[%c171, %c0_30], %43 {strides = array<i32>} : memref<200x128xf32, #tpu.memory_space<vmem>>, vector<8x128xf32>,
    %45 = vector.extract_strided_slice %12 {offsets = [120, 0], sizes = [8, 128], strides = [1, 1]} : vector<128x128xf32> to vector<8x128xf32>
    %c181 = arith.constant 181 : index
    %c0_31 = arith.constant 0 : index
    %46 = vector.load %arg16[%c181, %c0_31] : memref<200x128xf32, #tpu.memory_space<vmem>>, vector<8x128xf32>
    tpu.vector_store %arg16[%c181, %c0_31], %45 {strides = array<i32>} : memref<200x128xf32, #tpu.memory_space<vmem>>, vector<8x128xf32>,
    %c0_32 = arith.constant 0 : index
    %c0_33 = arith.constant 0 : index
    %47 = tpu.strided_load %arg16[%c0_32, %c0_33] {strides = array<i32: 2, 1>} : memref<200x128xf32, #tpu.memory_space<vmem>>, vector<4x128xf32>
    %c0_34 = arith.constant 0 : index
    %c0_35 = arith.constant 0 : index
    %48 = vector.load %arg17[%c0_34, %c0_35] : memref<32x1152xf32, #tpu.memory_space<vmem>>, vector<4x128xf32>
    tpu.vector_store %arg17[%c0_34, %c0_35], %47 {strides = array<i32>} : memref<32x1152xf32, #tpu.memory_space<vmem>>, vector<4x128xf32>,
    %c20 = arith.constant 20 : index
    %c0_36 = arith.constant 0 : index
    %49 = tpu.strided_load %arg16[%c20, %c0_36] {strides = array<i32: 2, 1>} : memref<200x128xf32, #tpu.memory_space<vmem>>, vector<4x128xf32>
    %c4 = arith.constant 4 : index
    %c0_37 = arith.constant 0 : index
    %50 = vector.load %arg17[%c4, %c0_37] : memref<32x1152xf32, #tpu.memory_space<vmem>>, vector<4x128xf32>
    tpu.vector_store %arg17[%c4, %c0_37], %49 {strides = array<i32>} : memref<32x1152xf32, #tpu.memory_space<vmem>>, vector<4x128xf32>,
    %c40 = arith.constant 40 : index
    %c0_38 = arith.constant 0 : index
    %51 = tpu.strided_load %arg16[%c40, %c0_38] {strides = array<i32: 2, 1>} : memref<200x128xf32, #tpu.memory_space<vmem>>, vector<4x128xf32>
    %c8 = arith.constant 8 : index
    %c0_39 = arith.constant 0 : index
    %52 = vector.load %arg17[%c8, %c0_39] : memref<32x1152xf32, #tpu.memory_space<vmem>>, vector<4x128xf32>
    tpu.vector_store %arg17[%c8, %c0_39], %51 {strides = array<i32>} : memref<32x1152xf32, #tpu.memory_space<vmem>>, vector<4x128xf32>,
    %c60 = arith.constant 60 : index
    %c0_40 = arith.constant 0 : index
    %53 = tpu.strided_load %arg16[%c60, %c0_40] {strides = array<i32: 2, 1>} : memref<200x128xf32, #tpu.memory_space<vmem>>, vector<4x128xf32>
    %c12 = arith.constant 12 : index
    %c0_41 = arith.constant 0 : index
    %54 = vector.load %arg17[%c12, %c0_41] : memref<32x1152xf32, #tpu.memory_space<vmem>>, vector<4x128xf32>
    tpu.vector_store %arg17[%c12, %c0_41], %53 {strides = array<i32>} : memref<32x1152xf32, #tpu.memory_space<vmem>>, vector<4x128xf32>,
    %c100 = arith.constant 100 : index
    %c0_42 = arith.constant 0 : index
    %55 = tpu.strided_load %arg16[%c100, %c0_42] {strides = array<i32: 2, 1>} : memref<200x128xf32, #tpu.memory_space<vmem>>, vector<4x128xf32>
    %c16 = arith.constant 16 : index
    %c0_43 = arith.constant 0 : index
    %56 = vector.load %arg17[%c16, %c0_43] : memref<32x1152xf32, #tpu.memory_space<vmem>>, vector<4x128xf32>
    tpu.vector_store %arg17[%c16, %c0_43], %55 {strides = array<i32>} : memref<32x1152xf32, #tpu.memory_space<vmem>>, vector<4x128xf32>,
    %c120 = arith.constant 120 : index
    %c0_44 = arith.constant 0 : index
    %57 = tpu.strided_load %arg16[%c120, %c0_44] {strides = array<i32: 2, 1>} : memref<200x128xf32, #tpu.memory_space<vmem>>, vector<4x128xf32>
    %c20_45 = arith.constant 20 : index
    %c0_46 = arith.constant 0 : index
    %58 = vector.load %arg17[%c20_45, %c0_46] : memref<32x1152xf32, #tpu.memory_space<vmem>>, vector<4x128xf32>
    tpu.vector_store %arg17[%c20_45, %c0_46], %57 {strides = array<i32>} : memref<32x1152xf32, #tpu.memory_space<vmem>>, vector<4x128xf32>,
    %c140 = arith.constant 140 : index
    %c0_47 = arith.constant 0 : index
    %59 = tpu.strided_load %arg16[%c140, %c0_47] {strides = array<i32: 2, 1>} : memref<200x128xf32, #tpu.memory_space<vmem>>, vector<4x128xf32>
    %c24 = arith.constant 24 : index
    %c0_48 = arith.constant 0 : index
    %60 = vector.load %arg17[%c24, %c0_48] : memref<32x1152xf32, #tpu.memory_space<vmem>>, vector<4x128xf32>
    tpu.vector_store %arg17[%c24, %c0_48], %59 {strides = array<i32>} : memref<32x1152xf32, #tpu.memory_space<vmem>>, vector<4x128xf32>,
    %c160 = arith.constant 160 : index
    %c0_49 = arith.constant 0 : index
    %61 = tpu.strided_load %arg16[%c160, %c0_49] {strides = array<i32: 2, 1>} : memref<200x128xf32, #tpu.memory_space<vmem>>, vector<4x128xf32>
    %c28 = arith.constant 28 : index
    %c0_50 = arith.constant 0 : index
    %62 = vector.load %arg17[%c28, %c0_50] : memref<32x1152xf32, #tpu.memory_space<vmem>>, vector<4x128xf32>
    tpu.vector_store %arg17[%c28, %c0_50], %61 {strides = array<i32>} : memref<32x1152xf32, #tpu.memory_space<vmem>>, vector<4x128xf32>,
    %c1 = arith.constant 1 : index
    %c0_51 = arith.constant 0 : index
    %63 = tpu.strided_load %arg16[%c1, %c0_51] {strides = array<i32: 2, 1>} : memref<200x128xf32, #tpu.memory_space<vmem>>, vector<4x128xf32>
    %c0_52 = arith.constant 0 : index
    %c128 = arith.constant 128 : index
    %64 = vector.load %arg17[%c0_52, %c128] : memref<32x1152xf32, #tpu.memory_space<vmem>>, vector<4x128xf32>
    tpu.vector_store %arg17[%c0_52, %c128], %63 {strides = array<i32>} : memref<32x1152xf32, #tpu.memory_space<vmem>>, vector<4x128xf32>,
    %c21_53 = arith.constant 21 : index
    %c0_54 = arith.constant 0 : index
    %65 = tpu.strided_load %arg16[%c21_53, %c0_54] {strides = array<i32: 2, 1>} : memref<200x128xf32, #tpu.memory_space<vmem>>, vector<4x128xf32>
    %c4_55 = arith.constant 4 : index
    %c128_56 = arith.constant 128 : index
    %66 = vector.load %arg17[%c4_55, %c128_56] : memref<32x1152xf32, #tpu.memory_space<vmem>>, vector<4x128xf32>
    tpu.vector_store %arg17[%c4_55, %c128_56], %65 {strides = array<i32>} : memref<32x1152xf32, #tpu.memory_space<vmem>>, vector<4x128xf32>,
    %c41_57 = arith.constant 41 : index
    %c0_58 = arith.constant 0 : index
    %67 = tpu.strided_load %arg16[%c41_57, %c0_58] {strides = array<i32: 2, 1>} : memref<200x128xf32, #tpu.memory_space<vmem>>, vector<4x128xf32>
    %c8_59 = arith.constant 8 : index
    %c128_60 = arith.constant 128 : index
    %68 = vector.load %arg17[%c8_59, %c128_60] : memref<32x1152xf32, #tpu.memory_space<vmem>>, vector<4x128xf32>
    tpu.vector_store %arg17[%c8_59, %c128_60], %67 {strides = array<i32>} : memref<32x1152xf32, #tpu.memory_space<vmem>>, vector<4x128xf32>,
    %c61_61 = arith.constant 61 : index
    %c0_62 = arith.constant 0 : index
    %69 = tpu.strided_load %arg16[%c61_61, %c0_62] {strides = array<i32: 2, 1>} : memref<200x128xf32, #tpu.memory_space<vmem>>, vector<4x128xf32>
    %c12_63 = arith.constant 12 : index
    %c128_64 = arith.constant 128 : index
    %70 = vector.load %arg17[%c12_63, %c128_64] : memref<32x1152xf32, #tpu.memory_space<vmem>>, vector<4x128xf32>
    tpu.vector_store %arg17[%c12_63, %c128_64], %69 {strides = array<i32>} : memref<32x1152xf32, #tpu.memory_space<vmem>>, vector<4x128xf32>,
    %c101 = arith.constant 101 : index
    %c0_65 = arith.constant 0 : index
    %71 = tpu.strided_load %arg16[%c101, %c0_65] {strides = array<i32: 2, 1>} : memref<200x128xf32, #tpu.memory_space<vmem>>, vector<4x128xf32>
    %c16_66 = arith.constant 16 : index
    %c128_67 = arith.constant 128 : index
    %72 = vector.load %arg17[%c16_66, %c128_67] : memref<32x1152xf32, #tpu.memory_space<vmem>>, vector<4x128xf32>
    tpu.vector_store %arg17[%c16_66, %c128_67], %71 {strides = array<i32>} : memref<32x1152xf32, #tpu.memory_space<vmem>>, vector<4x128xf32>,
    %c121_68 = arith.constant 121 : index
    %c0_69 = arith.constant 0 : index
    %73 = tpu.strided_load %arg16[%c121_68, %c0_69] {strides = array<i32: 2, 1>} : memref<200x128xf32, #tpu.memory_space<vmem>>, vector<4x128xf32>
    %c20_70 = arith.constant 20 : index
    %c128_71 = arith.constant 128 : index
    %74 = vector.load %arg17[%c20_70, %c128_71] : memref<32x1152xf32, #tpu.memory_space<vmem>>, vector<4x128xf32>
    tpu.vector_store %arg17[%c20_70, %c128_71], %73 {strides = array<i32>} : memref<32x1152xf32, #tpu.memory_space<vmem>>, vector<4x128xf32>,
    %c141_72 = arith.constant 141 : index
    %c0_73 = arith.constant 0 : index
    %75 = tpu.strided_load %arg16[%c141_72, %c0_73] {strides = array<i32: 2, 1>} : memref<200x128xf32, #tpu.memory_space<vmem>>, vector<4x128xf32>
    %c24_74 = arith.constant 24 : index
    %c128_75 = arith.constant 128 : index
    %76 = vector.load %arg17[%c24_74, %c128_75] : memref<32x1152xf32, #tpu.memory_space<vmem>>, vector<4x128xf32>
    tpu.vector_store %arg17[%c24_74, %c128_75], %75 {strides = array<i32>} : memref<32x1152xf32, #tpu.memory_space<vmem>>, vector<4x128xf32>,
    %c161_76 = arith.constant 161 : index
    %c0_77 = arith.constant 0 : index
    %77 = tpu.strided_load %arg16[%c161_76, %c0_77] {strides = array<i32: 2, 1>} : memref<200x128xf32, #tpu.memory_space<vmem>>, vector<4x128xf32>
    %c28_78 = arith.constant 28 : index
    %c128_79 = arith.constant 128 : index
    %78 = vector.load %arg17[%c28_78, %c128_79] : memref<32x1152xf32, #tpu.memory_space<vmem>>, vector<4x128xf32>
    tpu.vector_store %arg17[%c28_78, %c128_79], %77 {strides = array<i32>} : memref<32x1152xf32, #tpu.memory_space<vmem>>, vector<4x128xf32>,
    %c2 = arith.constant 2 : index
    %c0_80 = arith.constant 0 : index
    %79 = tpu.strided_load %arg16[%c2, %c0_80] {strides = array<i32: 2, 1>} : memref<200x128xf32, #tpu.memory_space<vmem>>, vector<4x128xf32>
    %c0_81 = arith.constant 0 : index
    %c256 = arith.constant 256 : index
    %80 = vector.load %arg17[%c0_81, %c256] : memref<32x1152xf32, #tpu.memory_space<vmem>>, vector<4x128xf32>
    tpu.vector_store %arg17[%c0_81, %c256], %79 {strides = array<i32>} : memref<32x1152xf32, #tpu.memory_space<vmem>>, vector<4x128xf32>,
    %c22 = arith.constant 22 : index
    %c0_82 = arith.constant 0 : index
    %81 = tpu.strided_load %arg16[%c22, %c0_82] {strides = array<i32: 2, 1>} : memref<200x128xf32, #tpu.memory_space<vmem>>, vector<4x128xf32>
    %c4_83 = arith.constant 4 : index
    %c256_84 = arith.constant 256 : index
    %82 = vector.load %arg17[%c4_83, %c256_84] : memref<32x1152xf32, #tpu.memory_space<vmem>>, vector<4x128xf32>
    tpu.vector_store %arg17[%c4_83, %c256_84], %81 {strides = array<i32>} : memref<32x1152xf32, #tpu.memory_space<vmem>>, vector<4x128xf32>,
    %c42 = arith.constant 42 : index
    %c0_85 = arith.constant 0 : index
    %83 = tpu.strided_load %arg16[%c42, %c0_85] {strides = array<i32: 2, 1>} : memref<200x128xf32, #tpu.memory_space<vmem>>, vector<4x128xf32>
    %c8_86 = arith.constant 8 : index
    %c256_87 = arith.constant 256 : index
    %84 = vector.load %arg17[%c8_86, %c256_87] : memref<32x1152xf32, #tpu.memory_space<vmem>>, vector<4x128xf32>
    tpu.vector_store %arg17[%c8_86, %c256_87], %83 {strides = array<i32>} : memref<32x1152xf32, #tpu.memory_space<vmem>>, vector<4x128xf32>,
    %c62 = arith.constant 62 : index
    %c0_88 = arith.constant 0 : index
    %85 = tpu.strided_load %arg16[%c62, %c0_88] {strides = array<i32: 2, 1>} : memref<200x128xf32, #tpu.memory_space<vmem>>, vector<4x128xf32>
    %c12_89 = arith.constant 12 : index
    %c256_90 = arith.constant 256 : index
    %86 = vector.load %arg17[%c12_89, %c256_90] : memref<32x1152xf32, #tpu.memory_space<vmem>>, vector<4x128xf32>
    tpu.vector_store %arg17[%c12_89, %c256_90], %85 {strides = array<i32>} : memref<32x1152xf32, #tpu.memory_space<vmem>>, vector<4x128xf32>,
    %c102 = arith.constant 102 : index
    %c0_91 = arith.constant 0 : index
    %87 = tpu.strided_load %arg16[%c102, %c0_91] {strides = array<i32: 2, 1>} : memref<200x128xf32, #tpu.memory_space<vmem>>, vector<4x128xf32>
    %c16_92 = arith.constant 16 : index
    %c256_93 = arith.constant 256 : index
    %88 = vector.load %arg17[%c16_92, %c256_93] : memref<32x1152xf32, #tpu.memory_space<vmem>>, vector<4x128xf32>
    tpu.vector_store %arg17[%c16_92, %c256_93], %87 {strides = array<i32>} : memref<32x1152xf32, #tpu.memory_space<vmem>>, vector<4x128xf32>,
    %c122 = arith.constant 122 : index
    %c0_94 = arith.constant 0 : index
    %89 = tpu.strided_load %arg16[%c122, %c0_94] {strides = array<i32: 2, 1>} : memref<200x128xf32, #tpu.memory_space<vmem>>, vector<4x128xf32>
    %c20_95 = arith.constant 20 : index
    %c256_96 = arith.constant 256 : index
    %90 = vector.load %arg17[%c20_95, %c256_96] : memref<32x1152xf32, #tpu.memory_space<vmem>>, vector<4x128xf32>
    tpu.vector_store %arg17[%c20_95, %c256_96], %89 {strides = array<i32>} : memref<32x1152xf32, #tpu.memory_space<vmem>>, vector<4x128xf32>,
    %c142 = arith.constant 142 : index
    %c0_97 = arith.constant 0 : index
    %91 = tpu.strided_load %arg16[%c142, %c0_97] {strides = array<i32: 2, 1>} : memref<200x128xf32, #tpu.memory_space<vmem>>, vector<4x128xf32>
    %c24_98 = arith.constant 24 : index
    %c256_99 = arith.constant 256 : index
    %92 = vector.load %arg17[%c24_98, %c256_99] : memref<32x1152xf32, #tpu.memory_space<vmem>>, vector<4x128xf32>
    tpu.vector_store %arg17[%c24_98, %c256_99], %91 {strides = array<i32>} : memref<32x1152xf32, #tpu.memory_space<vmem>>, vector<4x128xf32>,
    %c162 = arith.constant 162 : index
    %c0_100 = arith.constant 0 : index
    %93 = tpu.strided_load %arg16[%c162, %c0_100] {strides = array<i32: 2, 1>} : memref<200x128xf32, #tpu.memory_space<vmem>>, vector<4x128xf32>
    %c28_101 = arith.constant 28 : index
    %c256_102 = arith.constant 256 : index
    %94 = vector.load %arg17[%c28_101, %c256_102] : memref<32x1152xf32, #tpu.memory_space<vmem>>, vector<4x128xf32>
    tpu.vector_store %arg17[%c28_101, %c256_102], %93 {strides = array<i32>} : memref<32x1152xf32, #tpu.memory_space<vmem>>, vector<4x128xf32>,
    %c10 = arith.constant 10 : index
    %c0_103 = arith.constant 0 : index
    %95 = tpu.strided_load %arg16[%c10, %c0_103] {strides = array<i32: 2, 1>} : memref<200x128xf32, #tpu.memory_space<vmem>>, vector<4x128xf32>
    %c0_104 = arith.constant 0 : index
    %c384 = arith.constant 384 : index
    %96 = vector.load %arg17[%c0_104, %c384] : memref<32x1152xf32, #tpu.memory_space<vmem>>, vector<4x128xf32>
    tpu.vector_store %arg17[%c0_104, %c384], %95 {strides = array<i32>} : memref<32x1152xf32, #tpu.memory_space<vmem>>, vector<4x128xf32>,
    %c30 = arith.constant 30 : index
    %c0_105 = arith.constant 0 : index
    %97 = tpu.strided_load %arg16[%c30, %c0_105] {strides = array<i32: 2, 1>} : memref<200x128xf32, #tpu.memory_space<vmem>>, vector<4x128xf32>
    %c4_106 = arith.constant 4 : index
    %c384_107 = arith.constant 384 : index
    %98 = vector.load %arg17[%c4_106, %c384_107] : memref<32x1152xf32, #tpu.memory_space<vmem>>, vector<4x128xf32>
    tpu.vector_store %arg17[%c4_106, %c384_107], %97 {strides = array<i32>} : memref<32x1152xf32, #tpu.memory_space<vmem>>, vector<4x128xf32>,
    %c50 = arith.constant 50 : index
    %c0_108 = arith.constant 0 : index
    %99 = tpu.strided_load %arg16[%c50, %c0_108] {strides = array<i32: 2, 1>} : memref<200x128xf32, #tpu.memory_space<vmem>>, vector<4x128xf32>
    %c8_109 = arith.constant 8 : index
    %c384_110 = arith.constant 384 : index
    %100 = vector.load %arg17[%c8_109, %c384_110] : memref<32x1152xf32, #tpu.memory_space<vmem>>, vector<4x128xf32>
    tpu.vector_store %arg17[%c8_109, %c384_110], %99 {strides = array<i32>} : memref<32x1152xf32, #tpu.memory_space<vmem>>, vector<4x128xf32>,
    %c70 = arith.constant 70 : index
    %c0_111 = arith.constant 0 : index
    %101 = tpu.strided_load %arg16[%c70, %c0_111] {strides = array<i32: 2, 1>} : memref<200x128xf32, #tpu.memory_space<vmem>>, vector<4x128xf32>
    %c12_112 = arith.constant 12 : index
    %c384_113 = arith.constant 384 : index
    %102 = vector.load %arg17[%c12_112, %c384_113] : memref<32x1152xf32, #tpu.memory_space<vmem>>, vector<4x128xf32>
    tpu.vector_store %arg17[%c12_112, %c384_113], %101 {strides = array<i32>} : memref<32x1152xf32, #tpu.memory_space<vmem>>, vector<4x128xf32>,
    %c110 = arith.constant 110 : index
    %c0_114 = arith.constant 0 : index
    %103 = tpu.strided_load %arg16[%c110, %c0_114] {strides = array<i32: 2, 1>} : memref<200x128xf32, #tpu.memory_space<vmem>>, vector<4x128xf32>
    %c16_115 = arith.constant 16 : index
    %c384_116 = arith.constant 384 : index
    %104 = vector.load %arg17[%c16_115, %c384_116] : memref<32x1152xf32, #tpu.memory_space<vmem>>, vector<4x128xf32>
    tpu.vector_store %arg17[%c16_115, %c384_116], %103 {strides = array<i32>} : memref<32x1152xf32, #tpu.memory_space<vmem>>, vector<4x128xf32>,
    %c130 = arith.constant 130 : index
    %c0_117 = arith.constant 0 : index
    %105 = tpu.strided_load %arg16[%c130, %c0_117] {strides = array<i32: 2, 1>} : memref<200x128xf32, #tpu.memory_space<vmem>>, vector<4x128xf32>
    %c20_118 = arith.constant 20 : index
    %c384_119 = arith.constant 384 : index
    %106 = vector.load %arg17[%c20_118, %c384_119] : memref<32x1152xf32, #tpu.memory_space<vmem>>, vector<4x128xf32>
    tpu.vector_store %arg17[%c20_118, %c384_119], %105 {strides = array<i32>} : memref<32x1152xf32, #tpu.memory_space<vmem>>, vector<4x128xf32>,
    %c150 = arith.constant 150 : index
    %c0_120 = arith.constant 0 : index
    %107 = tpu.strided_load %arg16[%c150, %c0_120] {strides = array<i32: 2, 1>} : memref<200x128xf32, #tpu.memory_space<vmem>>, vector<4x128xf32>
    %c24_121 = arith.constant 24 : index
    %c384_122 = arith.constant 384 : index
    %108 = vector.load %arg17[%c24_121, %c384_122] : memref<32x1152xf32, #tpu.memory_space<vmem>>, vector<4x128xf32>
    tpu.vector_store %arg17[%c24_121, %c384_122], %107 {strides = array<i32>} : memref<32x1152xf32, #tpu.memory_space<vmem>>, vector<4x128xf32>,
    %c170 = arith.constant 170 : index
    %c0_123 = arith.constant 0 : index
    %109 = tpu.strided_load %arg16[%c170, %c0_123] {strides = array<i32: 2, 1>} : memref<200x128xf32, #tpu.memory_space<vmem>>, vector<4x128xf32>
    %c28_124 = arith.constant 28 : index
    %c384_125 = arith.constant 384 : index
    %110 = vector.load %arg17[%c28_124, %c384_125] : memref<32x1152xf32, #tpu.memory_space<vmem>>, vector<4x128xf32>
    tpu.vector_store %arg17[%c28_124, %c384_125], %109 {strides = array<i32>} : memref<32x1152xf32, #tpu.memory_space<vmem>>, vector<4x128xf32>,
    %c11_126 = arith.constant 11 : index
    %c0_127 = arith.constant 0 : index
    %111 = tpu.strided_load %arg16[%c11_126, %c0_127] {strides = array<i32: 2, 1>} : memref<200x128xf32, #tpu.memory_space<vmem>>, vector<4x128xf32>
    %c0_128 = arith.constant 0 : index
    %c512 = arith.constant 512 : index
    %112 = vector.load %arg17[%c0_128, %c512] : memref<32x1152xf32, #tpu.memory_space<vmem>>, vector<4x128xf32>
    tpu.vector_store %arg17[%c0_128, %c512], %111 {strides = array<i32>} : memref<32x1152xf32, #tpu.memory_space<vmem>>, vector<4x128xf32>,
    %c31_129 = arith.constant 31 : index
    %c0_130 = arith.constant 0 : index
    %113 = tpu.strided_load %arg16[%c31_129, %c0_130] {strides = array<i32: 2, 1>} : memref<200x128xf32, #tpu.memory_space<vmem>>, vector<4x128xf32>
    %c4_131 = arith.constant 4 : index
    %c512_132 = arith.constant 512 : index
    %114 = vector.load %arg17[%c4_131, %c512_132] : memref<32x1152xf32, #tpu.memory_space<vmem>>, vector<4x128xf32>
    tpu.vector_store %arg17[%c4_131, %c512_132], %113 {strides = array<i32>} : memref<32x1152xf32, #tpu.memory_space<vmem>>, vector<4x128xf32>,
    %c51_133 = arith.constant 51 : index
    %c0_134 = arith.constant 0 : index
    %115 = tpu.strided_load %arg16[%c51_133, %c0_134] {strides = array<i32: 2, 1>} : memref<200x128xf32, #tpu.memory_space<vmem>>, vector<4x128xf32>
    %c8_135 = arith.constant 8 : index
    %c512_136 = arith.constant 512 : index
    %116 = vector.load %arg17[%c8_135, %c512_136] : memref<32x1152xf32, #tpu.memory_space<vmem>>, vector<4x128xf32>
    tpu.vector_store %arg17[%c8_135, %c512_136], %115 {strides = array<i32>} : memref<32x1152xf32, #tpu.memory_space<vmem>>, vector<4x128xf32>,
    %c71_137 = arith.constant 71 : index
    %c0_138 = arith.constant 0 : index
    %117 = tpu.strided_load %arg16[%c71_137, %c0_138] {strides = array<i32: 2, 1>} : memref<200x128xf32, #tpu.memory_space<vmem>>, vector<4x128xf32>
    %c12_139 = arith.constant 12 : index
    %c512_140 = arith.constant 512 : index
    %118 = vector.load %arg17[%c12_139, %c512_140] : memref<32x1152xf32, #tpu.memory_space<vmem>>, vector<4x128xf32>
    tpu.vector_store %arg17[%c12_139, %c512_140], %117 {strides = array<i32>} : memref<32x1152xf32, #tpu.memory_space<vmem>>, vector<4x128xf32>,
    %c111_141 = arith.constant 111 : index
    %c0_142 = arith.constant 0 : index
    %119 = tpu.strided_load %arg16[%c111_141, %c0_142] {strides = array<i32: 2, 1>} : memref<200x128xf32, #tpu.memory_space<vmem>>, vector<4x128xf32>
    %c16_143 = arith.constant 16 : index
    %c512_144 = arith.constant 512 : index
    %120 = vector.load %arg17[%c16_143, %c512_144] : memref<32x1152xf32, #tpu.memory_space<vmem>>, vector<4x128xf32>
    tpu.vector_store %arg17[%c16_143, %c512_144], %119 {strides = array<i32>} : memref<32x1152xf32, #tpu.memory_space<vmem>>, vector<4x128xf32>,
    %c131_145 = arith.constant 131 : index
    %c0_146 = arith.constant 0 : index
    %121 = tpu.strided_load %arg16[%c131_145, %c0_146] {strides = array<i32: 2, 1>} : memref<200x128xf32, #tpu.memory_space<vmem>>, vector<4x128xf32>
    %c20_147 = arith.constant 20 : index
    %c512_148 = arith.constant 512 : index
    %122 = vector.load %arg17[%c20_147, %c512_148] : memref<32x1152xf32, #tpu.memory_space<vmem>>, vector<4x128xf32>
    tpu.vector_store %arg17[%c20_147, %c512_148], %121 {strides = array<i32>} : memref<32x1152xf32, #tpu.memory_space<vmem>>, vector<4x128xf32>,
    %c151_149 = arith.constant 151 : index
    %c0_150 = arith.constant 0 : index
    %123 = tpu.strided_load %arg16[%c151_149, %c0_150] {strides = array<i32: 2, 1>} : memref<200x128xf32, #tpu.memory_space<vmem>>, vector<4x128xf32>
    %c24_151 = arith.constant 24 : index
    %c512_152 = arith.constant 512 : index
    %124 = vector.load %arg17[%c24_151, %c512_152] : memref<32x1152xf32, #tpu.memory_space<vmem>>, vector<4x128xf32>
    tpu.vector_store %arg17[%c24_151, %c512_152], %123 {strides = array<i32>} : memref<32x1152xf32, #tpu.memory_space<vmem>>, vector<4x128xf32>,
    %c171_153 = arith.constant 171 : index
    %c0_154 = arith.constant 0 : index
    %125 = tpu.strided_load %arg16[%c171_153, %c0_154] {strides = array<i32: 2, 1>} : memref<200x128xf32, #tpu.memory_space<vmem>>, vector<4x128xf32>
    %c28_155 = arith.constant 28 : index
    %c512_156 = arith.constant 512 : index
    %126 = vector.load %arg17[%c28_155, %c512_156] : memref<32x1152xf32, #tpu.memory_space<vmem>>, vector<4x128xf32>
    tpu.vector_store %arg17[%c28_155, %c512_156], %125 {strides = array<i32>} : memref<32x1152xf32, #tpu.memory_space<vmem>>, vector<4x128xf32>,
    %c12_157 = arith.constant 12 : index
    %c0_158 = arith.constant 0 : index
    %127 = tpu.strided_load %arg16[%c12_157, %c0_158] {strides = array<i32: 2, 1>} : memref<200x128xf32, #tpu.memory_space<vmem>>, vector<4x128xf32>
    %c0_159 = arith.constant 0 : index
    %c640 = arith.constant 640 : index
    %128 = vector.load %arg17[%c0_159, %c640] : memref<32x1152xf32, #tpu.memory_space<vmem>>, vector<4x128xf32>
    tpu.vector_store %arg17[%c0_159, %c640], %127 {strides = array<i32>} : memref<32x1152xf32, #tpu.memory_space<vmem>>, vector<4x128xf32>,
    %c32 = arith.constant 32 : index
    %c0_160 = arith.constant 0 : index
    %129 = tpu.strided_load %arg16[%c32, %c0_160] {strides = array<i32: 2, 1>} : memref<200x128xf32, #tpu.memory_space<vmem>>, vector<4x128xf32>
    %c4_161 = arith.constant 4 : index
    %c640_162 = arith.constant 640 : index
    %130 = vector.load %arg17[%c4_161, %c640_162] : memref<32x1152xf32, #tpu.memory_space<vmem>>, vector<4x128xf32>
    tpu.vector_store %arg17[%c4_161, %c640_162], %129 {strides = array<i32>} : memref<32x1152xf32, #tpu.memory_space<vmem>>, vector<4x128xf32>,
    %c52 = arith.constant 52 : index
    %c0_163 = arith.constant 0 : index
    %131 = tpu.strided_load %arg16[%c52, %c0_163] {strides = array<i32: 2, 1>} : memref<200x128xf32, #tpu.memory_space<vmem>>, vector<4x128xf32>
    %c8_164 = arith.constant 8 : index
    %c640_165 = arith.constant 640 : index
    %132 = vector.load %arg17[%c8_164, %c640_165] : memref<32x1152xf32, #tpu.memory_space<vmem>>, vector<4x128xf32>
    tpu.vector_store %arg17[%c8_164, %c640_165], %131 {strides = array<i32>} : memref<32x1152xf32, #tpu.memory_space<vmem>>, vector<4x128xf32>,
    %c72 = arith.constant 72 : index
    %c0_166 = arith.constant 0 : index
    %133 = tpu.strided_load %arg16[%c72, %c0_166] {strides = array<i32: 2, 1>} : memref<200x128xf32, #tpu.memory_space<vmem>>, vector<4x128xf32>
    %c12_167 = arith.constant 12 : index
    %c640_168 = arith.constant 640 : index
    %134 = vector.load %arg17[%c12_167, %c640_168] : memref<32x1152xf32, #tpu.memory_space<vmem>>, vector<4x128xf32>
    tpu.vector_store %arg17[%c12_167, %c640_168], %133 {strides = array<i32>} : memref<32x1152xf32, #tpu.memory_space<vmem>>, vector<4x128xf32>,
    %c112 = arith.constant 112 : index
    %c0_169 = arith.constant 0 : index
    %135 = tpu.strided_load %arg16[%c112, %c0_169] {strides = array<i32: 2, 1>} : memref<200x128xf32, #tpu.memory_space<vmem>>, vector<4x128xf32>
    %c16_170 = arith.constant 16 : index
    %c640_171 = arith.constant 640 : index
    %136 = vector.load %arg17[%c16_170, %c640_171] : memref<32x1152xf32, #tpu.memory_space<vmem>>, vector<4x128xf32>
    tpu.vector_store %arg17[%c16_170, %c640_171], %135 {strides = array<i32>} : memref<32x1152xf32, #tpu.memory_space<vmem>>, vector<4x128xf32>,
    %c132 = arith.constant 132 : index
    %c0_172 = arith.constant 0 : index
    %137 = tpu.strided_load %arg16[%c132, %c0_172] {strides = array<i32: 2, 1>} : memref<200x128xf32, #tpu.memory_space<vmem>>, vector<4x128xf32>
    %c20_173 = arith.constant 20 : index
    %c640_174 = arith.constant 640 : index
    %138 = vector.load %arg17[%c20_173, %c640_174] : memref<32x1152xf32, #tpu.memory_space<vmem>>, vector<4x128xf32>
    tpu.vector_store %arg17[%c20_173, %c640_174], %137 {strides = array<i32>} : memref<32x1152xf32, #tpu.memory_space<vmem>>, vector<4x128xf32>,
    %c152 = arith.constant 152 : index
    %c0_175 = arith.constant 0 : index
    %139 = tpu.strided_load %arg16[%c152, %c0_175] {strides = array<i32: 2, 1>} : memref<200x128xf32, #tpu.memory_space<vmem>>, vector<4x128xf32>
    %c24_176 = arith.constant 24 : index
    %c640_177 = arith.constant 640 : index
    %140 = vector.load %arg17[%c24_176, %c640_177] : memref<32x1152xf32, #tpu.memory_space<vmem>>, vector<4x128xf32>
    tpu.vector_store %arg17[%c24_176, %c640_177], %139 {strides = array<i32>} : memref<32x1152xf32, #tpu.memory_space<vmem>>, vector<4x128xf32>,
    %c172 = arith.constant 172 : index
    %c0_178 = arith.constant 0 : index
    %141 = tpu.strided_load %arg16[%c172, %c0_178] {strides = array<i32: 2, 1>} : memref<200x128xf32, #tpu.memory_space<vmem>>, vector<4x128xf32>
    %c28_179 = arith.constant 28 : index
    %c640_180 = arith.constant 640 : index
    %142 = vector.load %arg17[%c28_179, %c640_180] : memref<32x1152xf32, #tpu.memory_space<vmem>>, vector<4x128xf32>
    tpu.vector_store %arg17[%c28_179, %c640_180], %141 {strides = array<i32>} : memref<32x1152xf32, #tpu.memory_space<vmem>>, vector<4x128xf32>,
    %c20_181 = arith.constant 20 : index
    %c0_182 = arith.constant 0 : index
    %143 = tpu.strided_load %arg16[%c20_181, %c0_182] {strides = array<i32: 2, 1>} : memref<200x128xf32, #tpu.memory_space<vmem>>, vector<4x128xf32>
    %c0_183 = arith.constant 0 : index
    %c768 = arith.constant 768 : index
    %144 = vector.load %arg17[%c0_183, %c768] : memref<32x1152xf32, #tpu.memory_space<vmem>>, vector<4x128xf32>
    tpu.vector_store %arg17[%c0_183, %c768], %143 {strides = array<i32>} : memref<32x1152xf32, #tpu.memory_space<vmem>>, vector<4x128xf32>,
    %c40_184 = arith.constant 40 : index
    %c0_185 = arith.constant 0 : index
    %145 = tpu.strided_load %arg16[%c40_184, %c0_185] {strides = array<i32: 2, 1>} : memref<200x128xf32, #tpu.memory_space<vmem>>, vector<4x128xf32>
    %c4_186 = arith.constant 4 : index
    %c768_187 = arith.constant 768 : index
    %146 = vector.load %arg17[%c4_186, %c768_187] : memref<32x1152xf32, #tpu.memory_space<vmem>>, vector<4x128xf32>
    tpu.vector_store %arg17[%c4_186, %c768_187], %145 {strides = array<i32>} : memref<32x1152xf32, #tpu.memory_space<vmem>>, vector<4x128xf32>,
    %c60_188 = arith.constant 60 : index
    %c0_189 = arith.constant 0 : index
    %147 = tpu.strided_load %arg16[%c60_188, %c0_189] {strides = array<i32: 2, 1>} : memref<200x128xf32, #tpu.memory_space<vmem>>, vector<4x128xf32>
    %c8_190 = arith.constant 8 : index
    %c768_191 = arith.constant 768 : index
    %148 = vector.load %arg17[%c8_190, %c768_191] : memref<32x1152xf32, #tpu.memory_space<vmem>>, vector<4x128xf32>
    tpu.vector_store %arg17[%c8_190, %c768_191], %147 {strides = array<i32>} : memref<32x1152xf32, #tpu.memory_space<vmem>>, vector<4x128xf32>,
    %c80 = arith.constant 80 : index
    %c0_192 = arith.constant 0 : index
    %149 = tpu.strided_load %arg16[%c80, %c0_192] {strides = array<i32: 2, 1>} : memref<200x128xf32, #tpu.memory_space<vmem>>, vector<4x128xf32>
    %c12_193 = arith.constant 12 : index
    %c768_194 = arith.constant 768 : index
    %150 = vector.load %arg17[%c12_193, %c768_194] : memref<32x1152xf32, #tpu.memory_space<vmem>>, vector<4x128xf32>
    tpu.vector_store %arg17[%c12_193, %c768_194], %149 {strides = array<i32>} : memref<32x1152xf32, #tpu.memory_space<vmem>>, vector<4x128xf32>,
    %c120_195 = arith.constant 120 : index
    %c0_196 = arith.constant 0 : index
    %151 = tpu.strided_load %arg16[%c120_195, %c0_196] {strides = array<i32: 2, 1>} : memref<200x128xf32, #tpu.memory_space<vmem>>, vector<4x128xf32>
    %c16_197 = arith.constant 16 : index
    %c768_198 = arith.constant 768 : index
    %152 = vector.load %arg17[%c16_197, %c768_198] : memref<32x1152xf32, #tpu.memory_space<vmem>>, vector<4x128xf32>
    tpu.vector_store %arg17[%c16_197, %c768_198], %151 {strides = array<i32>} : memref<32x1152xf32, #tpu.memory_space<vmem>>, vector<4x128xf32>,
    %c140_199 = arith.constant 140 : index
    %c0_200 = arith.constant 0 : index
    %153 = tpu.strided_load %arg16[%c140_199, %c0_200] {strides = array<i32: 2, 1>} : memref<200x128xf32, #tpu.memory_space<vmem>>, vector<4x128xf32>
    %c20_201 = arith.constant 20 : index
    %c768_202 = arith.constant 768 : index
    %154 = vector.load %arg17[%c20_201, %c768_202] : memref<32x1152xf32, #tpu.memory_space<vmem>>, vector<4x128xf32>
    tpu.vector_store %arg17[%c20_201, %c768_202], %153 {strides = array<i32>} : memref<32x1152xf32, #tpu.memory_space<vmem>>, vector<4x128xf32>,
    %c160_203 = arith.constant 160 : index
    %c0_204 = arith.constant 0 : index
    %155 = tpu.strided_load %arg16[%c160_203, %c0_204] {strides = array<i32: 2, 1>} : memref<200x128xf32, #tpu.memory_space<vmem>>, vector<4x128xf32>
    %c24_205 = arith.constant 24 : index
    %c768_206 = arith.constant 768 : index
    %156 = vector.load %arg17[%c24_205, %c768_206] : memref<32x1152xf32, #tpu.memory_space<vmem>>, vector<4x128xf32>
    tpu.vector_store %arg17[%c24_205, %c768_206], %155 {strides = array<i32>} : memref<32x1152xf32, #tpu.memory_space<vmem>>, vector<4x128xf32>,
    %c180 = arith.constant 180 : index
    %c0_207 = arith.constant 0 : index
    %157 = tpu.strided_load %arg16[%c180, %c0_207] {strides = array<i32: 2, 1>} : memref<200x128xf32, #tpu.memory_space<vmem>>, vector<4x128xf32>
    %c28_208 = arith.constant 28 : index
    %c768_209 = arith.constant 768 : index
    %158 = vector.load %arg17[%c28_208, %c768_209] : memref<32x1152xf32, #tpu.memory_space<vmem>>, vector<4x128xf32>
    tpu.vector_store %arg17[%c28_208, %c768_209], %157 {strides = array<i32>} : memref<32x1152xf32, #tpu.memory_space<vmem>>, vector<4x128xf32>,
    %c21_210 = arith.constant 21 : index
    %c0_211 = arith.constant 0 : index
    %159 = tpu.strided_load %arg16[%c21_210, %c0_211] {strides = array<i32: 2, 1>} : memref<200x128xf32, #tpu.memory_space<vmem>>, vector<4x128xf32>
    %c0_212 = arith.constant 0 : index
    %c896 = arith.constant 896 : index
    %160 = vector.load %arg17[%c0_212, %c896] : memref<32x1152xf32, #tpu.memory_space<vmem>>, vector<4x128xf32>
    tpu.vector_store %arg17[%c0_212, %c896], %159 {strides = array<i32>} : memref<32x1152xf32, #tpu.memory_space<vmem>>, vector<4x128xf32>,
    %c41_213 = arith.constant 41 : index
    %c0_214 = arith.constant 0 : index
    %161 = tpu.strided_load %arg16[%c41_213, %c0_214] {strides = array<i32: 2, 1>} : memref<200x128xf32, #tpu.memory_space<vmem>>, vector<4x128xf32>
    %c4_215 = arith.constant 4 : index
    %c896_216 = arith.constant 896 : index
    %162 = vector.load %arg17[%c4_215, %c896_216] : memref<32x1152xf32, #tpu.memory_space<vmem>>, vector<4x128xf32>
    tpu.vector_store %arg17[%c4_215, %c896_216], %161 {strides = array<i32>} : memref<32x1152xf32, #tpu.memory_space<vmem>>, vector<4x128xf32>,
    %c61_217 = arith.constant 61 : index
    %c0_218 = arith.constant 0 : index
    %163 = tpu.strided_load %arg16[%c61_217, %c0_218] {strides = array<i32: 2, 1>} : memref<200x128xf32, #tpu.memory_space<vmem>>, vector<4x128xf32>
    %c8_219 = arith.constant 8 : index
    %c896_220 = arith.constant 896 : index
    %164 = vector.load %arg17[%c8_219, %c896_220] : memref<32x1152xf32, #tpu.memory_space<vmem>>, vector<4x128xf32>
    tpu.vector_store %arg17[%c8_219, %c896_220], %163 {strides = array<i32>} : memref<32x1152xf32, #tpu.memory_space<vmem>>, vector<4x128xf32>,
    %c81_221 = arith.constant 81 : index
    %c0_222 = arith.constant 0 : index
    %165 = tpu.strided_load %arg16[%c81_221, %c0_222] {strides = array<i32: 2, 1>} : memref<200x128xf32, #tpu.memory_space<vmem>>, vector<4x128xf32>
    %c12_223 = arith.constant 12 : index
    %c896_224 = arith.constant 896 : index
    %166 = vector.load %arg17[%c12_223, %c896_224] : memref<32x1152xf32, #tpu.memory_space<vmem>>, vector<4x128xf32>
    tpu.vector_store %arg17[%c12_223, %c896_224], %165 {strides = array<i32>} : memref<32x1152xf32, #tpu.memory_space<vmem>>, vector<4x128xf32>,
    %c121_225 = arith.constant 121 : index
    %c0_226 = arith.constant 0 : index
    %167 = tpu.strided_load %arg16[%c121_225, %c0_226] {strides = array<i32: 2, 1>} : memref<200x128xf32, #tpu.memory_space<vmem>>, vector<4x128xf32>
    %c16_227 = arith.constant 16 : index
    %c896_228 = arith.constant 896 : index
    %168 = vector.load %arg17[%c16_227, %c896_228] : memref<32x1152xf32, #tpu.memory_space<vmem>>, vector<4x128xf32>
    tpu.vector_store %arg17[%c16_227, %c896_228], %167 {strides = array<i32>} : memref<32x1152xf32, #tpu.memory_space<vmem>>, vector<4x128xf32>,
    %c141_229 = arith.constant 141 : index
    %c0_230 = arith.constant 0 : index
    %169 = tpu.strided_load %arg16[%c141_229, %c0_230] {strides = array<i32: 2, 1>} : memref<200x128xf32, #tpu.memory_space<vmem>>, vector<4x128xf32>
    %c20_231 = arith.constant 20 : index
    %c896_232 = arith.constant 896 : index
    %170 = vector.load %arg17[%c20_231, %c896_232] : memref<32x1152xf32, #tpu.memory_space<vmem>>, vector<4x128xf32>
    tpu.vector_store %arg17[%c20_231, %c896_232], %169 {strides = array<i32>} : memref<32x1152xf32, #tpu.memory_space<vmem>>, vector<4x128xf32>,
    %c161_233 = arith.constant 161 : index
    %c0_234 = arith.constant 0 : index
    %171 = tpu.strided_load %arg16[%c161_233, %c0_234] {strides = array<i32: 2, 1>} : memref<200x128xf32, #tpu.memory_space<vmem>>, vector<4x128xf32>
    %c24_235 = arith.constant 24 : index
    %c896_236 = arith.constant 896 : index
    %172 = vector.load %arg17[%c24_235, %c896_236] : memref<32x1152xf32, #tpu.memory_space<vmem>>, vector<4x128xf32>
    tpu.vector_store %arg17[%c24_235, %c896_236], %171 {strides = array<i32>} : memref<32x1152xf32, #tpu.memory_space<vmem>>, vector<4x128xf32>,
    %c181_237 = arith.constant 181 : index
    %c0_238 = arith.constant 0 : index
    %173 = tpu.strided_load %arg16[%c181_237, %c0_238] {strides = array<i32: 2, 1>} : memref<200x128xf32, #tpu.memory_space<vmem>>, vector<4x128xf32>
    %c28_239 = arith.constant 28 : index
    %c896_240 = arith.constant 896 : index
    %174 = vector.load %arg17[%c28_239, %c896_240] : memref<32x1152xf32, #tpu.memory_space<vmem>>, vector<4x128xf32>
    tpu.vector_store %arg17[%c28_239, %c896_240], %173 {strides = array<i32>} : memref<32x1152xf32, #tpu.memory_space<vmem>>, vector<4x128xf32>,
    %c22_241 = arith.constant 22 : index
    %c0_242 = arith.constant 0 : index
    %175 = tpu.strided_load %arg16[%c22_241, %c0_242] {strides = array<i32: 2, 1>} : memref<200x128xf32, #tpu.memory_space<vmem>>, vector<4x128xf32>
    %c0_243 = arith.constant 0 : index
    %c1024 = arith.constant 1024 : index
    %176 = vector.load %arg17[%c0_243, %c1024] : memref<32x1152xf32, #tpu.memory_space<vmem>>, vector<4x128xf32>
    tpu.vector_store %arg17[%c0_243, %c1024], %175 {strides = array<i32>} : memref<32x1152xf32, #tpu.memory_space<vmem>>, vector<4x128xf32>,
    %c42_244 = arith.constant 42 : index
    %c0_245 = arith.constant 0 : index
    %177 = tpu.strided_load %arg16[%c42_244, %c0_245] {strides = array<i32: 2, 1>} : memref<200x128xf32, #tpu.memory_space<vmem>>, vector<4x128xf32>
    %c4_246 = arith.constant 4 : index
    %c1024_247 = arith.constant 1024 : index
    %178 = vector.load %arg17[%c4_246, %c1024_247] : memref<32x1152xf32, #tpu.memory_space<vmem>>, vector<4x128xf32>
    tpu.vector_store %arg17[%c4_246, %c1024_247], %177 {strides = array<i32>} : memref<32x1152xf32, #tpu.memory_space<vmem>>, vector<4x128xf32>,
    %c62_248 = arith.constant 62 : index
    %c0_249 = arith.constant 0 : index
    %179 = tpu.strided_load %arg16[%c62_248, %c0_249] {strides = array<i32: 2, 1>} : memref<200x128xf32, #tpu.memory_space<vmem>>, vector<4x128xf32>
    %c8_250 = arith.constant 8 : index
    %c1024_251 = arith.constant 1024 : index
    %180 = vector.load %arg17[%c8_250, %c1024_251] : memref<32x1152xf32, #tpu.memory_space<vmem>>, vector<4x128xf32>
    tpu.vector_store %arg17[%c8_250, %c1024_251], %179 {strides = array<i32>} : memref<32x1152xf32, #tpu.memory_space<vmem>>, vector<4x128xf32>,
    %c82 = arith.constant 82 : index
    %c0_252 = arith.constant 0 : index
    %181 = tpu.strided_load %arg16[%c82, %c0_252] {strides = array<i32: 2, 1>} : memref<200x128xf32, #tpu.memory_space<vmem>>, vector<4x128xf32>
    %c12_253 = arith.constant 12 : index
    %c1024_254 = arith.constant 1024 : index
    %182 = vector.load %arg17[%c12_253, %c1024_254] : memref<32x1152xf32, #tpu.memory_space<vmem>>, vector<4x128xf32>
    tpu.vector_store %arg17[%c12_253, %c1024_254], %181 {strides = array<i32>} : memref<32x1152xf32, #tpu.memory_space<vmem>>, vector<4x128xf32>,
    %c122_255 = arith.constant 122 : index
    %c0_256 = arith.constant 0 : index
    %183 = tpu.strided_load %arg16[%c122_255, %c0_256] {strides = array<i32: 2, 1>} : memref<200x128xf32, #tpu.memory_space<vmem>>, vector<4x128xf32>
    %c16_257 = arith.constant 16 : index
    %c1024_258 = arith.constant 1024 : index
    %184 = vector.load %arg17[%c16_257, %c1024_258] : memref<32x1152xf32, #tpu.memory_space<vmem>>, vector<4x128xf32>
    tpu.vector_store %arg17[%c16_257, %c1024_258], %183 {strides = array<i32>} : memref<32x1152xf32, #tpu.memory_space<vmem>>, vector<4x128xf32>,
    %c142_259 = arith.constant 142 : index
    %c0_260 = arith.constant 0 : index
    %185 = tpu.strided_load %arg16[%c142_259, %c0_260] {strides = array<i32: 2, 1>} : memref<200x128xf32, #tpu.memory_space<vmem>>, vector<4x128xf32>
    %c20_261 = arith.constant 20 : index
    %c1024_262 = arith.constant 1024 : index
    %186 = vector.load %arg17[%c20_261, %c1024_262] : memref<32x1152xf32, #tpu.memory_space<vmem>>, vector<4x128xf32>
    tpu.vector_store %arg17[%c20_261, %c1024_262], %185 {strides = array<i32>} : memref<32x1152xf32, #tpu.memory_space<vmem>>, vector<4x128xf32>,
    %c162_263 = arith.constant 162 : index
    %c0_264 = arith.constant 0 : index
    %187 = tpu.strided_load %arg16[%c162_263, %c0_264] {strides = array<i32: 2, 1>} : memref<200x128xf32, #tpu.memory_space<vmem>>, vector<4x128xf32>
    %c24_265 = arith.constant 24 : index
    %c1024_266 = arith.constant 1024 : index
    %188 = vector.load %arg17[%c24_265, %c1024_266] : memref<32x1152xf32, #tpu.memory_space<vmem>>, vector<4x128xf32>
    tpu.vector_store %arg17[%c24_265, %c1024_266], %187 {strides = array<i32>} : memref<32x1152xf32, #tpu.memory_space<vmem>>, vector<4x128xf32>,
    %c182 = arith.constant 182 : index
    %c0_267 = arith.constant 0 : index
    %189 = tpu.strided_load %arg16[%c182, %c0_267] {strides = array<i32: 2, 1>} : memref<200x128xf32, #tpu.memory_space<vmem>>, vector<4x128xf32>
    %c28_268 = arith.constant 28 : index
    %c1024_269 = arith.constant 1024 : index
    %190 = vector.load %arg17[%c28_268, %c1024_269] : memref<32x1152xf32, #tpu.memory_space<vmem>>, vector<4x128xf32>
    tpu.vector_store %arg17[%c28_268, %c1024_269], %189 {strides = array<i32>} : memref<32x1152xf32, #tpu.memory_space<vmem>>, vector<4x128xf32>,
    %c0_270 = arith.constant 0 : index
    %c0_271 = arith.constant 0 : index
    %191 = vector.load %arg17[%c0_270, %c0_271] : memref<32x1152xf32, #tpu.memory_space<vmem>>, vector<32x1152xf32>
    %192 = arith.truncf %191 : vector<32x1152xf32> to vector<32x1152xbf16>
    %c0_272 = arith.constant 0 : index
    %c0_273 = arith.constant 0 : index
    %193 = vector.load %arg3[%c0_272, %c0_273] : memref<1152x128xbf16, #tpu.memory_space<vmem>>, vector<1152x128xbf16>
    %cst_274 = arith.constant dense<0.000000e+00> : vector<32x128xf32>
    %194 = tpu.matmul %192, %193, %cst_274 {dimension_numbers = #tpu.dot_dimension_numbers<[1], [0], [0], [1], [0, 0, 1, 1], [], []>} : vector<32x1152xbf16>, vector<1152x128xbf16>, vector<32x128xf32> -> vector<32x128xf32>
    %c0_275 = arith.constant 0 : index
    %c0_276 = arith.constant 0 : index
    %195 = vector.load %arg4[%c0_275, %c0_276] : memref<1x128xf32, #tpu.memory_space<vmem>>, vector<1x128xf32>
    %196 = vector.broadcast %195 : vector<1x128xf32> to vector<32x128xf32>
    %197 = arith.addf %194, %196 : vector<32x128xf32>
    %cst_277 = arith.constant 2.000000e-01 : f32
    %198 = vector.broadcast %cst_277 : f32 to vector<32x128xf32>
    %199 = arith.mulf %198, %197 : vector<32x128xf32>
    %200 = arith.maximumf %197, %199 : vector<32x128xf32>
    %c0_278 = arith.constant 0 : index
    %c0_279 = arith.constant 0 : index
    %201 = vector.load %arg5[%c0_278, %c0_279] : memref<1x128xf32, #tpu.memory_space<vmem>>, vector<1x128xf32>
    %202 = vector.broadcast %201 : vector<1x128xf32> to vector<32x128xf32>
    %203 = arith.addf %200, %202 : vector<32x128xf32>
    %cst_280 = arith.constant 0.000000e+00 : f32
    %204 = vector.broadcast %cst_280 : f32 to vector<72x128xf32>
    %c0_281 = arith.constant 0 : index
    %c0_282 = arith.constant 0 : index
    %205 = vector.load %arg18[%c0_281, %c0_282] : memref<72x128xf32, #tpu.memory_space<vmem>>, vector<72x128xf32>
    tpu.vector_store %arg18[%c0_281, %c0_282], %204 {strides = array<i32>} : memref<72x128xf32, #tpu.memory_space<vmem>>, vector<72x128xf32>,
    %206 = vector.extract_strided_slice %203 {offsets = [0, 0], sizes = [4, 128], strides = [1, 1]} : vector<32x128xf32> to vector<4x128xf32>
    %c7 = arith.constant 7 : index
    %c0_283 = arith.constant 0 : index
    %207 = vector.load %arg18[%c7, %c0_283] : memref<72x128xf32, #tpu.memory_space<vmem>>, vector<4x128xf32>
    tpu.vector_store %arg18[%c7, %c0_283], %206 {strides = array<i32>} : memref<72x128xf32, #tpu.memory_space<vmem>>, vector<4x128xf32>,
    %208 = vector.extract_strided_slice %203 {offsets = [4, 0], sizes = [4, 128], strides = [1, 1]} : vector<32x128xf32> to vector<4x128xf32>
    %c13 = arith.constant 13 : index
    %c0_284 = arith.constant 0 : index
    %209 = vector.load %arg18[%c13, %c0_284] : memref<72x128xf32, #tpu.memory_space<vmem>>, vector<4x128xf32>
    tpu.vector_store %arg18[%c13, %c0_284], %208 {strides = array<i32>} : memref<72x128xf32, #tpu.memory_space<vmem>>, vector<4x128xf32>,
    %210 = vector.extract_strided_slice %203 {offsets = [8, 0], sizes = [4, 128], strides = [1, 1]} : vector<32x128xf32> to vector<4x128xf32>
    %c19 = arith.constant 19 : index
    %c0_285 = arith.constant 0 : index
    %211 = vector.load %arg18[%c19, %c0_285] : memref<72x128xf32, #tpu.memory_space<vmem>>, vector<4x128xf32>
    tpu.vector_store %arg18[%c19, %c0_285], %210 {strides = array<i32>} : memref<72x128xf32, #tpu.memory_space<vmem>>, vector<4x128xf32>,
    %212 = vector.extract_strided_slice %203 {offsets = [12, 0], sizes = [4, 128], strides = [1, 1]} : vector<32x128xf32> to vector<4x128xf32>
    %c25 = arith.constant 25 : index
    %c0_286 = arith.constant 0 : index
    %213 = vector.load %arg18[%c25, %c0_286] : memref<72x128xf32, #tpu.memory_space<vmem>>, vector<4x128xf32>
    tpu.vector_store %arg18[%c25, %c0_286], %212 {strides = array<i32>} : memref<72x128xf32, #tpu.memory_space<vmem>>, vector<4x128xf32>,
    %214 = vector.extract_strided_slice %203 {offsets = [16, 0], sizes = [4, 128], strides = [1, 1]} : vector<32x128xf32> to vector<4x128xf32>
    %c43 = arith.constant 43 : index
    %c0_287 = arith.constant 0 : index
    %215 = vector.load %arg18[%c43, %c0_287] : memref<72x128xf32, #tpu.memory_space<vmem>>, vector<4x128xf32>
    tpu.vector_store %arg18[%c43, %c0_287], %214 {strides = array<i32>} : memref<72x128xf32, #tpu.memory_space<vmem>>, vector<4x128xf32>,
    %216 = vector.extract_strided_slice %203 {offsets = [20, 0], sizes = [4, 128], strides = [1, 1]} : vector<32x128xf32> to vector<4x128xf32>
    %c49 = arith.constant 49 : index
    %c0_288 = arith.constant 0 : index
    %217 = vector.load %arg18[%c49, %c0_288] : memref<72x128xf32, #tpu.memory_space<vmem>>, vector<4x128xf32>
    tpu.vector_store %arg18[%c49, %c0_288], %216 {strides = array<i32>} : memref<72x128xf32, #tpu.memory_space<vmem>>, vector<4x128xf32>,
    %218 = vector.extract_strided_slice %203 {offsets = [24, 0], sizes = [4, 128], strides = [1, 1]} : vector<32x128xf32> to vector<4x128xf32>
    %c55 = arith.constant 55 : index
    %c0_289 = arith.constant 0 : index
    %219 = vector.load %arg18[%c55, %c0_289] : memref<72x128xf32, #tpu.memory_space<vmem>>, vector<4x128xf32>
    tpu.vector_store %arg18[%c55, %c0_289], %218 {strides = array<i32>} : memref<72x128xf32, #tpu.memory_space<vmem>>, vector<4x128xf32>,
    %220 = vector.extract_strided_slice %203 {offsets = [28, 0], sizes = [4, 128], strides = [1, 1]} : vector<32x128xf32> to vector<4x128xf32>
    %c61_290 = arith.constant 61 : index
    %c0_291 = arith.constant 0 : index
    %221 = vector.load %arg18[%c61_290, %c0_291] : memref<72x128xf32, #tpu.memory_space<vmem>>, vector<4x128xf32>
    tpu.vector_store %arg18[%c61_290, %c0_291], %220 {strides = array<i32>} : memref<72x128xf32, #tpu.memory_space<vmem>>, vector<4x128xf32>,
    %c0_292 = arith.constant 0 : index
    %c0_293 = arith.constant 0 : index
    %222 = tpu.strided_load %arg18[%c0_292, %c0_293] {strides = array<i32: 2, 1>} : memref<72x128xf32, #tpu.memory_space<vmem>>, vector<2x128xf32>
    %c0_294 = arith.constant 0 : index
    %c0_295 = arith.constant 0 : index
    %223 = vector.load %arg19[%c0_294, %c0_295] : memref<8x1152xf32, #tpu.memory_space<vmem>>, vector<2x128xf32>
    tpu.vector_store %arg19[%c0_294, %c0_295], %222 {strides = array<i32>} : memref<8x1152xf32, #tpu.memory_space<vmem>>, vector<2x128xf32>,
    %c12_296 = arith.constant 12 : index
    %c0_297 = arith.constant 0 : index
    %224 = tpu.strided_load %arg18[%c12_296, %c0_297] {strides = array<i32: 2, 1>} : memref<72x128xf32, #tpu.memory_space<vmem>>, vector<2x128xf32>
    %c2_298 = arith.constant 2 : index
    %c0_299 = arith.constant 0 : index
    %225 = vector.load %arg19[%c2_298, %c0_299] : memref<8x1152xf32, #tpu.memory_space<vmem>>, vector<2x128xf32>
    tpu.vector_store %arg19[%c2_298, %c0_299], %224 {strides = array<i32>} : memref<8x1152xf32, #tpu.memory_space<vmem>>, vector<2x128xf32>,
    %c36 = arith.constant 36 : index
    %c0_300 = arith.constant 0 : index
    %226 = tpu.strided_load %arg18[%c36, %c0_300] {strides = array<i32: 2, 1>} : memref<72x128xf32, #tpu.memory_space<vmem>>, vector<2x128xf32>
    %c4_301 = arith.constant 4 : index
    %c0_302 = arith.constant 0 : index
    %227 = vector.load %arg19[%c4_301, %c0_302] : memref<8x1152xf32, #tpu.memory_space<vmem>>, vector<2x128xf32>
    tpu.vector_store %arg19[%c4_301, %c0_302], %226 {strides = array<i32>} : memref<8x1152xf32, #tpu.memory_space<vmem>>, vector<2x128xf32>,
    %c48 = arith.constant 48 : index
    %c0_303 = arith.constant 0 : index
    %228 = tpu.strided_load %arg18[%c48, %c0_303] {strides = array<i32: 2, 1>} : memref<72x128xf32, #tpu.memory_space<vmem>>, vector<2x128xf32>
    %c6 = arith.constant 6 : index
    %c0_304 = arith.constant 0 : index
    %229 = vector.load %arg19[%c6, %c0_304] : memref<8x1152xf32, #tpu.memory_space<vmem>>, vector<2x128xf32>
    tpu.vector_store %arg19[%c6, %c0_304], %228 {strides = array<i32>} : memref<8x1152xf32, #tpu.memory_space<vmem>>, vector<2x128xf32>,
    %c1_305 = arith.constant 1 : index
    %c0_306 = arith.constant 0 : index
    %230 = tpu.strided_load %arg18[%c1_305, %c0_306] {strides = array<i32: 2, 1>} : memref<72x128xf32, #tpu.memory_space<vmem>>, vector<2x128xf32>
    %c0_307 = arith.constant 0 : index
    %c128_308 = arith.constant 128 : index
    %231 = vector.load %arg19[%c0_307, %c128_308] : memref<8x1152xf32, #tpu.memory_space<vmem>>, vector<2x128xf32>
    tpu.vector_store %arg19[%c0_307, %c128_308], %230 {strides = array<i32>} : memref<8x1152xf32, #tpu.memory_space<vmem>>, vector<2x128xf32>,
    %c13_309 = arith.constant 13 : index
    %c0_310 = arith.constant 0 : index
    %232 = tpu.strided_load %arg18[%c13_309, %c0_310] {strides = array<i32: 2, 1>} : memref<72x128xf32, #tpu.memory_space<vmem>>, vector<2x128xf32>
    %c2_311 = arith.constant 2 : index
    %c128_312 = arith.constant 128 : index
    %233 = vector.load %arg19[%c2_311, %c128_312] : memref<8x1152xf32, #tpu.memory_space<vmem>>, vector<2x128xf32>
    tpu.vector_store %arg19[%c2_311, %c128_312], %232 {strides = array<i32>} : memref<8x1152xf32, #tpu.memory_space<vmem>>, vector<2x128xf32>,
    %c37 = arith.constant 37 : index
    %c0_313 = arith.constant 0 : index
    %234 = tpu.strided_load %arg18[%c37, %c0_313] {strides = array<i32: 2, 1>} : memref<72x128xf32, #tpu.memory_space<vmem>>, vector<2x128xf32>
    %c4_314 = arith.constant 4 : index
    %c128_315 = arith.constant 128 : index
    %235 = vector.load %arg19[%c4_314, %c128_315] : memref<8x1152xf32, #tpu.memory_space<vmem>>, vector<2x128xf32>
    tpu.vector_store %arg19[%c4_314, %c128_315], %234 {strides = array<i32>} : memref<8x1152xf32, #tpu.memory_space<vmem>>, vector<2x128xf32>,
    %c49_316 = arith.constant 49 : index
    %c0_317 = arith.constant 0 : index
    %236 = tpu.strided_load %arg18[%c49_316, %c0_317] {strides = array<i32: 2, 1>} : memref<72x128xf32, #tpu.memory_space<vmem>>, vector<2x128xf32>
    %c6_318 = arith.constant 6 : index
    %c128_319 = arith.constant 128 : index
    %237 = vector.load %arg19[%c6_318, %c128_319] : memref<8x1152xf32, #tpu.memory_space<vmem>>, vector<2x128xf32>
    tpu.vector_store %arg19[%c6_318, %c128_319], %236 {strides = array<i32>} : memref<8x1152xf32, #tpu.memory_space<vmem>>, vector<2x128xf32>,
    %c2_320 = arith.constant 2 : index
    %c0_321 = arith.constant 0 : index
    %238 = tpu.strided_load %arg18[%c2_320, %c0_321] {strides = array<i32: 2, 1>} : memref<72x128xf32, #tpu.memory_space<vmem>>, vector<2x128xf32>
    %c0_322 = arith.constant 0 : index
    %c256_323 = arith.constant 256 : index
    %239 = vector.load %arg19[%c0_322, %c256_323] : memref<8x1152xf32, #tpu.memory_space<vmem>>, vector<2x128xf32>
    tpu.vector_store %arg19[%c0_322, %c256_323], %238 {strides = array<i32>} : memref<8x1152xf32, #tpu.memory_space<vmem>>, vector<2x128xf32>,
    %c14 = arith.constant 14 : index
    %c0_324 = arith.constant 0 : index
    %240 = tpu.strided_load %arg18[%c14, %c0_324] {strides = array<i32: 2, 1>} : memref<72x128xf32, #tpu.memory_space<vmem>>, vector<2x128xf32>
    %c2_325 = arith.constant 2 : index
    %c256_326 = arith.constant 256 : index
    %241 = vector.load %arg19[%c2_325, %c256_326] : memref<8x1152xf32, #tpu.memory_space<vmem>>, vector<2x128xf32>
    tpu.vector_store %arg19[%c2_325, %c256_326], %240 {strides = array<i32>} : memref<8x1152xf32, #tpu.memory_space<vmem>>, vector<2x128xf32>,
    %c38 = arith.constant 38 : index
    %c0_327 = arith.constant 0 : index
    %242 = tpu.strided_load %arg18[%c38, %c0_327] {strides = array<i32: 2, 1>} : memref<72x128xf32, #tpu.memory_space<vmem>>, vector<2x128xf32>
    %c4_328 = arith.constant 4 : index
    %c256_329 = arith.constant 256 : index
    %243 = vector.load %arg19[%c4_328, %c256_329] : memref<8x1152xf32, #tpu.memory_space<vmem>>, vector<2x128xf32>
    tpu.vector_store %arg19[%c4_328, %c256_329], %242 {strides = array<i32>} : memref<8x1152xf32, #tpu.memory_space<vmem>>, vector<2x128xf32>,
    %c50_330 = arith.constant 50 : index
    %c0_331 = arith.constant 0 : index
    %244 = tpu.strided_load %arg18[%c50_330, %c0_331] {strides = array<i32: 2, 1>} : memref<72x128xf32, #tpu.memory_space<vmem>>, vector<2x128xf32>
    %c6_332 = arith.constant 6 : index
    %c256_333 = arith.constant 256 : index
    %245 = vector.load %arg19[%c6_332, %c256_333] : memref<8x1152xf32, #tpu.memory_space<vmem>>, vector<2x128xf32>
    tpu.vector_store %arg19[%c6_332, %c256_333], %244 {strides = array<i32>} : memref<8x1152xf32, #tpu.memory_space<vmem>>, vector<2x128xf32>,
    %c6_334 = arith.constant 6 : index
    %c0_335 = arith.constant 0 : index
    %246 = tpu.strided_load %arg18[%c6_334, %c0_335] {strides = array<i32: 2, 1>} : memref<72x128xf32, #tpu.memory_space<vmem>>, vector<2x128xf32>
    %c0_336 = arith.constant 0 : index
    %c384_337 = arith.constant 384 : index
    %247 = vector.load %arg19[%c0_336, %c384_337] : memref<8x1152xf32, #tpu.memory_space<vmem>>, vector<2x128xf32>
    tpu.vector_store %arg19[%c0_336, %c384_337], %246 {strides = array<i32>} : memref<8x1152xf32, #tpu.memory_space<vmem>>, vector<2x128xf32>,
    %c18 = arith.constant 18 : index
    %c0_338 = arith.constant 0 : index
    %248 = tpu.strided_load %arg18[%c18, %c0_338] {strides = array<i32: 2, 1>} : memref<72x128xf32, #tpu.memory_space<vmem>>, vector<2x128xf32>
    %c2_339 = arith.constant 2 : index
    %c384_340 = arith.constant 384 : index
    %249 = vector.load %arg19[%c2_339, %c384_340] : memref<8x1152xf32, #tpu.memory_space<vmem>>, vector<2x128xf32>
    tpu.vector_store %arg19[%c2_339, %c384_340], %248 {strides = array<i32>} : memref<8x1152xf32, #tpu.memory_space<vmem>>, vector<2x128xf32>,
    %c42_341 = arith.constant 42 : index
    %c0_342 = arith.constant 0 : index
    %250 = tpu.strided_load %arg18[%c42_341, %c0_342] {strides = array<i32: 2, 1>} : memref<72x128xf32, #tpu.memory_space<vmem>>, vector<2x128xf32>
    %c4_343 = arith.constant 4 : index
    %c384_344 = arith.constant 384 : index
    %251 = vector.load %arg19[%c4_343, %c384_344] : memref<8x1152xf32, #tpu.memory_space<vmem>>, vector<2x128xf32>
    tpu.vector_store %arg19[%c4_343, %c384_344], %250 {strides = array<i32>} : memref<8x1152xf32, #tpu.memory_space<vmem>>, vector<2x128xf32>,
    %c54 = arith.constant 54 : index
    %c0_345 = arith.constant 0 : index
    %252 = tpu.strided_load %arg18[%c54, %c0_345] {strides = array<i32: 2, 1>} : memref<72x128xf32, #tpu.memory_space<vmem>>, vector<2x128xf32>
    %c6_346 = arith.constant 6 : index
    %c384_347 = arith.constant 384 : index
    %253 = vector.load %arg19[%c6_346, %c384_347] : memref<8x1152xf32, #tpu.memory_space<vmem>>, vector<2x128xf32>
    tpu.vector_store %arg19[%c6_346, %c384_347], %252 {strides = array<i32>} : memref<8x1152xf32, #tpu.memory_space<vmem>>, vector<2x128xf32>,
    %c7_348 = arith.constant 7 : index
    %c0_349 = arith.constant 0 : index
    %254 = tpu.strided_load %arg18[%c7_348, %c0_349] {strides = array<i32: 2, 1>} : memref<72x128xf32, #tpu.memory_space<vmem>>, vector<2x128xf32>
    %c0_350 = arith.constant 0 : index
    %c512_351 = arith.constant 512 : index
    %255 = vector.load %arg19[%c0_350, %c512_351] : memref<8x1152xf32, #tpu.memory_space<vmem>>, vector<2x128xf32>
    tpu.vector_store %arg19[%c0_350, %c512_351], %254 {strides = array<i32>} : memref<8x1152xf32, #tpu.memory_space<vmem>>, vector<2x128xf32>,
    %c19_352 = arith.constant 19 : index
    %c0_353 = arith.constant 0 : index
    %256 = tpu.strided_load %arg18[%c19_352, %c0_353] {strides = array<i32: 2, 1>} : memref<72x128xf32, #tpu.memory_space<vmem>>, vector<2x128xf32>
    %c2_354 = arith.constant 2 : index
    %c512_355 = arith.constant 512 : index
    %257 = vector.load %arg19[%c2_354, %c512_355] : memref<8x1152xf32, #tpu.memory_space<vmem>>, vector<2x128xf32>
    tpu.vector_store %arg19[%c2_354, %c512_355], %256 {strides = array<i32>} : memref<8x1152xf32, #tpu.memory_space<vmem>>, vector<2x128xf32>,
    %c43_356 = arith.constant 43 : index
    %c0_357 = arith.constant 0 : index
    %258 = tpu.strided_load %arg18[%c43_356, %c0_357] {strides = array<i32: 2, 1>} : memref<72x128xf32, #tpu.memory_space<vmem>>, vector<2x128xf32>
    %c4_358 = arith.constant 4 : index
    %c512_359 = arith.constant 512 : index
    %259 = vector.load %arg19[%c4_358, %c512_359] : memref<8x1152xf32, #tpu.memory_space<vmem>>, vector<2x128xf32>
    tpu.vector_store %arg19[%c4_358, %c512_359], %258 {strides = array<i32>} : memref<8x1152xf32, #tpu.memory_space<vmem>>, vector<2x128xf32>,
    %c55_360 = arith.constant 55 : index
    %c0_361 = arith.constant 0 : index
    %260 = tpu.strided_load %arg18[%c55_360, %c0_361] {strides = array<i32: 2, 1>} : memref<72x128xf32, #tpu.memory_space<vmem>>, vector<2x128xf32>
    %c6_362 = arith.constant 6 : index
    %c512_363 = arith.constant 512 : index
    %261 = vector.load %arg19[%c6_362, %c512_363] : memref<8x1152xf32, #tpu.memory_space<vmem>>, vector<2x128xf32>
    tpu.vector_store %arg19[%c6_362, %c512_363], %260 {strides = array<i32>} : memref<8x1152xf32, #tpu.memory_space<vmem>>, vector<2x128xf32>,
    %c8_364 = arith.constant 8 : index
    %c0_365 = arith.constant 0 : index
    %262 = tpu.strided_load %arg18[%c8_364, %c0_365] {strides = array<i32: 2, 1>} : memref<72x128xf32, #tpu.memory_space<vmem>>, vector<2x128xf32>
    %c0_366 = arith.constant 0 : index
    %c640_367 = arith.constant 640 : index
    %263 = vector.load %arg19[%c0_366, %c640_367] : memref<8x1152xf32, #tpu.memory_space<vmem>>, vector<2x128xf32>
    tpu.vector_store %arg19[%c0_366, %c640_367], %262 {strides = array<i32>} : memref<8x1152xf32, #tpu.memory_space<vmem>>, vector<2x128xf32>,
    %c20_368 = arith.constant 20 : index
    %c0_369 = arith.constant 0 : index
    %264 = tpu.strided_load %arg18[%c20_368, %c0_369] {strides = array<i32: 2, 1>} : memref<72x128xf32, #tpu.memory_space<vmem>>, vector<2x128xf32>
    %c2_370 = arith.constant 2 : index
    %c640_371 = arith.constant 640 : index
    %265 = vector.load %arg19[%c2_370, %c640_371] : memref<8x1152xf32, #tpu.memory_space<vmem>>, vector<2x128xf32>
    tpu.vector_store %arg19[%c2_370, %c640_371], %264 {strides = array<i32>} : memref<8x1152xf32, #tpu.memory_space<vmem>>, vector<2x128xf32>,
    %c44 = arith.constant 44 : index
    %c0_372 = arith.constant 0 : index
    %266 = tpu.strided_load %arg18[%c44, %c0_372] {strides = array<i32: 2, 1>} : memref<72x128xf32, #tpu.memory_space<vmem>>, vector<2x128xf32>
    %c4_373 = arith.constant 4 : index
    %c640_374 = arith.constant 640 : index
    %267 = vector.load %arg19[%c4_373, %c640_374] : memref<8x1152xf32, #tpu.memory_space<vmem>>, vector<2x128xf32>
    tpu.vector_store %arg19[%c4_373, %c640_374], %266 {strides = array<i32>} : memref<8x1152xf32, #tpu.memory_space<vmem>>, vector<2x128xf32>,
    %c56 = arith.constant 56 : index
    %c0_375 = arith.constant 0 : index
    %268 = tpu.strided_load %arg18[%c56, %c0_375] {strides = array<i32: 2, 1>} : memref<72x128xf32, #tpu.memory_space<vmem>>, vector<2x128xf32>
    %c6_376 = arith.constant 6 : index
    %c640_377 = arith.constant 640 : index
    %269 = vector.load %arg19[%c6_376, %c640_377] : memref<8x1152xf32, #tpu.memory_space<vmem>>, vector<2x128xf32>
    tpu.vector_store %arg19[%c6_376, %c640_377], %268 {strides = array<i32>} : memref<8x1152xf32, #tpu.memory_space<vmem>>, vector<2x128xf32>,
    %c12_378 = arith.constant 12 : index
    %c0_379 = arith.constant 0 : index
    %270 = tpu.strided_load %arg18[%c12_378, %c0_379] {strides = array<i32: 2, 1>} : memref<72x128xf32, #tpu.memory_space<vmem>>, vector<2x128xf32>
    %c0_380 = arith.constant 0 : index
    %c768_381 = arith.constant 768 : index
    %271 = vector.load %arg19[%c0_380, %c768_381] : memref<8x1152xf32, #tpu.memory_space<vmem>>, vector<2x128xf32>
    tpu.vector_store %arg19[%c0_380, %c768_381], %270 {strides = array<i32>} : memref<8x1152xf32, #tpu.memory_space<vmem>>, vector<2x128xf32>,
    %c24_382 = arith.constant 24 : index
    %c0_383 = arith.constant 0 : index
    %272 = tpu.strided_load %arg18[%c24_382, %c0_383] {strides = array<i32: 2, 1>} : memref<72x128xf32, #tpu.memory_space<vmem>>, vector<2x128xf32>
    %c2_384 = arith.constant 2 : index
    %c768_385 = arith.constant 768 : index
    %273 = vector.load %arg19[%c2_384, %c768_385] : memref<8x1152xf32, #tpu.memory_space<vmem>>, vector<2x128xf32>
    tpu.vector_store %arg19[%c2_384, %c768_385], %272 {strides = array<i32>} : memref<8x1152xf32, #tpu.memory_space<vmem>>, vector<2x128xf32>,
    %c48_386 = arith.constant 48 : index
    %c0_387 = arith.constant 0 : index
    %274 = tpu.strided_load %arg18[%c48_386, %c0_387] {strides = array<i32: 2, 1>} : memref<72x128xf32, #tpu.memory_space<vmem>>, vector<2x128xf32>
    %c4_388 = arith.constant 4 : index
    %c768_389 = arith.constant 768 : index
    %275 = vector.load %arg19[%c4_388, %c768_389] : memref<8x1152xf32, #tpu.memory_space<vmem>>, vector<2x128xf32>
    tpu.vector_store %arg19[%c4_388, %c768_389], %274 {strides = array<i32>} : memref<8x1152xf32, #tpu.memory_space<vmem>>, vector<2x128xf32>,
    %c60_390 = arith.constant 60 : index
    %c0_391 = arith.constant 0 : index
    %276 = tpu.strided_load %arg18[%c60_390, %c0_391] {strides = array<i32: 2, 1>} : memref<72x128xf32, #tpu.memory_space<vmem>>, vector<2x128xf32>
    %c6_392 = arith.constant 6 : index
    %c768_393 = arith.constant 768 : index
    %277 = vector.load %arg19[%c6_392, %c768_393] : memref<8x1152xf32, #tpu.memory_space<vmem>>, vector<2x128xf32>
    tpu.vector_store %arg19[%c6_392, %c768_393], %276 {strides = array<i32>} : memref<8x1152xf32, #tpu.memory_space<vmem>>, vector<2x128xf32>,
    %c13_394 = arith.constant 13 : index
    %c0_395 = arith.constant 0 : index
    %278 = tpu.strided_load %arg18[%c13_394, %c0_395] {strides = array<i32: 2, 1>} : memref<72x128xf32, #tpu.memory_space<vmem>>, vector<2x128xf32>
    %c0_396 = arith.constant 0 : index
    %c896_397 = arith.constant 896 : index
    %279 = vector.load %arg19[%c0_396, %c896_397] : memref<8x1152xf32, #tpu.memory_space<vmem>>, vector<2x128xf32>
    tpu.vector_store %arg19[%c0_396, %c896_397], %278 {strides = array<i32>} : memref<8x1152xf32, #tpu.memory_space<vmem>>, vector<2x128xf32>,
    %c25_398 = arith.constant 25 : index
    %c0_399 = arith.constant 0 : index
    %280 = tpu.strided_load %arg18[%c25_398, %c0_399] {strides = array<i32: 2, 1>} : memref<72x128xf32, #tpu.memory_space<vmem>>, vector<2x128xf32>
    %c2_400 = arith.constant 2 : index
    %c896_401 = arith.constant 896 : index
    %281 = vector.load %arg19[%c2_400, %c896_401] : memref<8x1152xf32, #tpu.memory_space<vmem>>, vector<2x128xf32>
    tpu.vector_store %arg19[%c2_400, %c896_401], %280 {strides = array<i32>} : memref<8x1152xf32, #tpu.memory_space<vmem>>, vector<2x128xf32>,
    %c49_402 = arith.constant 49 : index
    %c0_403 = arith.constant 0 : index
    %282 = tpu.strided_load %arg18[%c49_402, %c0_403] {strides = array<i32: 2, 1>} : memref<72x128xf32, #tpu.memory_space<vmem>>, vector<2x128xf32>
    %c4_404 = arith.constant 4 : index
    %c896_405 = arith.constant 896 : index
    %283 = vector.load %arg19[%c4_404, %c896_405] : memref<8x1152xf32, #tpu.memory_space<vmem>>, vector<2x128xf32>
    tpu.vector_store %arg19[%c4_404, %c896_405], %282 {strides = array<i32>} : memref<8x1152xf32, #tpu.memory_space<vmem>>, vector<2x128xf32>,
    %c61_406 = arith.constant 61 : index
    %c0_407 = arith.constant 0 : index
    %284 = tpu.strided_load %arg18[%c61_406, %c0_407] {strides = array<i32: 2, 1>} : memref<72x128xf32, #tpu.memory_space<vmem>>, vector<2x128xf32>
    %c6_408 = arith.constant 6 : index
    %c896_409 = arith.constant 896 : index
    %285 = vector.load %arg19[%c6_408, %c896_409] : memref<8x1152xf32, #tpu.memory_space<vmem>>, vector<2x128xf32>
    tpu.vector_store %arg19[%c6_408, %c896_409], %284 {strides = array<i32>} : memref<8x1152xf32, #tpu.memory_space<vmem>>, vector<2x128xf32>,
    %c14_410 = arith.constant 14 : index
    %c0_411 = arith.constant 0 : index
    %286 = tpu.strided_load %arg18[%c14_410, %c0_411] {strides = array<i32: 2, 1>} : memref<72x128xf32, #tpu.memory_space<vmem>>, vector<2x128xf32>
    %c0_412 = arith.constant 0 : index
    %c1024_413 = arith.constant 1024 : index
    %287 = vector.load %arg19[%c0_412, %c1024_413] : memref<8x1152xf32, #tpu.memory_space<vmem>>, vector<2x128xf32>
    tpu.vector_store %arg19[%c0_412, %c1024_413], %286 {strides = array<i32>} : memref<8x1152xf32, #tpu.memory_space<vmem>>, vector<2x128xf32>,
    %c26 = arith.constant 26 : index
    %c0_414 = arith.constant 0 : index
    %288 = tpu.strided_load %arg18[%c26, %c0_414] {strides = array<i32: 2, 1>} : memref<72x128xf32, #tpu.memory_space<vmem>>, vector<2x128xf32>
    %c2_415 = arith.constant 2 : index
    %c1024_416 = arith.constant 1024 : index
    %289 = vector.load %arg19[%c2_415, %c1024_416] : memref<8x1152xf32, #tpu.memory_space<vmem>>, vector<2x128xf32>
    tpu.vector_store %arg19[%c2_415, %c1024_416], %288 {strides = array<i32>} : memref<8x1152xf32, #tpu.memory_space<vmem>>, vector<2x128xf32>,
    %c50_417 = arith.constant 50 : index
    %c0_418 = arith.constant 0 : index
    %290 = tpu.strided_load %arg18[%c50_417, %c0_418] {strides = array<i32: 2, 1>} : memref<72x128xf32, #tpu.memory_space<vmem>>, vector<2x128xf32>
    %c4_419 = arith.constant 4 : index
    %c1024_420 = arith.constant 1024 : index
    %291 = vector.load %arg19[%c4_419, %c1024_420] : memref<8x1152xf32, #tpu.memory_space<vmem>>, vector<2x128xf32>
    tpu.vector_store %arg19[%c4_419, %c1024_420], %290 {strides = array<i32>} : memref<8x1152xf32, #tpu.memory_space<vmem>>, vector<2x128xf32>,
    %c62_421 = arith.constant 62 : index
    %c0_422 = arith.constant 0 : index
    %292 = tpu.strided_load %arg18[%c62_421, %c0_422] {strides = array<i32: 2, 1>} : memref<72x128xf32, #tpu.memory_space<vmem>>, vector<2x128xf32>
    %c6_423 = arith.constant 6 : index
    %c1024_424 = arith.constant 1024 : index
    %293 = vector.load %arg19[%c6_423, %c1024_424] : memref<8x1152xf32, #tpu.memory_space<vmem>>, vector<2x128xf32>
    tpu.vector_store %arg19[%c6_423, %c1024_424], %292 {strides = array<i32>} : memref<8x1152xf32, #tpu.memory_space<vmem>>, vector<2x128xf32>,
    %c0_425 = arith.constant 0 : index
    %c0_426 = arith.constant 0 : index
    %294 = vector.load %arg19[%c0_425, %c0_426] : memref<8x1152xf32, #tpu.memory_space<vmem>>, vector<8x1152xf32>
    %295 = arith.truncf %294 : vector<8x1152xf32> to vector<8x1152xbf16>
    %c0_427 = arith.constant 0 : index
    %c0_428 = arith.constant 0 : index
    %296 = vector.load %arg6[%c0_427, %c0_428] : memref<1152x128xbf16, #tpu.memory_space<vmem>>, vector<1152x128xbf16>
    %cst_429 = arith.constant dense<0.000000e+00> : vector<8x128xf32>
    %297 = tpu.matmul %295, %296, %cst_429 {dimension_numbers = #tpu.dot_dimension_numbers<[1], [0], [0], [1], [0, 0, 1, 1], [], []>} : vector<8x1152xbf16>, vector<1152x128xbf16>, vector<8x128xf32> -> vector<8x128xf32>
    %c0_430 = arith.constant 0 : index
    %c0_431 = arith.constant 0 : index
    %298 = vector.load %arg7[%c0_430, %c0_431] : memref<1x128xf32, #tpu.memory_space<vmem>>, vector<1x128xf32>
    %299 = vector.broadcast %298 : vector<1x128xf32> to vector<8x128xf32>
    %300 = arith.addf %297, %299 : vector<8x128xf32>
    %cst_432 = arith.constant 2.000000e-01 : f32
    %301 = vector.broadcast %cst_432 : f32 to vector<8x128xf32>
    %302 = arith.mulf %301, %300 : vector<8x128xf32>
    %303 = arith.maximumf %300, %302 : vector<8x128xf32>
    %c0_433 = arith.constant 0 : index
    %c0_434 = arith.constant 0 : index
    %304 = vector.load %arg8[%c0_433, %c0_434] : memref<1x128xf32, #tpu.memory_space<vmem>>, vector<1x128xf32>
    %305 = vector.broadcast %304 : vector<1x128xf32> to vector<8x128xf32>
    %306 = arith.addf %303, %305 : vector<8x128xf32>
    %cst_435 = arith.constant 0.000000e+00 : f32
    %307 = vector.broadcast %cst_435 : f32 to vector<32x128xf32>
    %c0_436 = arith.constant 0 : index
    %c0_437 = arith.constant 0 : index
    %308 = vector.load %arg20[%c0_436, %c0_437] : memref<32x128xf32, #tpu.memory_space<vmem>>, vector<32x128xf32>
    tpu.vector_store %arg20[%c0_436, %c0_437], %307 {strides = array<i32>} : memref<32x128xf32, #tpu.memory_space<vmem>>, vector<32x128xf32>,
    %309 = vector.extract_strided_slice %306 {offsets = [0, 0], sizes = [2, 128], strides = [1, 1]} : vector<8x128xf32> to vector<2x128xf32>
    %c5 = arith.constant 5 : index
    %c0_438 = arith.constant 0 : index
    %310 = vector.load %arg20[%c5, %c0_438] : memref<32x128xf32, #tpu.memory_space<vmem>>, vector<2x128xf32>
    tpu.vector_store %arg20[%c5, %c0_438], %309 {strides = array<i32>} : memref<32x128xf32, #tpu.memory_space<vmem>>, vector<2x128xf32>,
    %311 = vector.extract_strided_slice %306 {offsets = [2, 0], sizes = [2, 128], strides = [1, 1]} : vector<8x128xf32> to vector<2x128xf32>
    %c9 = arith.constant 9 : index
    %c0_439 = arith.constant 0 : index
    %312 = vector.load %arg20[%c9, %c0_439] : memref<32x128xf32, #tpu.memory_space<vmem>>, vector<2x128xf32>
    tpu.vector_store %arg20[%c9, %c0_439], %311 {strides = array<i32>} : memref<32x128xf32, #tpu.memory_space<vmem>>, vector<2x128xf32>,
    %313 = vector.extract_strided_slice %306 {offsets = [4, 0], sizes = [2, 128], strides = [1, 1]} : vector<8x128xf32> to vector<2x128xf32>
    %c21_440 = arith.constant 21 : index
    %c0_441 = arith.constant 0 : index
    %314 = vector.load %arg20[%c21_440, %c0_441] : memref<32x128xf32, #tpu.memory_space<vmem>>, vector<2x128xf32>
    tpu.vector_store %arg20[%c21_440, %c0_441], %313 {strides = array<i32>} : memref<32x128xf32, #tpu.memory_space<vmem>>, vector<2x128xf32>,
    %315 = vector.extract_strided_slice %306 {offsets = [6, 0], sizes = [2, 128], strides = [1, 1]} : vector<8x128xf32> to vector<2x128xf32>
    %c25_442 = arith.constant 25 : index
    %c0_443 = arith.constant 0 : index
    %316 = vector.load %arg20[%c25_442, %c0_443] : memref<32x128xf32, #tpu.memory_space<vmem>>, vector<2x128xf32>
    tpu.vector_store %arg20[%c25_442, %c0_443], %315 {strides = array<i32>} : memref<32x128xf32, #tpu.memory_space<vmem>>, vector<2x128xf32>,
    %c0_444 = arith.constant 0 : index
    %c0_445 = arith.constant 0 : index
    %317 = vector.load %arg20[%c0_444, %c0_445] : memref<32x128xf32, #tpu.memory_space<vmem>>, vector<1x128xf32>
    %c0_446 = arith.constant 0 : index
    %c0_447 = arith.constant 0 : index
    %318 = vector.load %arg21[%c0_446, %c0_447] : memref<2x1152xf32, #tpu.memory_space<vmem>>, vector<1x128xf32>
    tpu.vector_store %arg21[%c0_446, %c0_447], %317 {strides = array<i32>} : memref<2x1152xf32, #tpu.memory_space<vmem>>, vector<1x128xf32>,
    %c16_448 = arith.constant 16 : index
    %c0_449 = arith.constant 0 : index
    %319 = vector.load %arg20[%c16_448, %c0_449] : memref<32x128xf32, #tpu.memory_space<vmem>>, vector<1x128xf32>
    %c1_450 = arith.constant 1 : index
    %c0_451 = arith.constant 0 : index
    %320 = vector.load %arg21[%c1_450, %c0_451] : memref<2x1152xf32, #tpu.memory_space<vmem>>, vector<1x128xf32>
    tpu.vector_store %arg21[%c1_450, %c0_451], %319 {strides = array<i32>} : memref<2x1152xf32, #tpu.memory_space<vmem>>, vector<1x128xf32>,
    %c1_452 = arith.constant 1 : index
    %c0_453 = arith.constant 0 : index
    %321 = vector.load %arg20[%c1_452, %c0_453] : memref<32x128xf32, #tpu.memory_space<vmem>>, vector<1x128xf32>
    %c0_454 = arith.constant 0 : index
    %c128_455 = arith.constant 128 : index
    %322 = vector.load %arg21[%c0_454, %c128_455] : memref<2x1152xf32, #tpu.memory_space<vmem>>, vector<1x128xf32>
    tpu.vector_store %arg21[%c0_454, %c128_455], %321 {strides = array<i32>} : memref<2x1152xf32, #tpu.memory_space<vmem>>, vector<1x128xf32>,
    %c17 = arith.constant 17 : index
    %c0_456 = arith.constant 0 : index
    %323 = vector.load %arg20[%c17, %c0_456] : memref<32x128xf32, #tpu.memory_space<vmem>>, vector<1x128xf32>
    %c1_457 = arith.constant 1 : index
    %c128_458 = arith.constant 128 : index
    %324 = vector.load %arg21[%c1_457, %c128_458] : memref<2x1152xf32, #tpu.memory_space<vmem>>, vector<1x128xf32>
    tpu.vector_store %arg21[%c1_457, %c128_458], %323 {strides = array<i32>} : memref<2x1152xf32, #tpu.memory_space<vmem>>, vector<1x128xf32>,
    %c2_459 = arith.constant 2 : index
    %c0_460 = arith.constant 0 : index
    %325 = vector.load %arg20[%c2_459, %c0_460] : memref<32x128xf32, #tpu.memory_space<vmem>>, vector<1x128xf32>
    %c0_461 = arith.constant 0 : index
    %c256_462 = arith.constant 256 : index
    %326 = vector.load %arg21[%c0_461, %c256_462] : memref<2x1152xf32, #tpu.memory_space<vmem>>, vector<1x128xf32>
    tpu.vector_store %arg21[%c0_461, %c256_462], %325 {strides = array<i32>} : memref<2x1152xf32, #tpu.memory_space<vmem>>, vector<1x128xf32>,
    %c18_463 = arith.constant 18 : index
    %c0_464 = arith.constant 0 : index
    %327 = vector.load %arg20[%c18_463, %c0_464] : memref<32x128xf32, #tpu.memory_space<vmem>>, vector<1x128xf32>
    %c1_465 = arith.constant 1 : index
    %c256_466 = arith.constant 256 : index
    %328 = vector.load %arg21[%c1_465, %c256_466] : memref<2x1152xf32, #tpu.memory_space<vmem>>, vector<1x128xf32>
    tpu.vector_store %arg21[%c1_465, %c256_466], %327 {strides = array<i32>} : memref<2x1152xf32, #tpu.memory_space<vmem>>, vector<1x128xf32>,
    %c4_467 = arith.constant 4 : index
    %c0_468 = arith.constant 0 : index
    %329 = vector.load %arg20[%c4_467, %c0_468] : memref<32x128xf32, #tpu.memory_space<vmem>>, vector<1x128xf32>
    %c0_469 = arith.constant 0 : index
    %c384_470 = arith.constant 384 : index
    %330 = vector.load %arg21[%c0_469, %c384_470] : memref<2x1152xf32, #tpu.memory_space<vmem>>, vector<1x128xf32>
    tpu.vector_store %arg21[%c0_469, %c384_470], %329 {strides = array<i32>} : memref<2x1152xf32, #tpu.memory_space<vmem>>, vector<1x128xf32>,
    %c20_471 = arith.constant 20 : index
    %c0_472 = arith.constant 0 : index
    %331 = vector.load %arg20[%c20_471, %c0_472] : memref<32x128xf32, #tpu.memory_space<vmem>>, vector<1x128xf32>
    %c1_473 = arith.constant 1 : index
    %c384_474 = arith.constant 384 : index
    %332 = vector.load %arg21[%c1_473, %c384_474] : memref<2x1152xf32, #tpu.memory_space<vmem>>, vector<1x128xf32>
    tpu.vector_store %arg21[%c1_473, %c384_474], %331 {strides = array<i32>} : memref<2x1152xf32, #tpu.memory_space<vmem>>, vector<1x128xf32>,
    %c5_475 = arith.constant 5 : index
    %c0_476 = arith.constant 0 : index
    %333 = vector.load %arg20[%c5_475, %c0_476] : memref<32x128xf32, #tpu.memory_space<vmem>>, vector<1x128xf32>
    %c0_477 = arith.constant 0 : index
    %c512_478 = arith.constant 512 : index
    %334 = vector.load %arg21[%c0_477, %c512_478] : memref<2x1152xf32, #tpu.memory_space<vmem>>, vector<1x128xf32>
    tpu.vector_store %arg21[%c0_477, %c512_478], %333 {strides = array<i32>} : memref<2x1152xf32, #tpu.memory_space<vmem>>, vector<1x128xf32>,
    %c21_479 = arith.constant 21 : index
    %c0_480 = arith.constant 0 : index
    %335 = vector.load %arg20[%c21_479, %c0_480] : memref<32x128xf32, #tpu.memory_space<vmem>>, vector<1x128xf32>
    %c1_481 = arith.constant 1 : index
    %c512_482 = arith.constant 512 : index
    %336 = vector.load %arg21[%c1_481, %c512_482] : memref<2x1152xf32, #tpu.memory_space<vmem>>, vector<1x128xf32>
    tpu.vector_store %arg21[%c1_481, %c512_482], %335 {strides = array<i32>} : memref<2x1152xf32, #tpu.memory_space<vmem>>, vector<1x128xf32>,
    %c6_483 = arith.constant 6 : index
    %c0_484 = arith.constant 0 : index
    %337 = vector.load %arg20[%c6_483, %c0_484] : memref<32x128xf32, #tpu.memory_space<vmem>>, vector<1x128xf32>
    %c0_485 = arith.constant 0 : index
    %c640_486 = arith.constant 640 : index
    %338 = vector.load %arg21[%c0_485, %c640_486] : memref<2x1152xf32, #tpu.memory_space<vmem>>, vector<1x128xf32>
    tpu.vector_store %arg21[%c0_485, %c640_486], %337 {strides = array<i32>} : memref<2x1152xf32, #tpu.memory_space<vmem>>, vector<1x128xf32>,
    %c22_487 = arith.constant 22 : index
    %c0_488 = arith.constant 0 : index
    %339 = vector.load %arg20[%c22_487, %c0_488] : memref<32x128xf32, #tpu.memory_space<vmem>>, vector<1x128xf32>
    %c1_489 = arith.constant 1 : index
    %c640_490 = arith.constant 640 : index
    %340 = vector.load %arg21[%c1_489, %c640_490] : memref<2x1152xf32, #tpu.memory_space<vmem>>, vector<1x128xf32>
    tpu.vector_store %arg21[%c1_489, %c640_490], %339 {strides = array<i32>} : memref<2x1152xf32, #tpu.memory_space<vmem>>, vector<1x128xf32>,
    %c8_491 = arith.constant 8 : index
    %c0_492 = arith.constant 0 : index
    %341 = vector.load %arg20[%c8_491, %c0_492] : memref<32x128xf32, #tpu.memory_space<vmem>>, vector<1x128xf32>
    %c0_493 = arith.constant 0 : index
    %c768_494 = arith.constant 768 : index
    %342 = vector.load %arg21[%c0_493, %c768_494] : memref<2x1152xf32, #tpu.memory_space<vmem>>, vector<1x128xf32>
    tpu.vector_store %arg21[%c0_493, %c768_494], %341 {strides = array<i32>} : memref<2x1152xf32, #tpu.memory_space<vmem>>, vector<1x128xf32>,
    %c24_495 = arith.constant 24 : index
    %c0_496 = arith.constant 0 : index
    %343 = vector.load %arg20[%c24_495, %c0_496] : memref<32x128xf32, #tpu.memory_space<vmem>>, vector<1x128xf32>
    %c1_497 = arith.constant 1 : index
    %c768_498 = arith.constant 768 : index
    %344 = vector.load %arg21[%c1_497, %c768_498] : memref<2x1152xf32, #tpu.memory_space<vmem>>, vector<1x128xf32>
    tpu.vector_store %arg21[%c1_497, %c768_498], %343 {strides = array<i32>} : memref<2x1152xf32, #tpu.memory_space<vmem>>, vector<1x128xf32>,
    %c9_499 = arith.constant 9 : index
    %c0_500 = arith.constant 0 : index
    %345 = vector.load %arg20[%c9_499, %c0_500] : memref<32x128xf32, #tpu.memory_space<vmem>>, vector<1x128xf32>
    %c0_501 = arith.constant 0 : index
    %c896_502 = arith.constant 896 : index
    %346 = vector.load %arg21[%c0_501, %c896_502] : memref<2x1152xf32, #tpu.memory_space<vmem>>, vector<1x128xf32>
    tpu.vector_store %arg21[%c0_501, %c896_502], %345 {strides = array<i32>} : memref<2x1152xf32, #tpu.memory_space<vmem>>, vector<1x128xf32>,
    %c25_503 = arith.constant 25 : index
    %c0_504 = arith.constant 0 : index
    %347 = vector.load %arg20[%c25_503, %c0_504] : memref<32x128xf32, #tpu.memory_space<vmem>>, vector<1x128xf32>
    %c1_505 = arith.constant 1 : index
    %c896_506 = arith.constant 896 : index
    %348 = vector.load %arg21[%c1_505, %c896_506] : memref<2x1152xf32, #tpu.memory_space<vmem>>, vector<1x128xf32>
    tpu.vector_store %arg21[%c1_505, %c896_506], %347 {strides = array<i32>} : memref<2x1152xf32, #tpu.memory_space<vmem>>, vector<1x128xf32>,
    %c10_507 = arith.constant 10 : index
    %c0_508 = arith.constant 0 : index
    %349 = vector.load %arg20[%c10_507, %c0_508] : memref<32x128xf32, #tpu.memory_space<vmem>>, vector<1x128xf32>
    %c0_509 = arith.constant 0 : index
    %c1024_510 = arith.constant 1024 : index
    %350 = vector.load %arg21[%c0_509, %c1024_510] : memref<2x1152xf32, #tpu.memory_space<vmem>>, vector<1x128xf32>
    tpu.vector_store %arg21[%c0_509, %c1024_510], %349 {strides = array<i32>} : memref<2x1152xf32, #tpu.memory_space<vmem>>, vector<1x128xf32>,
    %c26_511 = arith.constant 26 : index
    %c0_512 = arith.constant 0 : index
    %351 = vector.load %arg20[%c26_511, %c0_512] : memref<32x128xf32, #tpu.memory_space<vmem>>, vector<1x128xf32>
    %c1_513 = arith.constant 1 : index
    %c1024_514 = arith.constant 1024 : index
    %352 = vector.load %arg21[%c1_513, %c1024_514] : memref<2x1152xf32, #tpu.memory_space<vmem>>, vector<1x128xf32>
    tpu.vector_store %arg21[%c1_513, %c1024_514], %351 {strides = array<i32>} : memref<2x1152xf32, #tpu.memory_space<vmem>>, vector<1x128xf32>,
    %c0_515 = arith.constant 0 : index
    %c0_516 = arith.constant 0 : index
    %353 = vector.load %arg21[%c0_515, %c0_516] : memref<2x1152xf32, #tpu.memory_space<vmem>>, vector<2x1152xf32>
    %354 = arith.truncf %353 : vector<2x1152xf32> to vector<2x1152xbf16>
    %c0_517 = arith.constant 0 : index
    %c0_518 = arith.constant 0 : index
    %355 = vector.load %arg9[%c0_517, %c0_518] : memref<1152x128xbf16, #tpu.memory_space<vmem>>, vector<1152x128xbf16>
    %cst_519 = arith.constant dense<0.000000e+00> : vector<2x128xf32>
    %356 = tpu.matmul %354, %355, %cst_519 {dimension_numbers = #tpu.dot_dimension_numbers<[1], [0], [0], [1], [0, 0, 1, 1], [], []>} : vector<2x1152xbf16>, vector<1152x128xbf16>, vector<2x128xf32> -> vector<2x128xf32>
    %c0_520 = arith.constant 0 : index
    %c0_521 = arith.constant 0 : index
    %357 = vector.load %arg10[%c0_520, %c0_521] : memref<1x128xf32, #tpu.memory_space<vmem>>, vector<1x128xf32>
    %358 = vector.broadcast %357 : vector<1x128xf32> to vector<2x128xf32>
    %359 = arith.addf %356, %358 : vector<2x128xf32>
    %cst_522 = arith.constant 2.000000e-01 : f32
    %360 = vector.broadcast %cst_522 : f32 to vector<2x128xf32>
    %361 = arith.mulf %360, %359 : vector<2x128xf32>
    %362 = arith.maximumf %359, %361 : vector<2x128xf32>
    %c0_523 = arith.constant 0 : index
    %c0_524 = arith.constant 0 : index
    %363 = vector.load %arg11[%c0_523, %c0_524] : memref<1x128xf32, #tpu.memory_space<vmem>>, vector<1x128xf32>
    %364 = vector.broadcast %363 : vector<1x128xf32> to vector<2x128xf32>
    %365 = arith.addf %362, %364 : vector<2x128xf32>
    %366 = arith.truncf %365 : vector<2x128xf32> to vector<2x128xbf16>
    %c0_525 = arith.constant 0 : index
    %c0_526 = arith.constant 0 : index
    %c0_527 = arith.constant 0 : index
    %367 = vector.load %arg12[%c0_525, %c0_526, %c0_527] : memref<1x128x128xbf16, #tpu.memory_space<vmem>>, vector<1x128x128xbf16>
    %368 = vector.shape_cast %367 : vector<1x128x128xbf16> to vector<128x128xbf16>
    %cst_528 = arith.constant dense<0.000000e+00> : vector<2x128xf32>
    %369 = tpu.matmul %366, %368, %cst_528 {dimension_numbers = #tpu.dot_dimension_numbers<[1], [0], [0], [1], [0, 0, 1, 1], [], []>} : vector<2x128xbf16>, vector<128x128xbf16>, vector<2x128xf32> -> vector<2x128xf32>
    %c0_529 = arith.constant 0 : index
    %c0_530 = arith.constant 0 : index
    %370 = vector.load %arg13[%c0_529, %c0_530] : memref<1x128xf32, #tpu.memory_space<vmem>>, vector<1x128xf32>
    %371 = vector.broadcast %370 : vector<1x128xf32> to vector<2x128xf32>
    %372 = arith.addf %369, %371 : vector<2x128xf32>
    %373 = tpu.iota {dimensions = array<i32: 1>} : vector<2x128xi32>
    %c1_i32 = arith.constant 1 : i32
    %374 = vector.broadcast %c1_i32 : i32 to vector<2x128xi32>
    %375 = arith.cmpi sge, %373, %374 : vector<2x128xi32>
    %c10_i32 = arith.constant 10 : i32
    %376 = vector.broadcast %c10_i32 : i32 to vector<2x128xi32>
    %377 = arith.cmpi sle, %373, %376 : vector<2x128xi32>
    %378 = arith.andi %375, %377 : vector<2x128xi1>
    %cst_531 = arith.constant 0.000000e+00 : f32
    %379 = vector.broadcast %cst_531 : f32 to vector<2x128xf32>
    %380 = arith.subf %379, %372 : vector<2x128xf32>
    %381 = math.exp %380 : vector<2x128xf32>
    %cst_532 = arith.constant 1.000000e+00 : f32
    %382 = vector.broadcast %cst_532 : f32 to vector<2x128xf32>
    %383 = arith.addf %382, %381 : vector<2x128xf32>
    %cst_533 = arith.constant 1.000000e+00 : f32
    %384 = vector.broadcast %cst_533 : f32 to vector<2x128xf32>
    %385 = arith.divf %384, %383 : vector<2x128xf32>
    %cst_534 = arith.constant -1.000000e+30 : f32
    %386 = vector.broadcast %cst_534 : f32 to vector<2x128xf32>
    %387 = arith.select %378, %372, %386 : vector<2x128xi1>, vector<2x128xf32>
    %cst_535 = arith.constant dense<0xFF800000> : vector<2xf32>
    %388 = vector.multi_reduction <maximumf>, %387, %cst_535 [1] : vector<2x128xf32> to vector<2xf32>
    %389 = vector.shape_cast %388 : vector<2xf32> to vector<2x1xf32>
    %390 = vector.broadcast %389 : vector<2x1xf32> to vector<2x128xf32>
    %391 = arith.subf %387, %390 : vector<2x128xf32>
    %392 = math.exp %391 : vector<2x128xf32>
    %cst_536 = arith.constant dense<0.000000e+00> : vector<2xf32>
    %393 = vector.multi_reduction <add>, %392, %cst_536 [1] : vector<2x128xf32> to vector<2xf32>
    %394 = vector.shape_cast %393 : vector<2xf32> to vector<2x1xf32>
    %395 = vector.broadcast %394 : vector<2x1xf32> to vector<2x128xf32>
    %396 = arith.divf %392, %395 : vector<2x128xf32>
    %c0_i32 = arith.constant 0 : i32
    %397 = vector.broadcast %c0_i32 : i32 to vector<2x128xi32>
    %398 = arith.cmpi eq, %373, %397 : vector<2x128xi32>
    %399 = arith.select %398, %385, %396 : vector<2x128xi1>, vector<2x128xf32>
    %c0_537 = arith.constant 0 : index
    %c0_538 = arith.constant 0 : index
    %400 = vector.load %arg14[%c0_537, %c0_538] : memref<2x128xf32, #tpu.memory_space<vmem>>, vector<2x128xf32>
    tpu.vector_store %arg14[%c0_537, %c0_538], %399 {strides = array<i32>} : memref<2x128xf32, #tpu.memory_space<vmem>>, vector<2x128xf32>,
    return
  }
}

</mosaic_0001>

<llo_original>
// kernel: tpu_custom_call.1
$region0: #{tpu_custom_call.1}
  #allocation0 [shape = 'u32[]', space=smem, size = 0x4, offset = 0x4, fixed_abs, tag = 'smem constant byte address 0x4 - core index']
  #allocation1 [shape = 'u32[144,128]{1,0:T(1,128)}', space=vmem, size = 0x12000, scoped, tag = 'internal scratch']
  #allocation2 [shape = 'bf16[128,128]{1,0:T(16,128)(2,1)}', space=vmem, size = 0x8000, scoped, tag = 'scratch operand']
  #allocation3 [shape = 'f32[200,128]{1,0:T(8,128)}', space=vmem, size = 0x19000, scoped, tag = 'scratch operand']
  #allocation4 [shape = 'f32[32,1152]{1,0:T(8,128)}', space=vmem, size = 0x24000, scoped, tag = 'scratch operand']
  #allocation5 [shape = 'f32[72,128]{1,0:T(8,128)}', space=vmem, size = 0x9000, scoped, tag = 'scratch operand']
  #allocation6 [shape = 'f32[8,1152]{1,0:T(8,128)}', space=vmem, size = 0x9000, scoped, tag = 'scratch operand']
  #allocation7 [shape = 'f32[32,128]{1,0:T(8,128)}', space=vmem, size = 0x4000, scoped, tag = 'scratch operand']
  #allocation8 [shape = 'f32[2,1152]{1,0:T(2,128)}', space=vmem, size = 0x2400, scoped, tag = 'scratch operand']
  %s0 = inlined_call_operand.vmem [shape: bf16[128,36], index: 0, kind: input, shape index: {}]
  %s1 = inlined_call_operand.vmem [shape: bf16[128,128], index: 1, kind: input, shape index: {}]
  %s2 = inlined_call_operand.vmem [shape: f32[1,128], index: 2, kind: input, shape index: {}]
  %s3 = inlined_call_operand.hbm [shape: bf16[1152,128], index: 3, kind: input, shape index: {}]
  %s4 = inlined_call_operand.hbm [shape: f32[1,128], index: 4, kind: input, shape index: {}]
  %s5 = inlined_call_operand.hbm [shape: f32[1,128], index: 5, kind: input, shape index: {}]
  %s6 = inlined_call_operand.hbm [shape: bf16[1152,128], index: 6, kind: input, shape index: {}]
  %s7 = inlined_call_operand.hbm [shape: f32[1,128], index: 7, kind: input, shape index: {}]
  %s8 = inlined_call_operand.hbm [shape: f32[1,128], index: 8, kind: input, shape index: {}]
  %s9 = inlined_call_operand.hbm [shape: bf16[1152,128], index: 9, kind: input, shape index: {}]
  %s10 = inlined_call_operand.hbm [shape: f32[1,128], index: 10, kind: input, shape index: {}]
  %s11 = inlined_call_operand.hbm [shape: f32[1,128], index: 11, kind: input, shape index: {}]
  %s12 = inlined_call_operand.vmem [shape: bf16[1,128,128], index: 12, kind: input, shape index: {}]
  %s13 = inlined_call_operand.vmem [shape: f32[1,128], index: 13, kind: input, shape index: {}]
  %s14 = inlined_call_operand.hbm [shape: f32[2,128], index: 14, kind: output, shape index: {}]
  %s15 = sld [smem:[#allocation0]]
  $region102: #{tpu_custom_call.1} parent=0
    _
  %s17 = ssub.s32 1, %s15
  %s18 = scalar_select 0, %s17, %s15
  $region1: #{tpu_custom_call.1} parent=0
    #allocation9 [shape = 'u8[294912]{0}', space=vmem, size = 0x48000, scoped, tag = 'input window, operand 3, single buffered']
    #allocation10 [shape = 's32[1]{0}', space=sflag, size = 0x4, scoped, tag = 'scoped memory for tpu_custom_call.1']
    #allocation11 [shape = 's32[1]{0}', space=sflag, size = 0x4, scoped, tag = 'scoped memory for tpu_custom_call.1']
    #allocation12 [shape = 'u8[512]{0}', space=vmem, size = 0x400, scoped, tag = 'input window, operand 4, single buffered']
    #allocation13 [shape = 's32[1]{0}', space=sflag, size = 0x4, scoped, tag = 'scoped memory for tpu_custom_call.1']
    #allocation14 [shape = 'u8[512]{0}', space=vmem, size = 0x400, scoped, tag = 'input window, operand 5, single buffered']
    #allocation15 [shape = 'u8[294912]{0}', space=vmem, size = 0x48000, scoped, tag = 'input window, operand 6, single buffered']
    #allocation16 [shape = 's32[1]{0}', space=sflag, size = 0x4, scoped, tag = 'scoped memory for tpu_custom_call.1']
    #allocation17 [shape = 'u8[512]{0}', space=vmem, size = 0x400, scoped, tag = 'input window, operand 7, single buffered']
    #allocation18 [shape = 'u8[512]{0}', space=vmem, size = 0x400, scoped, tag = 'input window, operand 8, single buffered']
    #allocation19 [shape = 's32[1]{0}', space=sflag, size = 0x4, scoped, tag = 'scoped memory for tpu_custom_call.1']
    #allocation20 [shape = 'u8[294912]{0}', space=vmem, size = 0x48000, scoped, tag = 'input window, operand 9, single buffered']
    #allocation21 [shape = 'u8[512]{0}', space=vmem, size = 0x400, scoped, tag = 'input window, operand 10, single buffered']
    #allocation22 [shape = 's32[1]{0}', space=sflag, size = 0x4, scoped, tag = 'scoped memory for tpu_custom_call.1']
    #allocation23 [shape = 'u8[512]{0}', space=vmem, size = 0x400, scoped, tag = 'input window, operand 11, single buffered']
    #allocation24 [shape = 'u8[1024]{0}', space=vmem, size = 0x400, scoped, tag = 'output window, operand 0, single buffered']
    %19 = vsyncpa [#allocation10], 0
    %20 = vsyncpa [#allocation13], 0
    %21 = vsyncpa [#allocation16], 0
    %22 = vsyncpa [#allocation19], 0
    %23 = vsyncpa [#allocation22], 0
    %24 = vsyncpa [#allocation11], 0
    // Predicated region
    $region2: #{tpu_custom_call.1} parent=1 // pred_check
      _
    $region3: #{tpu_custom_call.1} parent=1 // pred_check_branch
      %26 = sbr.rel (0) target = $region5
    $region4: #{tpu_custom_call.1} parent=1 // pred_region
      _
    $region5: #{tpu_custom_call.1} parent=1 // pred_fallthru
      _
    // Predicated region
    $region6: #{tpu_custom_call.1} parent=1 // pred_check
      _
    $region7: #{tpu_custom_call.1} parent=1 // pred_check_branch
      %28 = sbr.rel (0) target = $region9
    $region8: #{tpu_custom_call.1} parent=1 // pred_region
      _
    $region9: #{tpu_custom_call.1} parent=1 // pred_fallthru
      _
    // Predicated region
    $region10: #{tpu_custom_call.1} parent=1 // pred_check
      _
    $region11: #{tpu_custom_call.1} parent=1 // pred_check_branch
      %30 = sbr.rel (0) target = $region13
    $region12: #{tpu_custom_call.1} parent=1 // pred_region
      _
    $region13: #{tpu_custom_call.1} parent=1 // pred_fallthru
      _
    // Predicated region
    $region14: #{tpu_custom_call.1} parent=1 // pred_check
      _
    $region15: #{tpu_custom_call.1} parent=1 // pred_check_branch
      %32 = sbr.rel (0) target = $region17
    $region16: #{tpu_custom_call.1} parent=1 // pred_region
      %s34 = ssub.s32 9216, 9216
      %35 = vsyncadd [#allocation10], %s34
      %s36 = sshll.u32 [#allocation9], 4
      %s37 = int_to_ptr.vmem [resolvable:$true] %s36
      %42 = dma.hbm_to_vmem [thread:$0]  %s3, 9216, %s37, [#allocation10], 64, 64, 4
    $region17: #{tpu_custom_call.1} parent=1 // pred_fallthru
      _
    // Predicated region
    $region18: #{tpu_custom_call.1} parent=1 // pred_check
      _
    $region19: #{tpu_custom_call.1} parent=1 // pred_check_branch
      %44 = sbr.rel (0) target = $region21
    $region20: #{tpu_custom_call.1} parent=1 // pred_region
      %s46 = ssub.s32 16, 16
      %47 = vsyncadd [#allocation13], %s46
      %s49 = sshll.u32 [#allocation12], 4
      %s50 = int_to_ptr.vmem [resolvable:$true] %s49
      %52 = dma.hbm_to_vmem [thread:$0]  %s4, 16, %s50, [#allocation13]
    $region21: #{tpu_custom_call.1} parent=1 // pred_fallthru
      _
    // Predicated region
    $region22: #{tpu_custom_call.1} parent=1 // pred_check
      _
    $region23: #{tpu_custom_call.1} parent=1 // pred_check_branch
      %54 = sbr.rel (0) target = $region25
    $region24: #{tpu_custom_call.1} parent=1 // pred_region
      %s56 = ssub.s32 16, 16
      %57 = vsyncadd [#allocation13], %s56
      %s59 = sshll.u32 [#allocation14], 4
      %s60 = int_to_ptr.vmem [resolvable:$true] %s59
      %62 = dma.hbm_to_vmem [thread:$0]  %s5, 16, %s60, [#allocation13]
    $region25: #{tpu_custom_call.1} parent=1 // pred_fallthru
      _
    // Predicated region
    $region26: #{tpu_custom_call.1} parent=1 // pred_check
      _
    $region27: #{tpu_custom_call.1} parent=1 // pred_check_branch
      %64 = sbr.rel (0) target = $region29
    $region28: #{tpu_custom_call.1} parent=1 // pred_region
      %s66 = ssub.s32 9216, 9216
      %67 = vsyncadd [#allocation16], %s66
      %s68 = sshll.u32 [#allocation15], 4
      %s69 = int_to_ptr.vmem [resolvable:$true] %s68
      %74 = dma.hbm_to_vmem [thread:$0]  %s6, 9216, %s69, [#allocation16], 64, 64, 4
    $region29: #{tpu_custom_call.1} parent=1 // pred_fallthru
      _
    // Predicated region
    $region30: #{tpu_custom_call.1} parent=1 // pred_check
      _
    $region31: #{tpu_custom_call.1} parent=1 // pred_check_branch
      %76 = sbr.rel (0) target = $region33
    $region32: #{tpu_custom_call.1} parent=1 // pred_region
      %s78 = ssub.s32 16, 16
      %79 = vsyncadd [#allocation16], %s78
      %s81 = sshll.u32 [#allocation17], 4
      %s82 = int_to_ptr.vmem [resolvable:$true] %s81
      %84 = dma.hbm_to_vmem [thread:$0]  %s7, 16, %s82, [#allocation16]
    $region33: #{tpu_custom_call.1} parent=1 // pred_fallthru
      _
    // Predicated region
    $region34: #{tpu_custom_call.1} parent=1 // pred_check
      _
    $region35: #{tpu_custom_call.1} parent=1 // pred_check_branch
      %86 = sbr.rel (0) target = $region37
    $region36: #{tpu_custom_call.1} parent=1 // pred_region
      %s88 = ssub.s32 16, 16
      %89 = vsyncadd [#allocation19], %s88
      %s91 = sshll.u32 [#allocation18], 4
      %s92 = int_to_ptr.vmem [resolvable:$true] %s91
      %94 = dma.hbm_to_vmem [thread:$0]  %s8, 16, %s92, [#allocation19]
    $region37: #{tpu_custom_call.1} parent=1 // pred_fallthru
      _
    // Predicated region
    $region38: #{tpu_custom_call.1} parent=1 // pred_check
      _
    $region39: #{tpu_custom_call.1} parent=1 // pred_check_branch
      %96 = sbr.rel (0) target = $region41
    $region40: #{tpu_custom_call.1} parent=1 // pred_region
      %s98 = ssub.s32 9216, 9216
      %99 = vsyncadd [#allocation19], %s98
      %s100 = sshll.u32 [#allocation20], 4
      %s101 = int_to_ptr.vmem [resolvable:$true] %s100
      %106 = dma.hbm_to_vmem [thread:$0]  %s9, 9216, %s101, [#allocation19], 64, 64, 4
    $region41: #{tpu_custom_call.1} parent=1 // pred_fallthru
      _
    // Predicated region
    $region42: #{tpu_custom_call.1} parent=1 // pred_check
      _
    $region43: #{tpu_custom_call.1} parent=1 // pred_check_branch
      %108 = sbr.rel (0) target = $region45
    $region44: #{tpu_custom_call.1} parent=1 // pred_region
      %s110 = ssub.s32 16, 16
      %111 = vsyncadd [#allocation22], %s110
      %s113 = sshll.u32 [#allocation21], 4
      %s114 = int_to_ptr.vmem [resolvable:$true] %s113
      %116 = dma.hbm_to_vmem [thread:$0]  %s10, 16, %s114, [#allocation22]
    $region45: #{tpu_custom_call.1} parent=1 // pred_fallthru
      _
    // Predicated region
    $region46: #{tpu_custom_call.1} parent=1 // pred_check
      _
    $region47: #{tpu_custom_call.1} parent=1 // pred_check_branch
      %118 = sbr.rel (0) target = $region49
    $region48: #{tpu_custom_call.1} parent=1 // pred_region
      %s120 = ssub.s32 16, 16
      %121 = vsyncadd [#allocation22], %s120
      %s123 = sshll.u32 [#allocation23], 4
      %s124 = int_to_ptr.vmem [resolvable:$true] %s123
      %126 = dma.hbm_to_vmem [thread:$0]  %s11, 16, %s124, [#allocation22]
    $region49: #{tpu_custom_call.1} parent=1 // pred_fallthru
      _
    // Predicated region
    $region50: #{tpu_custom_call.1} parent=1 // pred_check
      _
    $region51: #{tpu_custom_call.1} parent=1 // pred_check_branch
      %128 = sbr.rel (0) target = $region53
    $region52: #{tpu_custom_call.1} parent=1 // pred_region
      _
    $region53: #{tpu_custom_call.1} parent=1 // pred_fallthru
      _
    // Predicated region
    $region54: #{tpu_custom_call.1} parent=1 // pred_check
      _
    $region55: #{tpu_custom_call.1} parent=1 // pred_check_branch
      %130 = sbr.rel (0) target = $region57
    $region56: #{tpu_custom_call.1} parent=1 // pred_region
      _
    $region57: #{tpu_custom_call.1} parent=1 // pred_fallthru
      _
    // Predicated region
    $region58: #{tpu_custom_call.1} parent=1 // pred_check
      _
    $region59: #{tpu_custom_call.1} parent=1 // pred_check_branch
      %132 = sbr.rel (0) target = $region61
    $region60: #{tpu_custom_call.1} parent=1 // pred_region
      %133 = dma.done [#allocation10], 9216
    $region61: #{tpu_custom_call.1} parent=1 // pred_fallthru
      _
    // Predicated region
    $region62: #{tpu_custom_call.1} parent=1 // pred_check
      _
    $region63: #{tpu_custom_call.1} parent=1 // pred_check_branch
      %135 = sbr.rel (0) target = $region65
    $region64: #{tpu_custom_call.1} parent=1 // pred_region
      %136 = dma.done [#allocation13], 16
    $region65: #{tpu_custom_call.1} parent=1 // pred_fallthru
      _
    // Predicated region
    $region66: #{tpu_custom_call.1} parent=1 // pred_check
      _
    $region67: #{tpu_custom_call.1} parent=1 // pred_check_branch
      %138 = sbr.rel (0) target = $region69
    $region68: #{tpu_custom_call.1} parent=1 // pred_region
      %139 = dma.done [#allocation13], 16
    $region69: #{tpu_custom_call.1} parent=1 // pred_fallthru
      _
    // Predicated region
    $region70: #{tpu_custom_call.1} parent=1 // pred_check
      _
    $region71: #{tpu_custom_call.1} parent=1 // pred_check_branch
      %141 = sbr.rel (0) target = $region73
    $region72: #{tpu_custom_call.1} parent=1 // pred_region
      %142 = dma.done [#allocation16], 9216
    $region73: #{tpu_custom_call.1} parent=1 // pred_fallthru
      _
    // Predicated region
    $region74: #{tpu_custom_call.1} parent=1 // pred_check
      _
    $region75: #{tpu_custom_call.1} parent=1 // pred_check_branch
      %144 = sbr.rel (0) target = $region77
    $region76: #{tpu_custom_call.1} parent=1 // pred_region
      %145 = dma.done [#allocation16], 16
    $region77: #{tpu_custom_call.1} parent=1 // pred_fallthru
      _
    // Predicated region
    $region78: #{tpu_custom_call.1} parent=1 // pred_check
      _
    $region79: #{tpu_custom_call.1} parent=1 // pred_check_branch
      %147 = sbr.rel (0) target = $region81
    $region80: #{tpu_custom_call.1} parent=1 // pred_region
      %148 = dma.done [#allocation19], 16
    $region81: #{tpu_custom_call.1} parent=1 // pred_fallthru
      _
    // Predicated region
    $region82: #{tpu_custom_call.1} parent=1 // pred_check
      _
    $region83: #{tpu_custom_call.1} parent=1 // pred_check_branch
      %150 = sbr.rel (0) target = $region85
    $region84: #{tpu_custom_call.1} parent=1 // pred_region
      %151 = dma.done [#allocation19], 9216
    $region85: #{tpu_custom_call.1} parent=1 // pred_fallthru
      _
    // Predicated region
    $region86: #{tpu_custom_call.1} parent=1 // pred_check
      _
    $region87: #{tpu_custom_call.1} parent=1 // pred_check_branch
      %153 = sbr.rel (0) target = $region89
    $region88: #{tpu_custom_call.1} parent=1 // pred_region
      %154 = dma.done [#allocation22], 16
    $region89: #{tpu_custom_call.1} parent=1 // pred_fallthru
      _
    // Predicated region
    $region90: #{tpu_custom_call.1} parent=1 // pred_check
      _
    $region91: #{tpu_custom_call.1} parent=1 // pred_check_branch
      %156 = sbr.rel (0) target = $region93
    $region92: #{tpu_custom_call.1} parent=1 // pred_region
      %157 = dma.done [#allocation22], 16
    $region93: #{tpu_custom_call.1} parent=1 // pred_fallthru
      _
    %159 = vst [vmem:[#allocation2] sm:$0xff] 0
    %160 = vst [vmem:[#allocation2 + $0x8] sm:$0xff] 0
    %161 = vst [vmem:[#allocation2 + $0x10] sm:$0xff] 0
    %162 = vst [vmem:[#allocation2 + $0x18] sm:$0xff] 0
    %163 = vst [vmem:[#allocation2 + $0x20] sm:$0xff] 0
    %164 = vst [vmem:[#allocation2 + $0x28] sm:$0xff] 0
    %165 = vst [vmem:[#allocation2 + $0x30] sm:$0xff] 0
    %166 = vst [vmem:[#allocation2 + $0x38] sm:$0xff] 0
    %v167 = vld [vmem:[%s0] sm:$0xf]
    %v168 = vld [vmem:[%s0 + $0x4] sm:$0xf]
    %v169 = vld [vmem:[%s0 + $0x8] sm:$0xf]
    %v170 = vld [vmem:[%s0 + $0xc] sm:$0xf]
    %v171 = vld [vmem:[%s0 + $0x10] sm:$0xf]
    %v172 = vld [vmem:[%s0 + $0x14] sm:$0xf]
    %v173 = vld [vmem:[%s0 + $0x18] sm:$0xf]
    %v174 = vld [vmem:[%s0 + $0x1c] sm:$0xf]
    %v175 = vld [vmem:[%s0 + $0x20] sm:$0xf]
    %v176 = vld [vmem:[%s0 + $0x24] sm:$0xf]
    %v177 = vld [vmem:[%s0 + $0x28] sm:$0xf]
    %v178 = vld [vmem:[%s0 + $0x2c] sm:$0xf]
    %v179 = vld [vmem:[%s0 + $0x30] sm:$0xf]
    %v180 = vld [vmem:[%s0 + $0x34] sm:$0xf]
    %v181 = vld [vmem:[%s0 + $0x38] sm:$0xf]
    %v182 = vld [vmem:[%s0 + $0x3c] sm:$0xf]
    %v199 = vunpack.c.l.b16 %v167
    %v200 = vunpack.c.l.b16 %v168
    %v201 = vunpack.c.l.b16 %v169
    %v202 = vunpack.c.l.b16 %v170
    %v203 = vunpack.c.l.b16 %v171
    %v204 = vunpack.c.l.b16 %v172
    %v205 = vunpack.c.l.b16 %v173
    %v206 = vunpack.c.l.b16 %v174
    %v207 = vunpack.c.l.b16 %v175
    %v208 = vunpack.c.l.b16 %v176
    %v209 = vunpack.c.l.b16 %v177
    %v210 = vunpack.c.l.b16 %v178
    %v211 = vunpack.c.l.b16 %v179
    %v212 = vunpack.c.l.b16 %v180
    %v213 = vunpack.c.l.b16 %v181
    %v214 = vunpack.c.l.b16 %v182
    %v215 = vpack.c.b16 %v200, %v199
    %v216 = vpack.c.b16 %v202, %v201
    %v217 = vpack.c.b16 %v204, %v203
    %v218 = vpack.c.b16 %v206, %v205
    %v219 = vpack.c.b16 %v208, %v207
    %v220 = vpack.c.b16 %v210, %v209
    %v221 = vpack.c.b16 %v212, %v211
    %v222 = vpack.c.b16 %v214, %v213
    %vm231 = vcmask 293888
    %232 = vst.msk [vmem:[#allocation2] sm:$0xff] %vm231, %v215
    %233 = vst.msk [vmem:[#allocation2 + $0x8] sm:$0xff] %vm231, %v216
    %234 = vst.msk [vmem:[#allocation2 + $0x10] sm:$0xff] %vm231, %v217
    %235 = vst.msk [vmem:[#allocation2 + $0x18] sm:$0xff] %vm231, %v218
    %236 = vst.msk [vmem:[#allocation2 + $0x20] sm:$0xff] %vm231, %v219
    %237 = vst.msk [vmem:[#allocation2 + $0x28] sm:$0xff] %vm231, %v220
    %238 = vst.msk [vmem:[#allocation2 + $0x30] sm:$0xff] %vm231, %v221
    %239 = vst.msk [vmem:[#allocation2 + $0x38] sm:$0xff] %vm231, %v222
    %v240 = vld [vmem:[#allocation2] sm:$0xff]
    %v241 = vld [vmem:[#allocation2 + $0x8] sm:$0xff]
    %v242 = vld [vmem:[#allocation2 + $0x10] sm:$0xff]
    %v243 = vld [vmem:[#allocation2 + $0x18] sm:$0xff]
    %v244 = vld [vmem:[#allocation2 + $0x20] sm:$0xff]
    %v245 = vld [vmem:[#allocation2 + $0x28] sm:$0xff]
    %v246 = vld [vmem:[#allocation2 + $0x30] sm:$0xff]
    %v247 = vld [vmem:[#allocation2 + $0x38] sm:$0xff]
    %v248 = vld [vmem:[%s1] sm:$0xf]
    %v249 = vld [vmem:[%s1 + $0x4] sm:$0xf]
    %v250 = vld [vmem:[%s1 + $0x8] sm:$0xf]
    %v251 = vld [vmem:[%s1 + $0xc] sm:$0xf]
    %v252 = vld [vmem:[%s1 + $0x10] sm:$0xf]
    %v253 = vld [vmem:[%s1 + $0x14] sm:$0xf]
    %v254 = vld [vmem:[%s1 + $0x18] sm:$0xf]
    %v255 = vld [vmem:[%s1 + $0x1c] sm:$0xf]
    %v256 = vld [vmem:[%s1 + $0x20] sm:$0xf]
    %v257 = vld [vmem:[%s1 + $0x24] sm:$0xf]
    %v258 = vld [vmem:[%s1 + $0x28] sm:$0xf]
    %v259 = vld [vmem:[%s1 + $0x2c] sm:$0xf]
    %v260 = vld [vmem:[%s1 + $0x30] sm:$0xf]
    %v261 = vld [vmem:[%s1 + $0x34] sm:$0xf]
    %v262 = vld [vmem:[%s1 + $0x38] sm:$0xf]
    %v263 = vld [vmem:[%s1 + $0x3c] sm:$0xf]
    %v264 = vld [vmem:[%s2] sm:$0x1]
    %v266 = vlaneseq
    %v267 = vshrl.u32 %v266, 7
    %v268 = vsub.s32 0, %v267
    %v269 = vrot.slane %v264, %v268
    %v287 = vunpack.c.l.b16 %v248
    %v288 = vunpack.c.l.b16 %v249
    %v289 = vunpack.c.l.b16 %v250
    %v290 = vunpack.c.l.b16 %v251
    %v291 = vunpack.c.l.b16 %v252
    %v292 = vunpack.c.l.b16 %v253
    %v293 = vunpack.c.l.b16 %v254
    %v294 = vunpack.c.l.b16 %v255
    %v295 = vunpack.c.l.b16 %v256
    %v296 = vunpack.c.l.b16 %v257
    %v297 = vunpack.c.l.b16 %v258
    %v298 = vunpack.c.l.b16 %v259
    %v299 = vunpack.c.l.b16 %v260
    %v300 = vunpack.c.l.b16 %v261
    %v301 = vunpack.c.l.b16 %v262
    %v302 = vunpack.c.l.b16 %v263
    %v303 = vpack.c.b16 %v288, %v287
    %v304 = vpack.c.b16 %v290, %v289
    %v305 = vpack.c.b16 %v292, %v291
    %v306 = vpack.c.b16 %v294, %v293
    %v307 = vpack.c.b16 %v296, %v295
    %v308 = vpack.c.b16 %v298, %v297
    %v309 = vpack.c.b16 %v300, %v299
    %v310 = vpack.c.b16 %v302, %v301
    %319 = vmatprep.subr.bf16.mxu0 0
    %320 = vmatpush1.bf16.msra.mxu0 %v303
    %321 = vmatprep.subr.bf16.mxu0 0
    %322 = vmatpush1.bf16.msra.mxu0 %v304
    %323 = vmatprep.subr.bf16.mxu0 0
    %324 = vmatpush1.bf16.msra.mxu0 %v305
    %325 = vmatprep.subr.bf16.mxu0 0
    %326 = vmatpush1.bf16.msra.mxu0 %v306
    %327 = vmatprep.subr.bf16.mxu0 0
    %328 = vmatpush1.bf16.msra.mxu0 %v307
    %329 = vmatprep.subr.bf16.mxu0 0
    %330 = vmatpush1.bf16.msra.mxu0 %v308
    %331 = vmatprep.subr.bf16.mxu0 0
    %332 = vmatpush1.bf16.msra.mxu0 %v309
    %333 = vmatprep.subr.bf16.mxu0 0
    %334 = vmatpush1.bf16.msra.mxu0 %v310
    %335 = vmatprep.subr.bf16.mxu0 0
    %336 = vmatpush1.bf16.msra.mxu0 0
    %337 = vmatprep.subr.bf16.mxu0 0
    %338 = vmatpush1.bf16.msra.mxu0 0
    %339 = vmatprep.subr.bf16.mxu0 0
    %340 = vmatpush1.bf16.msra.mxu0 0
    %341 = vmatprep.subr.bf16.mxu0 0
    %342 = vmatpush1.bf16.msra.mxu0 0
    %343 = vmatprep.subr.bf16.mxu0 0
    %344 = vmatpush1.bf16.msra.mxu0 0
    %345 = vmatprep.subr.bf16.mxu0 0
    %346 = vmatpush1.bf16.msra.mxu0 0
    %347 = vmatprep.subr.bf16.mxu0 0
    %348 = vmatpush1.bf16.msra.mxu0 0
    %349 = vmatprep.subr.bf16.mxu0 0
    %350 = vmatpush1.bf16.msra.mxu0 0
    %351 = vmatprep.mubr.bf16.mxu0 0
    %352 = vmatmul.mubr.bf16.gmra.mrb[0].mxu0 %v240
    %v353 = vpop.f32.mrb[0].mxu0
    %v354 = vadd.f32 %v269, %v353
    %v355 = vpop.f32.mrb[0].mxu0
    %v356 = vpop.f32.mrb[0].mxu0
    %v357 = vadd.f32 %v269, %v356
    %v358 = vpop.f32.mrb[0].mxu0
    %359 = vmatprep.mubr.bf16.mxu0 0
    %360 = vmatmul.mubr.bf16.gmra.mrb[0].mxu0 %v241
    %v361 = vpop.f32.mrb[0].mxu0
    %v362 = vadd.f32 %v269, %v361
    %v363 = vpop.f32.mrb[0].mxu0
    %v364 = vpop.f32.mrb[0].mxu0
    %v365 = vadd.f32 %v269, %v364
    %v366 = vpop.f32.mrb[0].mxu0
    %367 = vmatprep.mubr.bf16.mxu0 0
    %368 = vmatmul.mubr.bf16.gmra.mrb[0].mxu0 %v242
    %v369 = vpop.f32.mrb[0].mxu0
    %v370 = vadd.f32 %v269, %v369
    %v371 = vpop.f32.mrb[0].mxu0
    %v372 = vpop.f32.mrb[0].mxu0
    %v373 = vadd.f32 %v269, %v372
    %v374 = vpop.f32.mrb[0].mxu0
    %375 = vmatprep.mubr.bf16.mxu0 0
    %376 = vmatmul.mubr.bf16.gmra.mrb[0].mxu0 %v243
    %v377 = vpop.f32.mrb[0].mxu0
    %v378 = vadd.f32 %v269, %v377
    %v379 = vpop.f32.mrb[0].mxu0
    %v380 = vpop.f32.mrb[0].mxu0
    %v381 = vadd.f32 %v269, %v380
    %v382 = vpop.f32.mrb[0].mxu0
    %383 = vmatprep.mubr.bf16.mxu0 0
    %384 = vmatmul.mubr.bf16.gmra.mrb[0].mxu0 %v244
    %v385 = vpop.f32.mrb[0].mxu0
    %v386 = vadd.f32 %v269, %v385
    %v387 = vpop.f32.mrb[0].mxu0
    %v388 = vpop.f32.mrb[0].mxu0
    %v389 = vadd.f32 %v269, %v388
    %v390 = vpop.f32.mrb[0].mxu0
    %391 = vmatprep.mubr.bf16.mxu0 0
    %392 = vmatmul.mubr.bf16.gmra.mrb[0].mxu0 %v245
    %v393 = vpop.f32.mrb[0].mxu0
    %v394 = vadd.f32 %v269, %v393
    %v395 = vpop.f32.mrb[0].mxu0
    %v396 = vpop.f32.mrb[0].mxu0
    %v397 = vadd.f32 %v269, %v396
    %v398 = vpop.f32.mrb[0].mxu0
    %399 = vmatprep.mubr.bf16.mxu0 0
    %400 = vmatmul.mubr.bf16.gmra.mrb[0].mxu0 %v246
    %v401 = vpop.f32.mrb[0].mxu0
    %v402 = vadd.f32 %v269, %v401
    %v403 = vpop.f32.mrb[0].mxu0
    %v404 = vpop.f32.mrb[0].mxu0
    %v405 = vadd.f32 %v269, %v404
    %v406 = vpop.f32.mrb[0].mxu0
    %407 = vmatprep.mubr.bf16.mxu0 0
    %408 = vmatmul.mubr.bf16.gmra.mrb[0].mxu0 %v247
    %v409 = vpop.f32.mrb[0].mxu0
    %v410 = vadd.f32 %v269, %v409
    %v411 = vpop.f32.mrb[0].mxu0
    %v412 = vpop.f32.mrb[0].mxu0
    %v413 = vadd.f32 %v269, %v412
    %v414 = vpop.f32.mrb[0].mxu0
    %415 = vdwg.mxu0
    %v416 = vmul.f32 %v354, 0.2
    %v417 = vmul.f32 %v357, 0.2
    %v418 = vmul.f32 %v362, 0.2
    %v419 = vmul.f32 %v365, 0.2
    %v420 = vmul.f32 %v370, 0.2
    %v421 = vmul.f32 %v373, 0.2
    %v422 = vmul.f32 %v378, 0.2
    %v423 = vmul.f32 %v381, 0.2
    %v424 = vmul.f32 %v386, 0.2
    %v425 = vmul.f32 %v389, 0.2
    %v426 = vmul.f32 %v394, 0.2
    %v427 = vmul.f32 %v397, 0.2
    %v428 = vmul.f32 %v402, 0.2
    %v429 = vmul.f32 %v405, 0.2
    %v430 = vmul.f32 %v410, 0.2
    %v431 = vmul.f32 %v413, 0.2
    %v432 = vmax.f32 %v354, %v416
    %v433 = vmax.f32 %v357, %v417
    %v434 = vmax.f32 %v362, %v418
    %v435 = vmax.f32 %v365, %v419
    %v436 = vmax.f32 %v370, %v420
    %v437 = vmax.f32 %v373, %v421
    %v438 = vmax.f32 %v378, %v422
    %v439 = vmax.f32 %v381, %v423
    %v440 = vmax.f32 %v386, %v424
    %v441 = vmax.f32 %v389, %v425
    %v442 = vmax.f32 %v394, %v426
    %v443 = vmax.f32 %v397, %v427
    %v444 = vmax.f32 %v402, %v428
    %v445 = vmax.f32 %v405, %v429
    %v446 = vmax.f32 %v410, %v430
    %v447 = vmax.f32 %v413, %v431
    %448 = vst [vmem:[#allocation3] sm:$0xff] 0.0
    %449 = vst [vmem:[#allocation3 + $0x8] sm:$0xff] 0.0
    %450 = vst [vmem:[#allocation3 + $0x10] sm:$0xff] 0.0
    %451 = vst [vmem:[#allocation3 + $0x18] sm:$0xff] 0.0
    %452 = vst [vmem:[#allocation3 + $0x20] sm:$0xff] 0.0
    %453 = vst [vmem:[#allocation3 + $0x28] sm:$0xff] 0.0
    %454 = vst [vmem:[#allocation3 + $0x30] sm:$0xff] 0.0
    %455 = vst [vmem:[#allocation3 + $0x38] sm:$0xff] 0.0
    %456 = vst [vmem:[#allocation3 + $0x40] sm:$0xff] 0.0
    %457 = vst [vmem:[#allocation3 + $0x48] sm:$0xff] 0.0
    %458 = vst [vmem:[#allocation3 + $0x50] sm:$0xff] 0.0
    %459 = vst [vmem:[#allocation3 + $0x58] sm:$0xff] 0.0
    %460 = vst [vmem:[#allocation3 + $0x60] sm:$0xff] 0.0
    %461 = vst [vmem:[#allocation3 + $0x68] sm:$0xff] 0.0
    %462 = vst [vmem:[#allocation3 + $0x70] sm:$0xff] 0.0
    %463 = vst [vmem:[#allocation3 + $0x78] sm:$0xff] 0.0
    %464 = vst [vmem:[#allocation3 + $0x80] sm:$0xff] 0.0
    %465 = vst [vmem:[#allocation3 + $0x88] sm:$0xff] 0.0
    %466 = vst [vmem:[#allocation3 + $0x90] sm:$0xff] 0.0
    %467 = vst [vmem:[#allocation3 + $0x98] sm:$0xff] 0.0
    %468 = vst [vmem:[#allocation3 + $0xa0] sm:$0xff] 0.0
    %469 = vst [vmem:[#allocation3 + $0xa8] sm:$0xff] 0.0
    %470 = vst [vmem:[#allocation3 + $0xb0] sm:$0xff] 0.0
    %471 = vst [vmem:[#allocation3 + $0xb8] sm:$0xff] 0.0
    %472 = vst [vmem:[#allocation3 + $0xc0] sm:$0xff] 0.0
    %473 = vst [vmem:[#allocation3 + $0xb] sm:$0xff] %v432
    %474 = vst [vmem:[#allocation3 + $0x15] sm:$0xff] %v433
    %475 = vst [vmem:[#allocation3 + $0x1f] sm:$0xff] %v434
    %476 = vst [vmem:[#allocation3 + $0x29] sm:$0xff] %v435
    %477 = vst [vmem:[#allocation3 + $0x33] sm:$0xff] %v436
    %478 = vst [vmem:[#allocation3 + $0x3d] sm:$0xff] %v437
    %479 = vst [vmem:[#allocation3 + $0x47] sm:$0xff] %v438
    %480 = vst [vmem:[#allocation3 + $0x51] sm:$0xff] %v439
    %481 = vst [vmem:[#allocation3 + $0x6f] sm:$0xff] %v440
    %482 = vst [vmem:[#allocation3 + $0x79] sm:$0xff] %v441
    %483 = vst [vmem:[#allocation3 + $0x83] sm:$0xff] %v442
    %484 = vst [vmem:[#allocation3 + $0x8d] sm:$0xff] %v443
    %485 = vst [vmem:[#allocation3 + $0x97] sm:$0xff] %v444
    %486 = vst [vmem:[#allocation3 + $0xa1] sm:$0xff] %v445
    %487 = vst [vmem:[#allocation3 + $0xab] sm:$0xff] %v446
    %488 = vst [vmem:[#allocation3 + $0xb5] sm:$0xff] %v447
    %v489 = vld [vmem:[#allocation3] ss:$2 sm:$0xf]
    %490 = vst [vmem:[#allocation4] sm:$0xf] %v489
    %s491 = scalar_lea.vmem [#allocation3], 20
    %v492 = vld [vmem:[%s491] ss:$2 sm:$0xf]
    %v494 = vrot.slane %v492, 4
    %496 = vst [vmem:[#allocation4] sm:$0xf0] %v494
    %s497 = scalar_lea.vmem [#allocation3], 40
    %v498 = vld [vmem:[%s497] ss:$2 sm:$0xf]
    %499 = vst [vmem:[#allocation4 + $0x48] sm:$0xf] %v498
    %s500 = scalar_lea.vmem [#allocation3], 60
    %v501 = vld [vmem:[%s500] ss:$2 sm:$0xf]
    %v503 = vrot.slane %v501, 4
    %505 = vst [vmem:[#allocation4 + $0x48] sm:$0xf0] %v503
    %s506 = scalar_lea.vmem [#allocation3], 100
    %v507 = vld [vmem:[%s506] ss:$2 sm:$0xf]
    %508 = vst [vmem:[#allocation4 + $0x90] sm:$0xf] %v507
    %s509 = scalar_lea.vmem [#allocation3], 120
    %v510 = vld [vmem:[%s509] ss:$2 sm:$0xf]
    %v512 = vrot.slane %v510, 4
    %514 = vst [vmem:[#allocation4 + $0x90] sm:$0xf0] %v512
    %s515 = scalar_lea.vmem [#allocation3], 140
    %v516 = vld [vmem:[%s515] ss:$2 sm:$0xf]
    %517 = vst [vmem:[#allocation4 + $0xd8] sm:$0xf] %v516
    %s518 = scalar_lea.vmem [#allocation3], 160
    %v519 = vld [vmem:[%s518] ss:$2 sm:$0xf]
    %v521 = vrot.slane %v519, 4
    %523 = vst [vmem:[#allocation4 + $0xd8] sm:$0xf0] %v521
    %s524 = scalar_lea.vmem [#allocation3], 1
    %v525 = vld [vmem:[%s524] ss:$2 sm:$0xf]
    %526 = vst [vmem:[#allocation4 + $0x8] sm:$0xf] %v525
    %s527 = scalar_lea.vmem [#allocation3], 21
    %v528 = vld [vmem:[%s527] ss:$2 sm:$0xf]
    %v530 = vrot.slane %v528, 4
    %532 = vst [vmem:[#allocation4 + $0x8] sm:$0xf0] %v530
    %s533 = scalar_lea.vmem [#allocation3], 41
    %v534 = vld [vmem:[%s533] ss:$2 sm:$0xf]
    %535 = vst [vmem:[#allocation4 + $0x50] sm:$0xf] %v534
    %s536 = scalar_lea.vmem [#allocation3], 61
    %v537 = vld [vmem:[%s536] ss:$2 sm:$0xf]
    %v539 = vrot.slane %v537, 4
    %541 = vst [vmem:[#allocation4 + $0x50] sm:$0xf0] %v539
    %s542 = scalar_lea.vmem [#allocation3], 101
    %v543 = vld [vmem:[%s542] ss:$2 sm:$0xf]
    %544 = vst [vmem:[#allocation4 + $0x98] sm:$0xf] %v543
    %s545 = scalar_lea.vmem [#allocation3], 121
    %v546 = vld [vmem:[%s545] ss:$2 sm:$0xf]
    %v548 = vrot.slane %v546, 4
    %550 = vst [vmem:[#allocation4 + $0x98] sm:$0xf0] %v548
    %s551 = scalar_lea.vmem [#allocation3], 141
    %v552 = vld [vmem:[%s551] ss:$2 sm:$0xf]
    %553 = vst [vmem:[#allocation4 + $0xe0] sm:$0xf] %v552
    %s554 = scalar_lea.vmem [#allocation3], 161
    %v555 = vld [vmem:[%s554] ss:$2 sm:$0xf]
    %v557 = vrot.slane %v555, 4
    %559 = vst [vmem:[#allocation4 + $0xe0] sm:$0xf0] %v557
    %s560 = scalar_lea.vmem [#allocation3], 2
    %v561 = vld [vmem:[%s560] ss:$2 sm:$0xf]
    %562 = vst [vmem:[#allocation4 + $0x10] sm:$0xf] %v561
    %s563 = scalar_lea.vmem [#allocation3], 22
    %v564 = vld [vmem:[%s563] ss:$2 sm:$0xf]
    %v566 = vrot.slane %v564, 4
    %568 = vst [vmem:[#allocation4 + $0x10] sm:$0xf0] %v566
    %s569 = scalar_lea.vmem [#allocation3], 42
    %v570 = vld [vmem:[%s569] ss:$2 sm:$0xf]
    %571 = vst [vmem:[#allocation4 + $0x58] sm:$0xf] %v570
    %s572 = scalar_lea.vmem [#allocation3], 62
    %v573 = vld [vmem:[%s572] ss:$2 sm:$0xf]
    %v575 = vrot.slane %v573, 4
    %577 = vst [vmem:[#allocation4 + $0x58] sm:$0xf0] %v575
    %s578 = scalar_lea.vmem [#allocation3], 102
    %v579 = vld [vmem:[%s578] ss:$2 sm:$0xf]
    %580 = vst [vmem:[#allocation4 + $0xa0] sm:$0xf] %v579
    %s581 = scalar_lea.vmem [#allocation3], 122
    %v582 = vld [vmem:[%s581] ss:$2 sm:$0xf]
    %v584 = vrot.slane %v582, 4
    %586 = vst [vmem:[#allocation4 + $0xa0] sm:$0xf0] %v584
    %s587 = scalar_lea.vmem [#allocation3], 142
    %v588 = vld [vmem:[%s587] ss:$2 sm:$0xf]
    %589 = vst [vmem:[#allocation4 + $0xe8] sm:$0xf] %v588
    %s590 = scalar_lea.vmem [#allocation3], 162
    %v591 = vld [vmem:[%s590] ss:$2 sm:$0xf]
    %v593 = vrot.slane %v591, 4
    %595 = vst [vmem:[#allocation4 + $0xe8] sm:$0xf0] %v593
    %s596 = scalar_lea.vmem [#allocation3], 10
    %v597 = vld [vmem:[%s596] ss:$2 sm:$0xf]
    %598 = vst [vmem:[#allocation4 + $0x18] sm:$0xf] %v597
    %s599 = scalar_lea.vmem [#allocation3], 30
    %v600 = vld [vmem:[%s599] ss:$2 sm:$0xf]
    %v602 = vrot.slane %v600, 4
    %604 = vst [vmem:[#allocation4 + $0x18] sm:$0xf0] %v602
    %s605 = scalar_lea.vmem [#allocation3], 50
    %v606 = vld [vmem:[%s605] ss:$2 sm:$0xf]
    %607 = vst [vmem:[#allocation4 + $0x60] sm:$0xf] %v606
    %s608 = scalar_lea.vmem [#allocation3], 70
    %v609 = vld [vmem:[%s608] ss:$2 sm:$0xf]
    %v611 = vrot.slane %v609, 4
    %613 = vst [vmem:[#allocation4 + $0x60] sm:$0xf0] %v611
    %s614 = scalar_lea.vmem [#allocation3], 110
    %v615 = vld [vmem:[%s614] ss:$2 sm:$0xf]
    %616 = vst [vmem:[#allocation4 + $0xa8] sm:$0xf] %v615
    %s617 = scalar_lea.vmem [#allocation3], 130
    %v618 = vld [vmem:[%s617] ss:$2 sm:$0xf]
    %v620 = vrot.slane %v618, 4
    %622 = vst [vmem:[#allocation4 + $0xa8] sm:$0xf0] %v620
    %s623 = scalar_lea.vmem [#allocation3], 150
    %v624 = vld [vmem:[%s623] ss:$2 sm:$0xf]
    %625 = vst [vmem:[#allocation4 + $0xf0] sm:$0xf] %v624
    %s626 = scalar_lea.vmem [#allocation3], 170
    %v627 = vld [vmem:[%s626] ss:$2 sm:$0xf]
    %v629 = vrot.slane %v627, 4
    %631 = vst [vmem:[#allocation4 + $0xf0] sm:$0xf0] %v629
    %s632 = scalar_lea.vmem [#allocation3], 11
    %v633 = vld [vmem:[%s632] ss:$2 sm:$0xf]
    %634 = vst [vmem:[#allocation4 + $0x20] sm:$0xf] %v633
    %s635 = scalar_lea.vmem [#allocation3], 31
    %v636 = vld [vmem:[%s635] ss:$2 sm:$0xf]
    %v638 = vrot.slane %v636, 4
    %640 = vst [vmem:[#allocation4 + $0x20] sm:$0xf0] %v638
    %s641 = scalar_lea.vmem [#allocation3], 51
    %v642 = vld [vmem:[%s641] ss:$2 sm:$0xf]
    %643 = vst [vmem:[#allocation4 + $0x68] sm:$0xf] %v642
    %s644 = scalar_lea.vmem [#allocation3], 71
    %v645 = vld [vmem:[%s644] ss:$2 sm:$0xf]
    %v647 = vrot.slane %v645, 4
    %649 = vst [vmem:[#allocation4 + $0x68] sm:$0xf0] %v647
    %s650 = scalar_lea.vmem [#allocation3], 111
    %v651 = vld [vmem:[%s650] ss:$2 sm:$0xf]
    %652 = vst [vmem:[#allocation4 + $0xb0] sm:$0xf] %v651
    %s653 = scalar_lea.vmem [#allocation3], 131
    %v654 = vld [vmem:[%s653] ss:$2 sm:$0xf]
    %v656 = vrot.slane %v654, 4
    %658 = vst [vmem:[#allocation4 + $0xb0] sm:$0xf0] %v656
    %s659 = scalar_lea.vmem [#allocation3], 151
    %v660 = vld [vmem:[%s659] ss:$2 sm:$0xf]
    %661 = vst [vmem:[#allocation4 + $0xf8] sm:$0xf] %v660
    %s662 = scalar_lea.vmem [#allocation3], 171
    %v663 = vld [vmem:[%s662] ss:$2 sm:$0xf]
    %v665 = vrot.slane %v663, 4
    %667 = vst [vmem:[#allocation4 + $0xf8] sm:$0xf0] %v665
    %s668 = scalar_lea.vmem [#allocation3], 12
    %v669 = vld [vmem:[%s668] ss:$2 sm:$0xf]
    %670 = vst [vmem:[#allocation4 + $0x28] sm:$0xf] %v669
    %s671 = scalar_lea.vmem [#allocation3], 32
    %v672 = vld [vmem:[%s671] ss:$2 sm:$0xf]
    %v674 = vrot.slane %v672, 4
    %676 = vst [vmem:[#allocation4 + $0x28] sm:$0xf0] %v674
    %s677 = scalar_lea.vmem [#allocation3], 52
    %v678 = vld [vmem:[%s677] ss:$2 sm:$0xf]
    %679 = vst [vmem:[#allocation4 + $0x70] sm:$0xf] %v678
    %s680 = scalar_lea.vmem [#allocation3], 72
    %v681 = vld [vmem:[%s680] ss:$2 sm:$0xf]
    %v683 = vrot.slane %v681, 4
    %685 = vst [vmem:[#allocation4 + $0x70] sm:$0xf0] %v683
    %s686 = scalar_lea.vmem [#allocation3], 112
    %v687 = vld [vmem:[%s686] ss:$2 sm:$0xf]
    %688 = vst [vmem:[#allocation4 + $0xb8] sm:$0xf] %v687
    %s689 = scalar_lea.vmem [#allocation3], 132
    %v690 = vld [vmem:[%s689] ss:$2 sm:$0xf]
    %v692 = vrot.slane %v690, 4
    %694 = vst [vmem:[#allocation4 + $0xb8] sm:$0xf0] %v692
    %s695 = scalar_lea.vmem [#allocation3], 152
    %v696 = vld [vmem:[%s695] ss:$2 sm:$0xf]
    %697 = vst [vmem:[#allocation4 + $0x100] sm:$0xf] %v696
    %s698 = scalar_lea.vmem [#allocation3], 172
    %v699 = vld [vmem:[%s698] ss:$2 sm:$0xf]
    %v701 = vrot.slane %v699, 4
    %703 = vst [vmem:[#allocation4 + $0x100] sm:$0xf0] %v701
    %v704 = vld [vmem:[%s491] ss:$2 sm:$0xf]
    %705 = vst [vmem:[#allocation4 + $0x30] sm:$0xf] %v704
    %v706 = vld [vmem:[%s497] ss:$2 sm:$0xf]
    %v708 = vrot.slane %v706, 4
    %710 = vst [vmem:[#allocation4 + $0x30] sm:$0xf0] %v708
    %v711 = vld [vmem:[%s500] ss:$2 sm:$0xf]
    %712 = vst [vmem:[#allocation4 + $0x78] sm:$0xf] %v711
    %s713 = scalar_lea.vmem [#allocation3], 80
    %v714 = vld [vmem:[%s713] ss:$2 sm:$0xf]
    %v716 = vrot.slane %v714, 4
    %718 = vst [vmem:[#allocation4 + $0x78] sm:$0xf0] %v716
    %v719 = vld [vmem:[%s509] ss:$2 sm:$0xf]
    %720 = vst [vmem:[#allocation4 + $0xc0] sm:$0xf] %v719
    %v721 = vld [vmem:[%s515] ss:$2 sm:$0xf]
    %v723 = vrot.slane %v721, 4
    %725 = vst [vmem:[#allocation4 + $0xc0] sm:$0xf0] %v723
    %v726 = vld [vmem:[%s518] ss:$2 sm:$0xf]
    %727 = vst [vmem:[#allocation4 + $0x108] sm:$0xf] %v726
    %s728 = scalar_lea.vmem [#allocation3], 180
    %v729 = vld [vmem:[%s728] ss:$2 sm:$0xf]
    %v731 = vrot.slane %v729, 4
    %733 = vst [vmem:[#allocation4 + $0x108] sm:$0xf0] %v731
    %v734 = vld [vmem:[%s527] ss:$2 sm:$0xf]
    %735 = vst [vmem:[#allocation4 + $0x38] sm:$0xf] %v734
    %v736 = vld [vmem:[%s533] ss:$2 sm:$0xf]
    %v738 = vrot.slane %v736, 4
    %740 = vst [vmem:[#allocation4 + $0x38] sm:$0xf0] %v738
    %v741 = vld [vmem:[%s536] ss:$2 sm:$0xf]
    %742 = vst [vmem:[#allocation4 + $0x80] sm:$0xf] %v741
    %s743 = scalar_lea.vmem [#allocation3], 81
    %v744 = vld [vmem:[%s743] ss:$2 sm:$0xf]
    %v746 = vrot.slane %v744, 4
    %748 = vst [vmem:[#allocation4 + $0x80] sm:$0xf0] %v746
    %v749 = vld [vmem:[%s545] ss:$2 sm:$0xf]
    %750 = vst [vmem:[#allocation4 + $0xc8] sm:$0xf] %v749
    %v751 = vld [vmem:[%s551] ss:$2 sm:$0xf]
    %v753 = vrot.slane %v751, 4
    %755 = vst [vmem:[#allocation4 + $0xc8] sm:$0xf0] %v753
    %v756 = vld [vmem:[%s554] ss:$2 sm:$0xf]
    %757 = vst [vmem:[#allocation4 + $0x110] sm:$0xf] %v756
    %s758 = scalar_lea.vmem [#allocation3], 181
    %v759 = vld [vmem:[%s758] ss:$2 sm:$0xf]
    %v761 = vrot.slane %v759, 4
    %763 = vst [vmem:[#allocation4 + $0x110] sm:$0xf0] %v761
    %v764 = vld [vmem:[%s563] ss:$2 sm:$0xf]
    %765 = vst [vmem:[#allocation4 + $0x40] sm:$0xf] %v764
    %v766 = vld [vmem:[%s569] ss:$2 sm:$0xf]
    %v768 = vrot.slane %v766, 4
    %770 = vst [vmem:[#allocation4 + $0x40] sm:$0xf0] %v768
    %v771 = vld [vmem:[%s572] ss:$2 sm:$0xf]
    %772 = vst [vmem:[#allocation4 + $0x88] sm:$0xf] %v771
    %s773 = scalar_lea.vmem [#allocation3], 82
    %v774 = vld [vmem:[%s773] ss:$2 sm:$0xf]
    %v776 = vrot.slane %v774, 4
    %778 = vst [vmem:[#allocation4 + $0x88] sm:$0xf0] %v776
    %v779 = vld [vmem:[%s581] ss:$2 sm:$0xf]
    %780 = vst [vmem:[#allocation4 + $0xd0] sm:$0xf] %v779
    %v781 = vld [vmem:[%s587] ss:$2 sm:$0xf]
    %v783 = vrot.slane %v781, 4
    %785 = vst [vmem:[#allocation4 + $0xd0] sm:$0xf0] %v783
    %v786 = vld [vmem:[%s590] ss:$2 sm:$0xf]
    %787 = vst [vmem:[#allocation4 + $0x118] sm:$0xf] %v786
    %s788 = scalar_lea.vmem [#allocation3], 182
    %v789 = vld [vmem:[%s788] ss:$2 sm:$0xf]
    %v791 = vrot.slane %v789, 4
    %793 = vst [vmem:[#allocation4 + $0x118] sm:$0xf0] %v791
    %v794 = vld [vmem:[#allocation4] sm:$0xff]
    %v795 = vld [vmem:[#allocation4 + $0x8] sm:$0xff]
    %v796 = vld [vmem:[#allocation4 + $0x10] sm:$0xff]
    %v797 = vld [vmem:[#allocation4 + $0x18] sm:$0xff]
    %v798 = vld [vmem:[#allocation4 + $0x20] sm:$0xff]
    %v799 = vld [vmem:[#allocation4 + $0x28] sm:$0xff]
    %v800 = vld [vmem:[#allocation4 + $0x30] sm:$0xff]
    %v801 = vld [vmem:[#allocation4 + $0x38] sm:$0xff]
    %v802 = vld [vmem:[#allocation4 + $0x40] sm:$0xff]
    %v803 = vld [vmem:[#allocation4 + $0x48] sm:$0xff]
    %v804 = vld [vmem:[#allocation4 + $0x50] sm:$0xff]
    %v805 = vld [vmem:[#allocation4 + $0x58] sm:$0xff]
    %v806 = vld [vmem:[#allocation4 + $0x60] sm:$0xff]
    %v807 = vld [vmem:[#allocation4 + $0x68] sm:$0xff]
    %v808 = vld [vmem:[#allocation4 + $0x70] sm:$0xff]
    %v809 = vld [vmem:[#allocation4 + $0x78] sm:$0xff]
    %v810 = vld [vmem:[#allocation4 + $0x80] sm:$0xff]
    %v811 = vld [vmem:[#allocation4 + $0x88] sm:$0xff]
    %v812 = vld [vmem:[#allocation4 + $0x90] sm:$0xff]
    %v813 = vld [vmem:[#allocation4 + $0x98] sm:$0xff]
    %v814 = vld [vmem:[#allocation4 + $0xa0] sm:$0xff]
    %v815 = vld [vmem:[#allocation4 + $0xa8] sm:$0xff]
    %v816 = vld [vmem:[#allocation4 + $0xb0] sm:$0xff]
    %v817 = vld [vmem:[#allocation4 + $0xb8] sm:$0xff]
    %v818 = vld [vmem:[#allocation4 + $0xc0] sm:$0xff]
    %v819 = vld [vmem:[#allocation4 + $0xc8] sm:$0xff]
    %v820 = vld [vmem:[#allocation4 + $0xd0] sm:$0xff]
    %v821 = vld [vmem:[#allocation4 + $0xd8] sm:$0xff]
    %v822 = vld [vmem:[#allocation4 + $0xe0] sm:$0xff]
    %v823 = vld [vmem:[#allocation4 + $0xe8] sm:$0xff]
    %v824 = vld [vmem:[#allocation4 + $0xf0] sm:$0xff]
    %v825 = vld [vmem:[#allocation4 + $0xf8] sm:$0xff]
    %v826 = vld [vmem:[#allocation4 + $0x100] sm:$0xff]
    %v827 = vld [vmem:[#allocation4 + $0x108] sm:$0xff]
    %v828 = vld [vmem:[#allocation4 + $0x110] sm:$0xff]
    %v829 = vld [vmem:[#allocation4 + $0x118] sm:$0xff]
    %v830 = vpack.c.bf16 %v803, %v794
    %v831 = vpack.c.bf16 %v804, %v795
    %v832 = vpack.c.bf16 %v805, %v796
    %v833 = vpack.c.bf16 %v806, %v797
    %v834 = vpack.c.bf16 %v807, %v798
    %v835 = vpack.c.bf16 %v808, %v799
    %v836 = vpack.c.bf16 %v809, %v800
    %v837 = vpack.c.bf16 %v810, %v801
    %v838 = vpack.c.bf16 %v811, %v802
    %v839 = vpack.c.bf16 %v821, %v812
    %v840 = vpack.c.bf16 %v822, %v813
    %v841 = vpack.c.bf16 %v823, %v814
    %v842 = vpack.c.bf16 %v824, %v815
    %v843 = vpack.c.bf16 %v825, %v816
    %v844 = vpack.c.bf16 %v826, %v817
    %v845 = vpack.c.bf16 %v827, %v818
    %v846 = vpack.c.bf16 %v828, %v819
    %v847 = vpack.c.bf16 %v829, %v820
    %v848 = vld [vmem:[#allocation9] sm:$0xf]
    %v849 = vld [vmem:[#allocation9 + $0x4] sm:$0xf]
    %v850 = vld [vmem:[#allocation9 + $0x8] sm:$0xf]
    %v851 = vld [vmem:[#allocation9 + $0xc] sm:$0xf]
    %v852 = vld [vmem:[#allocation9 + $0x10] sm:$0xf]
    %v853 = vld [vmem:[#allocation9 + $0x14] sm:$0xf]
    %v854 = vld [vmem:[#allocation9 + $0x18] sm:$0xf]
    %v855 = vld [vmem:[#allocation9 + $0x1c] sm:$0xf]
    %v856 = vld [vmem:[#allocation9 + $0x20] sm:$0xf]
    %v857 = vld [vmem:[#allocation9 + $0x24] sm:$0xf]
    %v858 = vld [vmem:[#allocation9 + $0x28] sm:$0xf]
    %v859 = vld [vmem:[#allocation9 + $0x2c] sm:$0xf]
    %v860 = vld [vmem:[#allocation9 + $0x30] sm:$0xf]
    %v861 = vld [vmem:[#allocation9 + $0x34] sm:$0xf]
    %v862 = vld [vmem:[#allocation9 + $0x38] sm:$0xf]
    %v863 = vld [vmem:[#allocation9 + $0x3c] sm:$0xf]
    %v864 = vld [vmem:[#allocation9 + $0x40] sm:$0xf]
    %v865 = vld [vmem:[#allocation9 + $0x44] sm:$0xf]
    %v866 = vld [vmem:[#allocation9 + $0x48] sm:$0xf]
    %v867 = vld [vmem:[#allocation9 + $0x4c] sm:$0xf]
    %v868 = vld [vmem:[#allocation9 + $0x50] sm:$0xf]
    %v869 = vld [vmem:[#allocation9 + $0x54] sm:$0xf]
    %v870 = vld [vmem:[#allocation9 + $0x58] sm:$0xf]
    %v871 = vld [vmem:[#allocation9 + $0x5c] sm:$0xf]
    %v872 = vld [vmem:[#allocation9 + $0x60] sm:$0xf]
    %v873 = vld [vmem:[#allocation9 + $0x64] sm:$0xf]
    %v874 = vld [vmem:[#allocation9 + $0x68] sm:$0xf]
    %v875 = vld [vmem:[#allocation9 + $0x6c] sm:$0xf]
    %v876 = vld [vmem:[#allocation9 + $0x70] sm:$0xf]
    %v877 = vld [vmem:[#allocation9 + $0x74] sm:$0xf]
    %v878 = vld [vmem:[#allocation9 + $0x78] sm:$0xf]
    %v879 = vld [vmem:[#allocation9 + $0x7c] sm:$0xf]
    %v880 = vld [vmem:[#allocation9 + $0x80] sm:$0xf]
    %v881 = vld [vmem:[#allocation9 + $0x84] sm:$0xf]
    %v882 = vld [vmem:[#allocation9 + $0x88] sm:$0xf]
    %v883 = vld [vmem:[#allocation9 + $0x8c] sm:$0xf]
    %v884 = vld [vmem:[#allocation9 + $0x90] sm:$0xf]
    %v885 = vld [vmem:[#allocation9 + $0x94] sm:$0xf]
    %v886 = vld [vmem:[#allocation9 + $0x98] sm:$0xf]
    %v887 = vld [vmem:[#allocation9 + $0x9c] sm:$0xf]
    %v888 = vld [vmem:[#allocation9 + $0xa0] sm:$0xf]
    %v889 = vld [vmem:[#allocation9 + $0xa4] sm:$0xf]
    %v890 = vld [vmem:[#allocation9 + $0xa8] sm:$0xf]
    %v891 = vld [vmem:[#allocation9 + $0xac] sm:$0xf]
    %v892 = vld [vmem:[#allocation9 + $0xb0] sm:$0xf]
    %v893 = vld [vmem:[#allocation9 + $0xb4] sm:$0xf]
    %v894 = vld [vmem:[#allocation9 + $0xb8] sm:$0xf]
    %v895 = vld [vmem:[#allocation9 + $0xbc] sm:$0xf]
    %v896 = vld [vmem:[#allocation9 + $0xc0] sm:$0xf]
    %v897 = vld [vmem:[#allocation9 + $0xc4] sm:$0xf]
    %v898 = vld [vmem:[#allocation9 + $0xc8] sm:$0xf]
    %v899 = vld [vmem:[#allocation9 + $0xcc] sm:$0xf]
    %v900 = vld [vmem:[#allocation9 + $0xd0] sm:$0xf]
    %v901 = vld [vmem:[#allocation9 + $0xd4] sm:$0xf]
    %v902 = vld [vmem:[#allocation9 + $0xd8] sm:$0xf]
    %v903 = vld [vmem:[#allocation9 + $0xdc] sm:$0xf]
    %v904 = vld [vmem:[#allocation9 + $0xe0] sm:$0xf]
    %v905 = vld [vmem:[#allocation9 + $0xe4] sm:$0xf]
    %v906 = vld [vmem:[#allocation9 + $0xe8] sm:$0xf]
    %v907 = vld [vmem:[#allocation9 + $0xec] sm:$0xf]
    %v908 = vld [vmem:[#allocation9 + $0xf0] sm:$0xf]
    %v909 = vld [vmem:[#allocation9 + $0xf4] sm:$0xf]
    %v910 = vld [vmem:[#allocation9 + $0xf8] sm:$0xf]
    %v911 = vld [vmem:[#allocation9 + $0xfc] sm:$0xf]
    %v912 = vld [vmem:[#allocation9 + $0x100] sm:$0xf]
    %v913 = vld [vmem:[#allocation9 + $0x104] sm:$0xf]
    %v914 = vld [vmem:[#allocation9 + $0x108] sm:$0xf]
    %v915 = vld [vmem:[#allocation9 + $0x10c] sm:$0xf]
    %v916 = vld [vmem:[#allocation9 + $0x110] sm:$0xf]
    %v917 = vld [vmem:[#allocation9 + $0x114] sm:$0xf]
    %v918 = vld [vmem:[#allocation9 + $0x118] sm:$0xf]
    %v919 = vld [vmem:[#allocation9 + $0x11c] sm:$0xf]
    %v920 = vld [vmem:[#allocation9 + $0x120] sm:$0xf]
    %v921 = vld [vmem:[#allocation9 + $0x124] sm:$0xf]
    %v922 = vld [vmem:[#allocation9 + $0x128] sm:$0xf]
    %v923 = vld [vmem:[#allocation9 + $0x12c] sm:$0xf]
    %v924 = vld [vmem:[#allocation9 + $0x130] sm:$0xf]
    %v925 = vld [vmem:[#allocation9 + $0x134] sm:$0xf]
    %v926 = vld [vmem:[#allocation9 + $0x138] sm:$0xf]
    %v927 = vld [vmem:[#allocation9 + $0x13c] sm:$0xf]
    %v928 = vld [vmem:[#allocation9 + $0x140] sm:$0xf]
    %v929 = vld [vmem:[#allocation9 + $0x144] sm:$0xf]
    %v930 = vld [vmem:[#allocation9 + $0x148] sm:$0xf]
    %v931 = vld [vmem:[#allocation9 + $0x14c] sm:$0xf]
    %v932 = vld [vmem:[#allocation9 + $0x150] sm:$0xf]
    %v933 = vld [vmem:[#allocation9 + $0x154] sm:$0xf]
    %v934 = vld [vmem:[#allocation9 + $0x158] sm:$0xf]
    %v935 = vld [vmem:[#allocation9 + $0x15c] sm:$0xf]
    %v936 = vld [vmem:[#allocation9 + $0x160] sm:$0xf]
    %v937 = vld [vmem:[#allocation9 + $0x164] sm:$0xf]
    %v938 = vld [vmem:[#allocation9 + $0x168] sm:$0xf]
    %v939 = vld [vmem:[#allocation9 + $0x16c] sm:$0xf]
    %v940 = vld [vmem:[#allocation9 + $0x170] sm:$0xf]
    %v941 = vld [vmem:[#allocation9 + $0x174] sm:$0xf]
    %v942 = vld [vmem:[#allocation9 + $0x178] sm:$0xf]
    %v943 = vld [vmem:[#allocation9 + $0x17c] sm:$0xf]
    %v944 = vld [vmem:[#allocation9 + $0x180] sm:$0xf]
    %v945 = vld [vmem:[#allocation9 + $0x184] sm:$0xf]
    %v946 = vld [vmem:[#allocation9 + $0x188] sm:$0xf]
    %v947 = vld [vmem:[#allocation9 + $0x18c] sm:$0xf]
    %v948 = vld [vmem:[#allocation9 + $0x190] sm:$0xf]
    %v949 = vld [vmem:[#allocation9 + $0x194] sm:$0xf]
    %v950 = vld [vmem:[#allocation9 + $0x198] sm:$0xf]
    %v951 = vld [vmem:[#allocation9 + $0x19c] sm:$0xf]
    %v952 = vld [vmem:[#allocation9 + $0x1a0] sm:$0xf]
    %v953 = vld [vmem:[#allocation9 + $0x1a4] sm:$0xf]
    %v954 = vld [vmem:[#allocation9 + $0x1a8] sm:$0xf]
    %v955 = vld [vmem:[#allocation9 + $0x1ac] sm:$0xf]
    %v956 = vld [vmem:[#allocation9 + $0x1b0] sm:$0xf]
    %v957 = vld [vmem:[#allocation9 + $0x1b4] sm:$0xf]
    %v958 = vld [vmem:[#allocation9 + $0x1b8] sm:$0xf]
    %v959 = vld [vmem:[#allocation9 + $0x1bc] sm:$0xf]
    %v960 = vld [vmem:[#allocation9 + $0x1c0] sm:$0xf]
    %v961 = vld [vmem:[#allocation9 + $0x1c4] sm:$0xf]
    %v962 = vld [vmem:[#allocation9 + $0x1c8] sm:$0xf]
    %v963 = vld [vmem:[#allocation9 + $0x1cc] sm:$0xf]
    %v964 = vld [vmem:[#allocation9 + $0x1d0] sm:$0xf]
    %v965 = vld [vmem:[#allocation9 + $0x1d4] sm:$0xf]
    %v966 = vld [vmem:[#allocation9 + $0x1d8] sm:$0xf]
    %v967 = vld [vmem:[#allocation9 + $0x1dc] sm:$0xf]
    %v968 = vld [vmem:[#allocation9 + $0x1e0] sm:$0xf]
    %v969 = vld [vmem:[#allocation9 + $0x1e4] sm:$0xf]
    %v970 = vld [vmem:[#allocation9 + $0x1e8] sm:$0xf]
    %v971 = vld [vmem:[#allocation9 + $0x1ec] sm:$0xf]
    %v972 = vld [vmem:[#allocation9 + $0x1f0] sm:$0xf]
    %v973 = vld [vmem:[#allocation9 + $0x1f4] sm:$0xf]
    %v974 = vld [vmem:[#allocation9 + $0x1f8] sm:$0xf]
    %v975 = vld [vmem:[#allocation9 + $0x1fc] sm:$0xf]
    %v976 = vld [vmem:[#allocation9 + $0x200] sm:$0xf]
    %v977 = vld [vmem:[#allocation9 + $0x204] sm:$0xf]
    %v978 = vld [vmem:[#allocation9 + $0x208] sm:$0xf]
    %v979 = vld [vmem:[#allocation9 + $0x20c] sm:$0xf]
    %v980 = vld [vmem:[#allocation9 + $0x210] sm:$0xf]
    %v981 = vld [vmem:[#allocation9 + $0x214] sm:$0xf]
    %v982 = vld [vmem:[#allocation9 + $0x218] sm:$0xf]
    %v983 = vld [vmem:[#allocation9 + $0x21c] sm:$0xf]
    %v984 = vld [vmem:[#allocation9 + $0x220] sm:$0xf]
    %v985 = vld [vmem:[#allocation9 + $0x224] sm:$0xf]
    %v986 = vld [vmem:[#allocation9 + $0x228] sm:$0xf]
    %v987 = vld [vmem:[#allocation9 + $0x22c] sm:$0xf]
    %v988 = vld [vmem:[#allocation9 + $0x230] sm:$0xf]
    %v989 = vld [vmem:[#allocation9 + $0x234] sm:$0xf]
    %v990 = vld [vmem:[#allocation9 + $0x238] sm:$0xf]
    %v991 = vld [vmem:[#allocation9 + $0x23c] sm:$0xf]
    %v992 = vld [vmem:[#allocation12] sm:$0x1]
    %v994 = vlaneseq
    %v995 = vshrl.u32 %v994, 7
    %v996 = vsub.s32 0, %v995
    %v997 = vrot.slane %v992, %v996
    %v1143 = vunpack.c.l.b16 %v848
    %v1144 = vunpack.c.l.b16 %v849
    %v1145 = vunpack.c.l.b16 %v850
    %v1146 = vunpack.c.l.b16 %v851
    %v1147 = vunpack.c.l.b16 %v852
    %v1148 = vunpack.c.l.b16 %v853
    %v1149 = vunpack.c.l.b16 %v854
    %v1150 = vunpack.c.l.b16 %v855
    %v1151 = vunpack.c.l.b16 %v856
    %v1152 = vunpack.c.l.b16 %v857
    %v1153 = vunpack.c.l.b16 %v858
    %v1154 = vunpack.c.l.b16 %v859
    %v1155 = vunpack.c.l.b16 %v860
    %v1156 = vunpack.c.l.b16 %v861
    %v1157 = vunpack.c.l.b16 %v862
    %v1158 = vunpack.c.l.b16 %v863
    %v1159 = vunpack.c.l.b16 %v864
    %v1160 = vunpack.c.l.b16 %v865
    %v1161 = vunpack.c.l.b16 %v866
    %v1162 = vunpack.c.l.b16 %v867
    %v1163 = vunpack.c.l.b16 %v868
    %v1164 = vunpack.c.l.b16 %v869
    %v1165 = vunpack.c.l.b16 %v870
    %v1166 = vunpack.c.l.b16 %v871
    %v1167 = vunpack.c.l.b16 %v872
    %v1168 = vunpack.c.l.b16 %v873
    %v1169 = vunpack.c.l.b16 %v874
    %v1170 = vunpack.c.l.b16 %v875
    %v1171 = vunpack.c.l.b16 %v876
    %v1172 = vunpack.c.l.b16 %v877
    %v1173 = vunpack.c.l.b16 %v878
    %v1174 = vunpack.c.l.b16 %v879
    %v1175 = vunpack.c.l.b16 %v880
    %v1176 = vunpack.c.l.b16 %v881
    %v1177 = vunpack.c.l.b16 %v882
    %v1178 = vunpack.c.l.b16 %v883
    %v1179 = vunpack.c.l.b16 %v884
    %v1180 = vunpack.c.l.b16 %v885
    %v1181 = vunpack.c.l.b16 %v886
    %v1182 = vunpack.c.l.b16 %v887
    %v1183 = vunpack.c.l.b16 %v888
    %v1184 = vunpack.c.l.b16 %v889
    %v1185 = vunpack.c.l.b16 %v890
    %v1186 = vunpack.c.l.b16 %v891
    %v1187 = vunpack.c.l.b16 %v892
    %v1188 = vunpack.c.l.b16 %v893
    %v1189 = vunpack.c.l.b16 %v894
    %v1190 = vunpack.c.l.b16 %v895
    %v1191 = vunpack.c.l.b16 %v896
    %v1192 = vunpack.c.l.b16 %v897
    %v1193 = vunpack.c.l.b16 %v898
    %v1194 = vunpack.c.l.b16 %v899
    %v1195 = vunpack.c.l.b16 %v900
    %v1196 = vunpack.c.l.b16 %v901
    %v1197 = vunpack.c.l.b16 %v902
    %v1198 = vunpack.c.l.b16 %v903
    %v1199 = vunpack.c.l.b16 %v904
    %v1200 = vunpack.c.l.b16 %v905
    %v1201 = vunpack.c.l.b16 %v906
    %v1202 = vunpack.c.l.b16 %v907
    %v1203 = vunpack.c.l.b16 %v908
    %v1204 = vunpack.c.l.b16 %v909
    %v1205 = vunpack.c.l.b16 %v910
    %v1206 = vunpack.c.l.b16 %v911
    %v1207 = vunpack.c.l.b16 %v912
    %v1208 = vunpack.c.l.b16 %v913
    %v1209 = vunpack.c.l.b16 %v914
    %v1210 = vunpack.c.l.b16 %v915
    %v1211 = vunpack.c.l.b16 %v916
    %v1212 = vunpack.c.l.b16 %v917
    %v1213 = vunpack.c.l.b16 %v918
    %v1214 = vunpack.c.l.b16 %v919
    %v1215 = vunpack.c.l.b16 %v920
    %v1216 = vunpack.c.l.b16 %v921
    %v1217 = vunpack.c.l.b16 %v922
    %v1218 = vunpack.c.l.b16 %v923
    %v1219 = vunpack.c.l.b16 %v924
    %v1220 = vunpack.c.l.b16 %v925
    %v1221 = vunpack.c.l.b16 %v926
    %v1222 = vunpack.c.l.b16 %v927
    %v1223 = vunpack.c.l.b16 %v928
    %v1224 = vunpack.c.l.b16 %v929
    %v1225 = vunpack.c.l.b16 %v930
    %v1226 = vunpack.c.l.b16 %v931
    %v1227 = vunpack.c.l.b16 %v932
    %v1228 = vunpack.c.l.b16 %v933
    %v1229 = vunpack.c.l.b16 %v934
    %v1230 = vunpack.c.l.b16 %v935
    %v1231 = vunpack.c.l.b16 %v936
    %v1232 = vunpack.c.l.b16 %v937
    %v1233 = vunpack.c.l.b16 %v938
    %v1234 = vunpack.c.l.b16 %v939
    %v1235 = vunpack.c.l.b16 %v940
    %v1236 = vunpack.c.l.b16 %v941
    %v1237 = vunpack.c.l.b16 %v942
    %v1238 = vunpack.c.l.b16 %v943
    %v1239 = vunpack.c.l.b16 %v944
    %v1240 = vunpack.c.l.b16 %v945
    %v1241 = vunpack.c.l.b16 %v946
    %v1242 = vunpack.c.l.b16 %v947
    %v1243 = vunpack.c.l.b16 %v948
    %v1244 = vunpack.c.l.b16 %v949
    %v1245 = vunpack.c.l.b16 %v950
    %v1246 = vunpack.c.l.b16 %v951
    %v1247 = vunpack.c.l.b16 %v952
    %v1248 = vunpack.c.l.b16 %v953
    %v1249 = vunpack.c.l.b16 %v954
    %v1250 = vunpack.c.l.b16 %v955
    %v1251 = vunpack.c.l.b16 %v956
    %v1252 = vunpack.c.l.b16 %v957
    %v1253 = vunpack.c.l.b16 %v958
    %v1254 = vunpack.c.l.b16 %v959
    %v1255 = vunpack.c.l.b16 %v960
    %v1256 = vunpack.c.l.b16 %v961
    %v1257 = vunpack.c.l.b16 %v962
    %v1258 = vunpack.c.l.b16 %v963
    %v1259 = vunpack.c.l.b16 %v964
    %v1260 = vunpack.c.l.b16 %v965
    %v1261 = vunpack.c.l.b16 %v966
    %v1262 = vunpack.c.l.b16 %v967
    %v1263 = vunpack.c.l.b16 %v968
    %v1264 = vunpack.c.l.b16 %v969
    %v1265 = vunpack.c.l.b16 %v970
    %v1266 = vunpack.c.l.b16 %v971
    %v1267 = vunpack.c.l.b16 %v972
    %v1268 = vunpack.c.l.b16 %v973
    %v1269 = vunpack.c.l.b16 %v974
    %v1270 = vunpack.c.l.b16 %v975
    %v1271 = vunpack.c.l.b16 %v976
    %v1272 = vunpack.c.l.b16 %v977
    %v1273 = vunpack.c.l.b16 %v978
    %v1274 = vunpack.c.l.b16 %v979
    %v1275 = vunpack.c.l.b16 %v980
    %v1276 = vunpack.c.l.b16 %v981
    %v1277 = vunpack.c.l.b16 %v982
    %v1278 = vunpack.c.l.b16 %v983
    %v1279 = vunpack.c.l.b16 %v984
    %v1280 = vunpack.c.l.b16 %v985
    %v1281 = vunpack.c.l.b16 %v986
    %v1282 = vunpack.c.l.b16 %v987
    %v1283 = vunpack.c.l.b16 %v988
    %v1284 = vunpack.c.l.b16 %v989
    %v1285 = vunpack.c.l.b16 %v990
    %v1286 = vunpack.c.l.b16 %v991
    %v1287 = vpack.c.b16 %v1144, %v1143
    %v1288 = vpack.c.b16 %v1146, %v1145
    %v1289 = vpack.c.b16 %v1148, %v1147
    %v1290 = vpack.c.b16 %v1150, %v1149
    %v1291 = vpack.c.b16 %v1152, %v1151
    %v1292 = vpack.c.b16 %v1154, %v1153
    %v1293 = vpack.c.b16 %v1156, %v1155
    %v1294 = vpack.c.b16 %v1158, %v1157
    %v1295 = vpack.c.b16 %v1160, %v1159
    %v1296 = vpack.c.b16 %v1162, %v1161
    %v1297 = vpack.c.b16 %v1164, %v1163
    %v1298 = vpack.c.b16 %v1166, %v1165
    %v1299 = vpack.c.b16 %v1168, %v1167
    %v1300 = vpack.c.b16 %v1170, %v1169
    %v1301 = vpack.c.b16 %v1172, %v1171
    %v1302 = vpack.c.b16 %v1174, %v1173
    %v1303 = vpack.c.b16 %v1176, %v1175
    %v1304 = vpack.c.b16 %v1178, %v1177
    %v1305 = vpack.c.b16 %v1180, %v1179
    %v1306 = vpack.c.b16 %v1182, %v1181
    %v1307 = vpack.c.b16 %v1184, %v1183
    %v1308 = vpack.c.b16 %v1186, %v1185
    %v1309 = vpack.c.b16 %v1188, %v1187
    %v1310 = vpack.c.b16 %v1190, %v1189
    %v1311 = vpack.c.b16 %v1192, %v1191
    %v1312 = vpack.c.b16 %v1194, %v1193
    %v1313 = vpack.c.b16 %v1196, %v1195
    %v1314 = vpack.c.b16 %v1198, %v1197
    %v1315 = vpack.c.b16 %v1200, %v1199
    %v1316 = vpack.c.b16 %v1202, %v1201
    %v1317 = vpack.c.b16 %v1204, %v1203
    %v1318 = vpack.c.b16 %v1206, %v1205
    %v1319 = vpack.c.b16 %v1208, %v1207
    %v1320 = vpack.c.b16 %v1210, %v1209
    %v1321 = vpack.c.b16 %v1212, %v1211
    %v1322 = vpack.c.b16 %v1214, %v1213
    %v1323 = vpack.c.b16 %v1216, %v1215
    %v1324 = vpack.c.b16 %v1218, %v1217
    %v1325 = vpack.c.b16 %v1220, %v1219
    %v1326 = vpack.c.b16 %v1222, %v1221
    %v1327 = vpack.c.b16 %v1224, %v1223
    %v1328 = vpack.c.b16 %v1226, %v1225
    %v1329 = vpack.c.b16 %v1228, %v1227
    %v1330 = vpack.c.b16 %v1230, %v1229
    %v1331 = vpack.c.b16 %v1232, %v1231
    %v1332 = vpack.c.b16 %v1234, %v1233
    %v1333 = vpack.c.b16 %v1236, %v1235
    %v1334 = vpack.c.b16 %v1238, %v1237
    %v1335 = vpack.c.b16 %v1240, %v1239
    %v1336 = vpack.c.b16 %v1242, %v1241
    %v1337 = vpack.c.b16 %v1244, %v1243
    %v1338 = vpack.c.b16 %v1246, %v1245
    %v1339 = vpack.c.b16 %v1248, %v1247
    %v1340 = vpack.c.b16 %v1250, %v1249
    %v1341 = vpack.c.b16 %v1252, %v1251
    %v1342 = vpack.c.b16 %v1254, %v1253
    %v1343 = vpack.c.b16 %v1256, %v1255
    %v1344 = vpack.c.b16 %v1258, %v1257
    %v1345 = vpack.c.b16 %v1260, %v1259
    %v1346 = vpack.c.b16 %v1262, %v1261
    %v1347 = vpack.c.b16 %v1264, %v1263
    %v1348 = vpack.c.b16 %v1266, %v1265
    %v1349 = vpack.c.b16 %v1268, %v1267
    %v1350 = vpack.c.b16 %v1270, %v1269
    %v1351 = vpack.c.b16 %v1272, %v1271
    %v1352 = vpack.c.b16 %v1274, %v1273
    %v1353 = vpack.c.b16 %v1276, %v1275
    %v1354 = vpack.c.b16 %v1278, %v1277
    %v1355 = vpack.c.b16 %v1280, %v1279
    %v1356 = vpack.c.b16 %v1282, %v1281
    %v1357 = vpack.c.b16 %v1284, %v1283
    %v1358 = vpack.c.b16 %v1286, %v1285
    %1431 = vmatprep.subr.bf16.mxu0 0
    %1432 = vmatpush1.bf16.msra.mxu0 %v1287
    %1433 = vmatprep.subr.bf16.mxu0 0
    %1434 = vmatpush1.bf16.msra.mxu0 %v1288
    %1435 = vmatprep.subr.bf16.mxu0 0
    %1436 = vmatpush1.bf16.msra.mxu0 %v1289
    %1437 = vmatprep.subr.bf16.mxu0 0
    %1438 = vmatpush1.bf16.msra.mxu0 %v1290
    %1439 = vmatprep.subr.bf16.mxu0 0
    %1440 = vmatpush1.bf16.msra.mxu0 %v1291
    %1441 = vmatprep.subr.bf16.mxu0 0
    %1442 = vmatpush1.bf16.msra.mxu0 %v1292
    %1443 = vmatprep.subr.bf16.mxu0 0
    %1444 = vmatpush1.bf16.msra.mxu0 %v1293
    %1445 = vmatprep.subr.bf16.mxu0 0
    %1446 = vmatpush1.bf16.msra.mxu0 %v1294
    %1447 = vmatprep.subr.bf16.mxu0 0
    %1448 = vmatpush1.bf16.msra.mxu0 %v1295
    %1449 = vmatprep.subr.bf16.mxu0 0
    %1450 = vmatpush1.bf16.msra.mxu0 %v1296
    %1451 = vmatprep.subr.bf16.mxu0 0
    %1452 = vmatpush1.bf16.msra.mxu0 %v1297
    %1453 = vmatprep.subr.bf16.mxu0 0
    %1454 = vmatpush1.bf16.msra.mxu0 %v1298
    %1455 = vmatprep.subr.bf16.mxu0 0
    %1456 = vmatpush1.bf16.msra.mxu0 %v1299
    %1457 = vmatprep.subr.bf16.mxu0 0
    %1458 = vmatpush1.bf16.msra.mxu0 %v1300
    %1459 = vmatprep.subr.bf16.mxu0 0
    %1460 = vmatpush1.bf16.msra.mxu0 %v1301
    %1461 = vmatprep.subr.bf16.mxu0 0
    %1462 = vmatpush1.bf16.msra.mxu0 %v1302
    %1463 = vmatprep.mubr.bf16.mxu0 %v831
    %1464 = vmatmul.mubr.bf16.gmra.mrb[0].mxu0 %v830
    %v1465 = vpop.f32.mrb[0].mxu0
    %v1466 = vadd.f32 %v997, %v1465
    %v1467 = vpop.f32.mrb[0].mxu0
    %v1468 = vpop.f32.mrb[0].mxu0
    %v1469 = vadd.f32 %v997, %v1468
    %v1470 = vpop.f32.mrb[0].mxu0
    %1471 = vmatprep.mubr.bf16.mxu0 %v840
    %1472 = vmatmul.mubr.bf16.gmra.mrb[0].mxu0 %v839
    %v1473 = vpop.f32.mrb[0].mxu0
    %v1474 = vadd.f32 %v997, %v1473
    %v1475 = vpop.f32.mrb[0].mxu0
    %v1476 = vpop.f32.mrb[0].mxu0
    %v1477 = vadd.f32 %v997, %v1476
    %v1478 = vpop.f32.mrb[0].mxu0
    %1479 = vdwg.mxu0
    %1480 = vmatprep.subr.bf16.mxu0 0
    %1481 = vmatpush1.bf16.msra.mxu0 %v1303
    %1482 = vmatprep.subr.bf16.mxu0 0
    %1483 = vmatpush1.bf16.msra.mxu0 %v1304
    %1484 = vmatprep.subr.bf16.mxu0 0
    %1485 = vmatpush1.bf16.msra.mxu0 %v1305
    %1486 = vmatprep.subr.bf16.mxu0 0
    %1487 = vmatpush1.bf16.msra.mxu0 %v1306
    %1488 = vmatprep.subr.bf16.mxu0 0
    %1489 = vmatpush1.bf16.msra.mxu0 %v1307
    %1490 = vmatprep.subr.bf16.mxu0 0
    %1491 = vmatpush1.bf16.msra.mxu0 %v1308
    %1492 = vmatprep.subr.bf16.mxu0 0
    %1493 = vmatpush1.bf16.msra.mxu0 %v1309
    %1494 = vmatprep.subr.bf16.mxu0 0
    %1495 = vmatpush1.bf16.msra.mxu0 %v1310
    %1496 = vmatprep.subr.bf16.mxu0 0
    %1497 = vmatpush1.bf16.msra.mxu0 %v1311
    %1498 = vmatprep.subr.bf16.mxu0 0
    %1499 = vmatpush1.bf16.msra.mxu0 %v1312
    %1500 = vmatprep.subr.bf16.mxu0 0
    %1501 = vmatpush1.bf16.msra.mxu0 %v1313
    %1502 = vmatprep.subr.bf16.mxu0 0
    %1503 = vmatpush1.bf16.msra.mxu0 %v1314
    %1504 = vmatprep.subr.bf16.mxu0 0
    %1505 = vmatpush1.bf16.msra.mxu0 %v1315
    %1506 = vmatprep.subr.bf16.mxu0 0
    %1507 = vmatpush1.bf16.msra.mxu0 %v1316
    %1508 = vmatprep.subr.bf16.mxu0 0
    %1509 = vmatpush1.bf16.msra.mxu0 %v1317
    %1510 = vmatprep.subr.bf16.mxu0 0
    %1511 = vmatpush1.bf16.msra.mxu0 %v1318
    %1512 = vmatprep.mubr.bf16.mxu0 %v833
    %1513 = vmatmul.mubr.bf16.gmra.mrb[0].mxu0 %v832
    %v1514 = vpop.f32.mrb[0].mxu0
    %v1515 = vadd.f32 %v1466, %v1514
    %v1516 = vpop.f32.mrb[0].mxu0
    %v1517 = vpop.f32.mrb[0].mxu0
    %v1518 = vadd.f32 %v1469, %v1517
    %v1519 = vpop.f32.mrb[0].mxu0
    %1520 = vmatprep.mubr.bf16.mxu0 %v842
    %1521 = vmatmul.mubr.bf16.gmra.mrb[0].mxu0 %v841
    %v1522 = vpop.f32.mrb[0].mxu0
    %v1523 = vadd.f32 %v1474, %v1522
    %v1524 = vpop.f32.mrb[0].mxu0
    %v1525 = vpop.f32.mrb[0].mxu0
    %v1526 = vadd.f32 %v1477, %v1525
    %v1527 = vpop.f32.mrb[0].mxu0
    %1528 = vdwg.mxu0
    %1529 = vmatprep.subr.bf16.mxu0 0
    %1530 = vmatpush1.bf16.msra.mxu0 %v1319
    %1531 = vmatprep.subr.bf16.mxu0 0
    %1532 = vmatpush1.bf16.msra.mxu0 %v1320
    %1533 = vmatprep.subr.bf16.mxu0 0
    %1534 = vmatpush1.bf16.msra.mxu0 %v1321
    %1535 = vmatprep.subr.bf16.mxu0 0
    %1536 = vmatpush1.bf16.msra.mxu0 %v1322
    %1537 = vmatprep.subr.bf16.mxu0 0
    %1538 = vmatpush1.bf16.msra.mxu0 %v1323
    %1539 = vmatprep.subr.bf16.mxu0 0
    %1540 = vmatpush1.bf16.msra.mxu0 %v1324
    %1541 = vmatprep.subr.bf16.mxu0 0
    %1542 = vmatpush1.bf16.msra.mxu0 %v1325
    %1543 = vmatprep.subr.bf16.mxu0 0
    %1544 = vmatpush1.bf16.msra.mxu0 %v1326
    %1545 = vmatprep.subr.bf16.mxu0 0
    %1546 = vmatpush1.bf16.msra.mxu0 %v1327
    %1547 = vmatprep.subr.bf16.mxu0 0
    %1548 = vmatpush1.bf16.msra.mxu0 %v1328
    %1549 = vmatprep.subr.bf16.mxu0 0
    %1550 = vmatpush1.bf16.msra.mxu0 %v1329
    %1551 = vmatprep.subr.bf16.mxu0 0
    %1552 = vmatpush1.bf16.msra.mxu0 %v1330
    %1553 = vmatprep.subr.bf16.mxu0 0
    %1554 = vmatpush1.bf16.msra.mxu0 %v1331
    %1555 = vmatprep.subr.bf16.mxu0 0
    %1556 = vmatpush1.bf16.msra.mxu0 %v1332
    %1557 = vmatprep.subr.bf16.mxu0 0
    %1558 = vmatpush1.bf16.msra.mxu0 %v1333
    %1559 = vmatprep.subr.bf16.mxu0 0
    %1560 = vmatpush1.bf16.msra.mxu0 %v1334
    %1561 = vmatprep.mubr.bf16.mxu0 %v835
    %1562 = vmatmul.mubr.bf16.gmra.mrb[0].mxu0 %v834
    %v1563 = vpop.f32.mrb[0].mxu0
    %v1564 = vadd.f32 %v1515, %v1563
    %v1565 = vpop.f32.mrb[0].mxu0
    %v1566 = vpop.f32.mrb[0].mxu0
    %v1567 = vadd.f32 %v1518, %v1566
    %v1568 = vpop.f32.mrb[0].mxu0
    %1569 = vmatprep.mubr.bf16.mxu0 %v844
    %1570 = vmatmul.mubr.bf16.gmra.mrb[0].mxu0 %v843
    %v1571 = vpop.f32.mrb[0].mxu0
    %v1572 = vadd.f32 %v1523, %v1571
    %v1573 = vpop.f32.mrb[0].mxu0
    %v1574 = vpop.f32.mrb[0].mxu0
    %v1575 = vadd.f32 %v1526, %v1574
    %v1576 = vpop.f32.mrb[0].mxu0
    %1577 = vdwg.mxu0
    %1578 = vmatprep.subr.bf16.mxu0 0
    %1579 = vmatpush1.bf16.msra.mxu0 %v1335
    %1580 = vmatprep.subr.bf16.mxu0 0
    %1581 = vmatpush1.bf16.msra.mxu0 %v1336
    %1582 = vmatprep.subr.bf16.mxu0 0
    %1583 = vmatpush1.bf16.msra.mxu0 %v1337
    %1584 = vmatprep.subr.bf16.mxu0 0
    %1585 = vmatpush1.bf16.msra.mxu0 %v1338
    %1586 = vmatprep.subr.bf16.mxu0 0
    %1587 = vmatpush1.bf16.msra.mxu0 %v1339
    %1588 = vmatprep.subr.bf16.mxu0 0
    %1589 = vmatpush1.bf16.msra.mxu0 %v1340
    %1590 = vmatprep.subr.bf16.mxu0 0
    %1591 = vmatpush1.bf16.msra.mxu0 %v1341
    %1592 = vmatprep.subr.bf16.mxu0 0
    %1593 = vmatpush1.bf16.msra.mxu0 %v1342
    %1594 = vmatprep.subr.bf16.mxu0 0
    %1595 = vmatpush1.bf16.msra.mxu0 %v1343
    %1596 = vmatprep.subr.bf16.mxu0 0
    %1597 = vmatpush1.bf16.msra.mxu0 %v1344
    %1598 = vmatprep.subr.bf16.mxu0 0
    %1599 = vmatpush1.bf16.msra.mxu0 %v1345
    %1600 = vmatprep.subr.bf16.mxu0 0
    %1601 = vmatpush1.bf16.msra.mxu0 %v1346
    %1602 = vmatprep.subr.bf16.mxu0 0
    %1603 = vmatpush1.bf16.msra.mxu0 %v1347
    %1604 = vmatprep.subr.bf16.mxu0 0
    %1605 = vmatpush1.bf16.msra.mxu0 %v1348
    %1606 = vmatprep.subr.bf16.mxu0 0
    %1607 = vmatpush1.bf16.msra.mxu0 %v1349
    %1608 = vmatprep.subr.bf16.mxu0 0
    %1609 = vmatpush1.bf16.msra.mxu0 %v1350
    %1610 = vmatprep.mubr.bf16.mxu0 %v837
    %1611 = vmatmul.mubr.bf16.gmra.mrb[0].mxu0 %v836
    %v1612 = vpop.f32.mrb[0].mxu0
    %v1613 = vadd.f32 %v1564, %v1612
    %v1614 = vpop.f32.mrb[0].mxu0
    %v1615 = vpop.f32.mrb[0].mxu0
    %v1616 = vadd.f32 %v1567, %v1615
    %v1617 = vpop.f32.mrb[0].mxu0
    %1618 = vmatprep.mubr.bf16.mxu0 %v846
    %1619 = vmatmul.mubr.bf16.gmra.mrb[0].mxu0 %v845
    %v1620 = vpop.f32.mrb[0].mxu0
    %v1621 = vadd.f32 %v1572, %v1620
    %v1622 = vpop.f32.mrb[0].mxu0
    %v1623 = vpop.f32.mrb[0].mxu0
    %v1624 = vadd.f32 %v1575, %v1623
    %v1625 = vpop.f32.mrb[0].mxu0
    %1626 = vdwg.mxu0
    %1627 = vmatprep.subr.bf16.mxu0 0
    %1628 = vmatpush1.bf16.msra.mxu0 %v1351
    %1629 = vmatprep.subr.bf16.mxu0 0
    %1630 = vmatpush1.bf16.msra.mxu0 %v1352
    %1631 = vmatprep.subr.bf16.mxu0 0
    %1632 = vmatpush1.bf16.msra.mxu0 %v1353
    %1633 = vmatprep.subr.bf16.mxu0 0
    %1634 = vmatpush1.bf16.msra.mxu0 %v1354
    %1635 = vmatprep.subr.bf16.mxu0 0
    %1636 = vmatpush1.bf16.msra.mxu0 %v1355
    %1637 = vmatprep.subr.bf16.mxu0 0
    %1638 = vmatpush1.bf16.msra.mxu0 %v1356
    %1639 = vmatprep.subr.bf16.mxu0 0
    %1640 = vmatpush1.bf16.msra.mxu0 %v1357
    %1641 = vmatprep.subr.bf16.mxu0 0
    %1642 = vmatpush1.bf16.msra.mxu0 %v1358
    %1643 = vmatprep.subr.bf16.mxu0 0
    %1644 = vmatpush1.bf16.msra.mxu0 0
    %1645 = vmatprep.subr.bf16.mxu0 0
    %1646 = vmatpush1.bf16.msra.mxu0 0
    %1647 = vmatprep.subr.bf16.mxu0 0
    %1648 = vmatpush1.bf16.msra.mxu0 0
    %1649 = vmatprep.subr.bf16.mxu0 0
    %1650 = vmatpush1.bf16.msra.mxu0 0
    %1651 = vmatprep.subr.bf16.mxu0 0
    %1652 = vmatpush1.bf16.msra.mxu0 0
    %1653 = vmatprep.subr.bf16.mxu0 0
    %1654 = vmatpush1.bf16.msra.mxu0 0
    %1655 = vmatprep.subr.bf16.mxu0 0
    %1656 = vmatpush1.bf16.msra.mxu0 0
    %1657 = vmatprep.subr.bf16.mxu0 0
    %1658 = vmatpush1.bf16.msra.mxu0 0
    %1659 = vmatprep.mubr.bf16.mxu0 0
    %1660 = vmatmul.mubr.bf16.gmra.mrb[0].mxu0 %v838
    %v1661 = vpop.f32.mrb[0].mxu0
    %v1662 = vadd.f32 %v1613, %v1661
    %v1663 = vpop.f32.mrb[0].mxu0
    %v1664 = vpop.f32.mrb[0].mxu0
    %v1665 = vadd.f32 %v1616, %v1664
    %v1666 = vpop.f32.mrb[0].mxu0
    %1667 = vmatprep.mubr.bf16.mxu0 0
    %1668 = vmatmul.mubr.bf16.gmra.mrb[0].mxu0 %v847
    %v1669 = vpop.f32.mrb[0].mxu0
    %v1670 = vadd.f32 %v1621, %v1669
    %v1671 = vpop.f32.mrb[0].mxu0
    %v1672 = vpop.f32.mrb[0].mxu0
    %v1673 = vadd.f32 %v1624, %v1672
    %v1674 = vpop.f32.mrb[0].mxu0
    %1675 = vdwg.mxu0
    %v1676 = vmul.f32 %v1662, 0.2
    %v1677 = vmul.f32 %v1665, 0.2
    %v1678 = vmul.f32 %v1670, 0.2
    %v1679 = vmul.f32 %v1673, 0.2
    %v1680 = vmax.f32 %v1662, %v1676
    %v1681 = vmax.f32 %v1665, %v1677
    %v1682 = vmax.f32 %v1670, %v1678
    %v1683 = vmax.f32 %v1673, %v1679
    %v1684 = vld [vmem:[#allocation14] sm:$0x1]
    %v1686 = vlaneseq
    %v1687 = vshrl.u32 %v1686, 7
    %v1688 = vsub.s32 0, %v1687
    %v1689 = vrot.slane %v1684, %v1688
    %v1691 = vadd.f32 %v1680, %v1689
    %v1692 = vadd.f32 %v1681, %v1689
    %v1693 = vadd.f32 %v1682, %v1689
    %v1694 = vadd.f32 %v1683, %v1689
    %1695 = vst [vmem:[#allocation5] sm:$0xff] 0.0
    %1696 = vst [vmem:[#allocation5 + $0x8] sm:$0xff] 0.0
    %1697 = vst [vmem:[#allocation5 + $0x10] sm:$0xff] 0.0
    %1698 = vst [vmem:[#allocation5 + $0x18] sm:$0xff] 0.0
    %1699 = vst [vmem:[#allocation5 + $0x20] sm:$0xff] 0.0
    %1700 = vst [vmem:[#allocation5 + $0x28] sm:$0xff] 0.0
    %1701 = vst [vmem:[#allocation5 + $0x30] sm:$0xff] 0.0
    %1702 = vst [vmem:[#allocation5 + $0x38] sm:$0xff] 0.0
    %1703 = vst [vmem:[#allocation5 + $0x40] sm:$0xff] 0.0
    %1704 = vst [vmem:[#allocation5 + $0x7] sm:$0xf] %v1691
    %1705 = vst [vmem:[#allocation5 + $0x9] sm:$0xf0] %v1691
    %1706 = vst [vmem:[#allocation5 + $0x13] sm:$0xf] %v1692
    %1707 = vst [vmem:[#allocation5 + $0x15] sm:$0xf0] %v1692
    %1708 = vst [vmem:[#allocation5 + $0x2b] sm:$0xf] %v1693
    %1709 = vst [vmem:[#allocation5 + $0x2d] sm:$0xf0] %v1693
    %1710 = vst [vmem:[#allocation5 + $0x37] sm:$0xf] %v1694
    %1711 = vst [vmem:[#allocation5 + $0x39] sm:$0xf0] %v1694
    %v1712 = vld [vmem:[#allocation5] ss:$2 sm:$0x3]
    %1713 = vst [vmem:[#allocation6] sm:$0x3] %v1712
    %s1714 = scalar_lea.vmem [#allocation5], 12
    %v1715 = vld [vmem:[%s1714] ss:$2 sm:$0x3]
    %v1717 = vrot.slane %v1715, 6
    %1719 = vst [vmem:[#allocation6] sm:$0xc] %v1717
    %s1720 = scalar_lea.vmem [#allocation5], 36
    %v1721 = vld [vmem:[%s1720] ss:$2 sm:$0x3]
    %v1723 = vrot.slane %v1721, 4
    %1725 = vst [vmem:[#allocation6] sm:$0x30] %v1723
    %s1726 = scalar_lea.vmem [#allocation5], 48
    %v1727 = vld [vmem:[%s1726] ss:$2 sm:$0x3]
    %v1729 = vrot.slane %v1727, 2
    %1731 = vst [vmem:[#allocation6] sm:$0xc0] %v1729
    %s1732 = scalar_lea.vmem [#allocation5], 1
    %v1733 = vld [vmem:[%s1732] ss:$2 sm:$0x3]
    %1734 = vst [vmem:[#allocation6 + $0x8] sm:$0x3] %v1733
    %s1735 = scalar_lea.vmem [#allocation5], 13
    %v1736 = vld [vmem:[%s1735] ss:$2 sm:$0x3]
    %v1738 = vrot.slane %v1736, 6
    %1740 = vst [vmem:[#allocation6 + $0x8] sm:$0xc] %v1738
    %s1741 = scalar_lea.vmem [#allocation5], 37
    %v1742 = vld [vmem:[%s1741] ss:$2 sm:$0x3]
    %v1744 = vrot.slane %v1742, 4
    %1746 = vst [vmem:[#allocation6 + $0x8] sm:$0x30] %v1744
    %s1747 = scalar_lea.vmem [#allocation5], 49
    %v1748 = vld [vmem:[%s1747] ss:$2 sm:$0x3]
    %v1750 = vrot.slane %v1748, 2
    %1752 = vst [vmem:[#allocation6 + $0x8] sm:$0xc0] %v1750
    %s1753 = scalar_lea.vmem [#allocation5], 2
    %v1754 = vld [vmem:[%s1753] ss:$2 sm:$0x3]
    %1755 = vst [vmem:[#allocation6 + $0x10] sm:$0x3] %v1754
    %s1756 = scalar_lea.vmem [#allocation5], 14
    %v1757 = vld [vmem:[%s1756] ss:$2 sm:$0x3]
    %v1759 = vrot.slane %v1757, 6
    %1761 = vst [vmem:[#allocation6 + $0x10] sm:$0xc] %v1759
    %s1762 = scalar_lea.vmem [#allocation5], 38
    %v1763 = vld [vmem:[%s1762] ss:$2 sm:$0x3]
    %v1765 = vrot.slane %v1763, 4
    %1767 = vst [vmem:[#allocation6 + $0x10] sm:$0x30] %v1765
    %s1768 = scalar_lea.vmem [#allocation5], 50
    %v1769 = vld [vmem:[%s1768] ss:$2 sm:$0x3]
    %v1771 = vrot.slane %v1769, 2
    %1773 = vst [vmem:[#allocation6 + $0x10] sm:$0xc0] %v1771
    %s1774 = scalar_lea.vmem [#allocation5], 6
    %v1775 = vld [vmem:[%s1774] ss:$2 sm:$0x3]
    %1776 = vst [vmem:[#allocation6 + $0x18] sm:$0x3] %v1775
    %s1777 = scalar_lea.vmem [#allocation5], 18
    %v1778 = vld [vmem:[%s1777] ss:$2 sm:$0x3]
    %v1780 = vrot.slane %v1778, 6
    %1782 = vst [vmem:[#allocation6 + $0x18] sm:$0xc] %v1780
    %s1783 = scalar_lea.vmem [#allocation5], 42
    %v1784 = vld [vmem:[%s1783] ss:$2 sm:$0x3]
    %v1786 = vrot.slane %v1784, 4
    %1788 = vst [vmem:[#allocation6 + $0x18] sm:$0x30] %v1786
    %s1789 = scalar_lea.vmem [#allocation5], 54
    %v1790 = vld [vmem:[%s1789] ss:$2 sm:$0x3]
    %v1792 = vrot.slane %v1790, 2
    %1794 = vst [vmem:[#allocation6 + $0x18] sm:$0xc0] %v1792
    %s1795 = scalar_lea.vmem [#allocation5], 7
    %v1796 = vld [vmem:[%s1795] ss:$2 sm:$0x3]
    %1797 = vst [vmem:[#allocation6 + $0x20] sm:$0x3] %v1796
    %s1798 = scalar_lea.vmem [#allocation5], 19
    %v1799 = vld [vmem:[%s1798] ss:$2 sm:$0x3]
    %v1801 = vrot.slane %v1799, 6
    %1803 = vst [vmem:[#allocation6 + $0x20] sm:$0xc] %v1801
    %s1804 = scalar_lea.vmem [#allocation5], 43
    %v1805 = vld [vmem:[%s1804] ss:$2 sm:$0x3]
    %v1807 = vrot.slane %v1805, 4
    %1809 = vst [vmem:[#allocation6 + $0x20] sm:$0x30] %v1807
    %s1810 = scalar_lea.vmem [#allocation5], 55
    %v1811 = vld [vmem:[%s1810] ss:$2 sm:$0x3]
    %v1813 = vrot.slane %v1811, 2
    %1815 = vst [vmem:[#allocation6 + $0x20] sm:$0xc0] %v1813
    %s1816 = scalar_lea.vmem [#allocation5], 8
    %v1817 = vld [vmem:[%s1816] ss:$2 sm:$0x3]
    %1818 = vst [vmem:[#allocation6 + $0x28] sm:$0x3] %v1817
    %s1819 = scalar_lea.vmem [#allocation5], 20
    %v1820 = vld [vmem:[%s1819] ss:$2 sm:$0x3]
    %v1822 = vrot.slane %v1820, 6
    %1824 = vst [vmem:[#allocation6 + $0x28] sm:$0xc] %v1822
    %s1825 = scalar_lea.vmem [#allocation5], 44
    %v1826 = vld [vmem:[%s1825] ss:$2 sm:$0x3]
    %v1828 = vrot.slane %v1826, 4
    %1830 = vst [vmem:[#allocation6 + $0x28] sm:$0x30] %v1828
    %s1831 = scalar_lea.vmem [#allocation5], 56
    %v1832 = vld [vmem:[%s1831] ss:$2 sm:$0x3]
    %v1834 = vrot.slane %v1832, 2
    %1836 = vst [vmem:[#allocation6 + $0x28] sm:$0xc0] %v1834
    %v1837 = vld [vmem:[%s1714] ss:$2 sm:$0x3]
    %1838 = vst [vmem:[#allocation6 + $0x30] sm:$0x3] %v1837
    %s1839 = scalar_lea.vmem [#allocation5], 24
    %v1840 = vld [vmem:[%s1839] ss:$2 sm:$0x3]
    %v1842 = vrot.slane %v1840, 6
    %1844 = vst [vmem:[#allocation6 + $0x30] sm:$0xc] %v1842
    %v1845 = vld [vmem:[%s1726] ss:$2 sm:$0x3]
    %v1847 = vrot.slane %v1845, 4
    %1849 = vst [vmem:[#allocation6 + $0x30] sm:$0x30] %v1847
    %s1850 = scalar_lea.vmem [#allocation5], 60
    %v1851 = vld [vmem:[%s1850] ss:$2 sm:$0x3]
    %v1853 = vrot.slane %v1851, 2
    %1855 = vst [vmem:[#allocation6 + $0x30] sm:$0xc0] %v1853
    %v1856 = vld [vmem:[%s1735] ss:$2 sm:$0x3]
    %1857 = vst [vmem:[#allocation6 + $0x38] sm:$0x3] %v1856
    %s1858 = scalar_lea.vmem [#allocation5], 25
    %v1859 = vld [vmem:[%s1858] ss:$2 sm:$0x3]
    %v1861 = vrot.slane %v1859, 6
    %1863 = vst [vmem:[#allocation6 + $0x38] sm:$0xc] %v1861
    %v1864 = vld [vmem:[%s1747] ss:$2 sm:$0x3]
    %v1866 = vrot.slane %v1864, 4
    %1868 = vst [vmem:[#allocation6 + $0x38] sm:$0x30] %v1866
    %s1869 = scalar_lea.vmem [#allocation5], 61
    %v1870 = vld [vmem:[%s1869] ss:$2 sm:$0x3]
    %v1872 = vrot.slane %v1870, 2
    %1874 = vst [vmem:[#allocation6 + $0x38] sm:$0xc0] %v1872
    %v1875 = vld [vmem:[%s1756] ss:$2 sm:$0x3]
    %1876 = vst [vmem:[#allocation6 + $0x40] sm:$0x3] %v1875
    %s1877 = scalar_lea.vmem [#allocation5], 26
    %v1878 = vld [vmem:[%s1877] ss:$2 sm:$0x3]
    %v1880 = vrot.slane %v1878, 6
    %1882 = vst [vmem:[#allocation6 + $0x40] sm:$0xc] %v1880
    %v1883 = vld [vmem:[%s1768] ss:$2 sm:$0x3]
    %v1885 = vrot.slane %v1883, 4
    %1887 = vst [vmem:[#allocation6 + $0x40] sm:$0x30] %v1885
    %s1888 = scalar_lea.vmem [#allocation5], 62
    %v1889 = vld [vmem:[%s1888] ss:$2 sm:$0x3]
    %v1891 = vrot.slane %v1889, 2
    %1893 = vst [vmem:[#allocation6 + $0x40] sm:$0xc0] %v1891
    %v1894 = vld [vmem:[#allocation6] sm:$0xff]
    %v1895 = vld [vmem:[#allocation6 + $0x8] sm:$0xff]
    %v1896 = vld [vmem:[#allocation6 + $0x10] sm:$0xff]
    %v1897 = vld [vmem:[#allocation6 + $0x18] sm:$0xff]
    %v1898 = vld [vmem:[#allocation6 + $0x20] sm:$0xff]
    %v1899 = vld [vmem:[#allocation6 + $0x28] sm:$0xff]
    %v1900 = vld [vmem:[#allocation6 + $0x30] sm:$0xff]
    %v1901 = vld [vmem:[#allocation6 + $0x38] sm:$0xff]
    %v1902 = vld [vmem:[#allocation6 + $0x40] sm:$0xff]
    %v1903 = vpack.c.bf16 %v1894, %v1894
    %v1904 = vpack.c.bf16 %v1895, %v1895
    %v1905 = vpack.c.bf16 %v1896, %v1896
    %v1906 = vpack.c.bf16 %v1897, %v1897
    %v1907 = vpack.c.bf16 %v1898, %v1898
    %v1908 = vpack.c.bf16 %v1899, %v1899
    %v1909 = vpack.c.bf16 %v1900, %v1900
    %v1910 = vpack.c.bf16 %v1901, %v1901
    %v1911 = vpack.c.bf16 %v1902, %v1902
    %v1912 = vld [vmem:[#allocation15] sm:$0xf]
    %v1913 = vld [vmem:[#allocation15 + $0x4] sm:$0xf]
    %v1914 = vld [vmem:[#allocation15 + $0x8] sm:$0xf]
    %v1915 = vld [vmem:[#allocation15 + $0xc] sm:$0xf]
    %v1916 = vld [vmem:[#allocation15 + $0x10] sm:$0xf]
    %v1917 = vld [vmem:[#allocation15 + $0x14] sm:$0xf]
    %v1918 = vld [vmem:[#allocation15 + $0x18] sm:$0xf]
    %v1919 = vld [vmem:[#allocation15 + $0x1c] sm:$0xf]
    %v1920 = vld [vmem:[#allocation15 + $0x20] sm:$0xf]
    %v1921 = vld [vmem:[#allocation15 + $0x24] sm:$0xf]
    %v1922 = vld [vmem:[#allocation15 + $0x28] sm:$0xf]
    %v1923 = vld [vmem:[#allocation15 + $0x2c] sm:$0xf]
    %v1924 = vld [vmem:[#allocation15 + $0x30] sm:$0xf]
    %v1925 = vld [vmem:[#allocation15 + $0x34] sm:$0xf]
    %v1926 = vld [vmem:[#allocation15 + $0x38] sm:$0xf]
    %v1927 = vld [vmem:[#allocation15 + $0x3c] sm:$0xf]
    %v1928 = vld [vmem:[#allocation15 + $0x40] sm:$0xf]
    %v1929 = vld [vmem:[#allocation15 + $0x44] sm:$0xf]
    %v1930 = vld [vmem:[#allocation15 + $0x48] sm:$0xf]
    %v1931 = vld [vmem:[#allocation15 + $0x4c] sm:$0xf]
    %v1932 = vld [vmem:[#allocation15 + $0x50] sm:$0xf]
    %v1933 = vld [vmem:[#allocation15 + $0x54] sm:$0xf]
    %v1934 = vld [vmem:[#allocation15 + $0x58] sm:$0xf]
    %v1935 = vld [vmem:[#allocation15 + $0x5c] sm:$0xf]
    %v1936 = vld [vmem:[#allocation15 + $0x60] sm:$0xf]
    %v1937 = vld [vmem:[#allocation15 + $0x64] sm:$0xf]
    %v1938 = vld [vmem:[#allocation15 + $0x68] sm:$0xf]
    %v1939 = vld [vmem:[#allocation15 + $0x6c] sm:$0xf]
    %v1940 = vld [vmem:[#allocation15 + $0x70] sm:$0xf]
    %v1941 = vld [vmem:[#allocation15 + $0x74] sm:$0xf]
    %v1942 = vld [vmem:[#allocation15 + $0x78] sm:$0xf]
    %v1943 = vld [vmem:[#allocation15 + $0x7c] sm:$0xf]
    %v1944 = vld [vmem:[#allocation15 + $0x80] sm:$0xf]
    %v1945 = vld [vmem:[#allocation15 + $0x84] sm:$0xf]
    %v1946 = vld [vmem:[#allocation15 + $0x88] sm:$0xf]
    %v1947 = vld [vmem:[#allocation15 + $0x8c] sm:$0xf]
    %v1948 = vld [vmem:[#allocation15 + $0x90] sm:$0xf]
    %v1949 = vld [vmem:[#allocation15 + $0x94] sm:$0xf]
    %v1950 = vld [vmem:[#allocation15 + $0x98] sm:$0xf]
    %v1951 = vld [vmem:[#allocation15 + $0x9c] sm:$0xf]
    %v1952 = vld [vmem:[#allocation15 + $0xa0] sm:$0xf]
    %v1953 = vld [vmem:[#allocation15 + $0xa4] sm:$0xf]
    %v1954 = vld [vmem:[#allocation15 + $0xa8] sm:$0xf]
    %v1955 = vld [vmem:[#allocation15 + $0xac] sm:$0xf]
    %v1956 = vld [vmem:[#allocation15 + $0xb0] sm:$0xf]
    %v1957 = vld [vmem:[#allocation15 + $0xb4] sm:$0xf]
    %v1958 = vld [vmem:[#allocation15 + $0xb8] sm:$0xf]
    %v1959 = vld [vmem:[#allocation15 + $0xbc] sm:$0xf]
    %v1960 = vld [vmem:[#allocation15 + $0xc0] sm:$0xf]
    %v1961 = vld [vmem:[#allocation15 + $0xc4] sm:$0xf]
    %v1962 = vld [vmem:[#allocation15 + $0xc8] sm:$0xf]
    %v1963 = vld [vmem:[#allocation15 + $0xcc] sm:$0xf]
    %v1964 = vld [vmem:[#allocation15 + $0xd0] sm:$0xf]
    %v1965 = vld [vmem:[#allocation15 + $0xd4] sm:$0xf]
    %v1966 = vld [vmem:[#allocation15 + $0xd8] sm:$0xf]
    %v1967 = vld [vmem:[#allocation15 + $0xdc] sm:$0xf]
    %v1968 = vld [vmem:[#allocation15 + $0xe0] sm:$0xf]
    %v1969 = vld [vmem:[#allocation15 + $0xe4] sm:$0xf]
    %v1970 = vld [vmem:[#allocation15 + $0xe8] sm:$0xf]
    %v1971 = vld [vmem:[#allocation15 + $0xec] sm:$0xf]
    %v1972 = vld [vmem:[#allocation15 + $0xf0] sm:$0xf]
    %v1973 = vld [vmem:[#allocation15 + $0xf4] sm:$0xf]
    %v1974 = vld [vmem:[#allocation15 + $0xf8] sm:$0xf]
    %v1975 = vld [vmem:[#allocation15 + $0xfc] sm:$0xf]
    %v1976 = vld [vmem:[#allocation15 + $0x100] sm:$0xf]
    %v1977 = vld [vmem:[#allocation15 + $0x104] sm:$0xf]
    %v1978 = vld [vmem:[#allocation15 + $0x108] sm:$0xf]
    %v1979 = vld [vmem:[#allocation15 + $0x10c] sm:$0xf]
    %v1980 = vld [vmem:[#allocation15 + $0x110] sm:$0xf]
    %v1981 = vld [vmem:[#allocation15 + $0x114] sm:$0xf]
    %v1982 = vld [vmem:[#allocation15 + $0x118] sm:$0xf]
    %v1983 = vld [vmem:[#allocation15 + $0x11c] sm:$0xf]
    %v1984 = vld [vmem:[#allocation15 + $0x120] sm:$0xf]
    %v1985 = vld [vmem:[#allocation15 + $0x124] sm:$0xf]
    %v1986 = vld [vmem:[#allocation15 + $0x128] sm:$0xf]
    %v1987 = vld [vmem:[#allocation15 + $0x12c] sm:$0xf]
    %v1988 = vld [vmem:[#allocation15 + $0x130] sm:$0xf]
    %v1989 = vld [vmem:[#allocation15 + $0x134] sm:$0xf]
    %v1990 = vld [vmem:[#allocation15 + $0x138] sm:$0xf]
    %v1991 = vld [vmem:[#allocation15 + $0x13c] sm:$0xf]
    %v1992 = vld [vmem:[#allocation15 + $0x140] sm:$0xf]
    %v1993 = vld [vmem:[#allocation15 + $0x144] sm:$0xf]
    %v1994 = vld [vmem:[#allocation15 + $0x148] sm:$0xf]
    %v1995 = vld [vmem:[#allocation15 + $0x14c] sm:$0xf]
    %v1996 = vld [vmem:[#allocation15 + $0x150] sm:$0xf]
    %v1997 = vld [vmem:[#allocation15 + $0x154] sm:$0xf]
    %v1998 = vld [vmem:[#allocation15 + $0x158] sm:$0xf]
    %v1999 = vld [vmem:[#allocation15 + $0x15c] sm:$0xf]
    %v2000 = vld [vmem:[#allocation15 + $0x160] sm:$0xf]
    %v2001 = vld [vmem:[#allocation15 + $0x164] sm:$0xf]
    %v2002 = vld [vmem:[#allocation15 + $0x168] sm:$0xf]
    %v2003 = vld [vmem:[#allocation15 + $0x16c] sm:$0xf]
    %v2004 = vld [vmem:[#allocation15 + $0x170] sm:$0xf]
    %v2005 = vld [vmem:[#allocation15 + $0x174] sm:$0xf]
    %v2006 = vld [vmem:[#allocation15 + $0x178] sm:$0xf]
    %v2007 = vld [vmem:[#allocation15 + $0x17c] sm:$0xf]
    %v2008 = vld [vmem:[#allocation15 + $0x180] sm:$0xf]
    %v2009 = vld [vmem:[#allocation15 + $0x184] sm:$0xf]
    %v2010 = vld [vmem:[#allocation15 + $0x188] sm:$0xf]
    %v2011 = vld [vmem:[#allocation15 + $0x18c] sm:$0xf]
    %v2012 = vld [vmem:[#allocation15 + $0x190] sm:$0xf]
    %v2013 = vld [vmem:[#allocation15 + $0x194] sm:$0xf]
    %v2014 = vld [vmem:[#allocation15 + $0x198] sm:$0xf]
    %v2015 = vld [vmem:[#allocation15 + $0x19c] sm:$0xf]
    %v2016 = vld [vmem:[#allocation15 + $0x1a0] sm:$0xf]
    %v2017 = vld [vmem:[#allocation15 + $0x1a4] sm:$0xf]
    %v2018 = vld [vmem:[#allocation15 + $0x1a8] sm:$0xf]
    %v2019 = vld [vmem:[#allocation15 + $0x1ac] sm:$0xf]
    %v2020 = vld [vmem:[#allocation15 + $0x1b0] sm:$0xf]
    %v2021 = vld [vmem:[#allocation15 + $0x1b4] sm:$0xf]
    %v2022 = vld [vmem:[#allocation15 + $0x1b8] sm:$0xf]
    %v2023 = vld [vmem:[#allocation15 + $0x1bc] sm:$0xf]
    %v2024 = vld [vmem:[#allocation15 + $0x1c0] sm:$0xf]
    %v2025 = vld [vmem:[#allocation15 + $0x1c4] sm:$0xf]
    %v2026 = vld [vmem:[#allocation15 + $0x1c8] sm:$0xf]
    %v2027 = vld [vmem:[#allocation15 + $0x1cc] sm:$0xf]
    %v2028 = vld [vmem:[#allocation15 + $0x1d0] sm:$0xf]
    %v2029 = vld [vmem:[#allocation15 + $0x1d4] sm:$0xf]
    %v2030 = vld [vmem:[#allocation15 + $0x1d8] sm:$0xf]
    %v2031 = vld [vmem:[#allocation15 + $0x1dc] sm:$0xf]
    %v2032 = vld [vmem:[#allocation15 + $0x1e0] sm:$0xf]
    %v2033 = vld [vmem:[#allocation15 + $0x1e4] sm:$0xf]
    %v2034 = vld [vmem:[#allocation15 + $0x1e8] sm:$0xf]
    %v2035 = vld [vmem:[#allocation15 + $0x1ec] sm:$0xf]
    %v2036 = vld [vmem:[#allocation15 + $0x1f0] sm:$0xf]
    %v2037 = vld [vmem:[#allocation15 + $0x1f4] sm:$0xf]
    %v2038 = vld [vmem:[#allocation15 + $0x1f8] sm:$0xf]
    %v2039 = vld [vmem:[#allocation15 + $0x1fc] sm:$0xf]
    %v2040 = vld [vmem:[#allocation15 + $0x200] sm:$0xf]
    %v2041 = vld [vmem:[#allocation15 + $0x204] sm:$0xf]
    %v2042 = vld [vmem:[#allocation15 + $0x208] sm:$0xf]
    %v2043 = vld [vmem:[#allocation15 + $0x20c] sm:$0xf]
    %v2044 = vld [vmem:[#allocation15 + $0x210] sm:$0xf]
    %v2045 = vld [vmem:[#allocation15 + $0x214] sm:$0xf]
    %v2046 = vld [vmem:[#allocation15 + $0x218] sm:$0xf]
    %v2047 = vld [vmem:[#allocation15 + $0x21c] sm:$0xf]
    %v2048 = vld [vmem:[#allocation15 + $0x220] sm:$0xf]
    %v2049 = vld [vmem:[#allocation15 + $0x224] sm:$0xf]
    %v2050 = vld [vmem:[#allocation15 + $0x228] sm:$0xf]
    %v2051 = vld [vmem:[#allocation15 + $0x22c] sm:$0xf]
    %v2052 = vld [vmem:[#allocation15 + $0x230] sm:$0xf]
    %v2053 = vld [vmem:[#allocation15 + $0x234] sm:$0xf]
    %v2054 = vld [vmem:[#allocation15 + $0x238] sm:$0xf]
    %v2055 = vld [vmem:[#allocation15 + $0x23c] sm:$0xf]
    %v2056 = vld [vmem:[#allocation17] sm:$0x1]
    %v2058 = vlaneseq
    %v2059 = vshrl.u32 %v2058, 7
    %v2060 = vsub.s32 0, %v2059
    %v2061 = vrot.slane %v2056, %v2060
    %v2207 = vunpack.c.l.b16 %v1912
    %v2208 = vunpack.c.l.b16 %v1913
    %v2209 = vunpack.c.l.b16 %v1914
    %v2210 = vunpack.c.l.b16 %v1915
    %v2211 = vunpack.c.l.b16 %v1916
    %v2212 = vunpack.c.l.b16 %v1917
    %v2213 = vunpack.c.l.b16 %v1918
    %v2214 = vunpack.c.l.b16 %v1919
    %v2215 = vunpack.c.l.b16 %v1920
    %v2216 = vunpack.c.l.b16 %v1921
    %v2217 = vunpack.c.l.b16 %v1922
    %v2218 = vunpack.c.l.b16 %v1923
    %v2219 = vunpack.c.l.b16 %v1924
    %v2220 = vunpack.c.l.b16 %v1925
    %v2221 = vunpack.c.l.b16 %v1926
    %v2222 = vunpack.c.l.b16 %v1927
    %v2223 = vunpack.c.l.b16 %v1928
    %v2224 = vunpack.c.l.b16 %v1929
    %v2225 = vunpack.c.l.b16 %v1930
    %v2226 = vunpack.c.l.b16 %v1931
    %v2227 = vunpack.c.l.b16 %v1932
    %v2228 = vunpack.c.l.b16 %v1933
    %v2229 = vunpack.c.l.b16 %v1934
    %v2230 = vunpack.c.l.b16 %v1935
    %v2231 = vunpack.c.l.b16 %v1936
    %v2232 = vunpack.c.l.b16 %v1937
    %v2233 = vunpack.c.l.b16 %v1938
    %v2234 = vunpack.c.l.b16 %v1939
    %v2235 = vunpack.c.l.b16 %v1940
    %v2236 = vunpack.c.l.b16 %v1941
    %v2237 = vunpack.c.l.b16 %v1942
    %v2238 = vunpack.c.l.b16 %v1943
    %v2239 = vunpack.c.l.b16 %v1944
    %v2240 = vunpack.c.l.b16 %v1945
    %v2241 = vunpack.c.l.b16 %v1946
    %v2242 = vunpack.c.l.b16 %v1947
    %v2243 = vunpack.c.l.b16 %v1948
    %v2244 = vunpack.c.l.b16 %v1949
    %v2245 = vunpack.c.l.b16 %v1950
    %v2246 = vunpack.c.l.b16 %v1951
    %v2247 = vunpack.c.l.b16 %v1952
    %v2248 = vunpack.c.l.b16 %v1953
    %v2249 = vunpack.c.l.b16 %v1954
    %v2250 = vunpack.c.l.b16 %v1955
    %v2251 = vunpack.c.l.b16 %v1956
    %v2252 = vunpack.c.l.b16 %v1957
    %v2253 = vunpack.c.l.b16 %v1958
    %v2254 = vunpack.c.l.b16 %v1959
    %v2255 = vunpack.c.l.b16 %v1960
    %v2256 = vunpack.c.l.b16 %v1961
    %v2257 = vunpack.c.l.b16 %v1962
    %v2258 = vunpack.c.l.b16 %v1963
    %v2259 = vunpack.c.l.b16 %v1964
    %v2260 = vunpack.c.l.b16 %v1965
    %v2261 = vunpack.c.l.b16 %v1966
    %v2262 = vunpack.c.l.b16 %v1967
    %v2263 = vunpack.c.l.b16 %v1968
    %v2264 = vunpack.c.l.b16 %v1969
    %v2265 = vunpack.c.l.b16 %v1970
    %v2266 = vunpack.c.l.b16 %v1971
    %v2267 = vunpack.c.l.b16 %v1972
    %v2268 = vunpack.c.l.b16 %v1973
    %v2269 = vunpack.c.l.b16 %v1974
    %v2270 = vunpack.c.l.b16 %v1975
    %v2271 = vunpack.c.l.b16 %v1976
    %v2272 = vunpack.c.l.b16 %v1977
    %v2273 = vunpack.c.l.b16 %v1978
    %v2274 = vunpack.c.l.b16 %v1979
    %v2275 = vunpack.c.l.b16 %v1980
    %v2276 = vunpack.c.l.b16 %v1981
    %v2277 = vunpack.c.l.b16 %v1982
    %v2278 = vunpack.c.l.b16 %v1983
    %v2279 = vunpack.c.l.b16 %v1984
    %v2280 = vunpack.c.l.b16 %v1985
    %v2281 = vunpack.c.l.b16 %v1986
    %v2282 = vunpack.c.l.b16 %v1987
    %v2283 = vunpack.c.l.b16 %v1988
    %v2284 = vunpack.c.l.b16 %v1989
    %v2285 = vunpack.c.l.b16 %v1990
    %v2286 = vunpack.c.l.b16 %v1991
    %v2287 = vunpack.c.l.b16 %v1992
    %v2288 = vunpack.c.l.b16 %v1993
    %v2289 = vunpack.c.l.b16 %v1994
    %v2290 = vunpack.c.l.b16 %v1995
    %v2291 = vunpack.c.l.b16 %v1996
    %v2292 = vunpack.c.l.b16 %v1997
    %v2293 = vunpack.c.l.b16 %v1998
    %v2294 = vunpack.c.l.b16 %v1999
    %v2295 = vunpack.c.l.b16 %v2000
    %v2296 = vunpack.c.l.b16 %v2001
    %v2297 = vunpack.c.l.b16 %v2002
    %v2298 = vunpack.c.l.b16 %v2003
    %v2299 = vunpack.c.l.b16 %v2004
    %v2300 = vunpack.c.l.b16 %v2005
    %v2301 = vunpack.c.l.b16 %v2006
    %v2302 = vunpack.c.l.b16 %v2007
    %v2303 = vunpack.c.l.b16 %v2008
    %v2304 = vunpack.c.l.b16 %v2009
    %v2305 = vunpack.c.l.b16 %v2010
    %v2306 = vunpack.c.l.b16 %v2011
    %v2307 = vunpack.c.l.b16 %v2012
    %v2308 = vunpack.c.l.b16 %v2013
    %v2309 = vunpack.c.l.b16 %v2014
    %v2310 = vunpack.c.l.b16 %v2015
    %v2311 = vunpack.c.l.b16 %v2016
    %v2312 = vunpack.c.l.b16 %v2017
    %v2313 = vunpack.c.l.b16 %v2018
    %v2314 = vunpack.c.l.b16 %v2019
    %v2315 = vunpack.c.l.b16 %v2020
    %v2316 = vunpack.c.l.b16 %v2021
    %v2317 = vunpack.c.l.b16 %v2022
    %v2318 = vunpack.c.l.b16 %v2023
    %v2319 = vunpack.c.l.b16 %v2024
    %v2320 = vunpack.c.l.b16 %v2025
    %v2321 = vunpack.c.l.b16 %v2026
    %v2322 = vunpack.c.l.b16 %v2027
    %v2323 = vunpack.c.l.b16 %v2028
    %v2324 = vunpack.c.l.b16 %v2029
    %v2325 = vunpack.c.l.b16 %v2030
    %v2326 = vunpack.c.l.b16 %v2031
    %v2327 = vunpack.c.l.b16 %v2032
    %v2328 = vunpack.c.l.b16 %v2033
    %v2329 = vunpack.c.l.b16 %v2034
    %v2330 = vunpack.c.l.b16 %v2035
    %v2331 = vunpack.c.l.b16 %v2036
    %v2332 = vunpack.c.l.b16 %v2037
    %v2333 = vunpack.c.l.b16 %v2038
    %v2334 = vunpack.c.l.b16 %v2039
    %v2335 = vunpack.c.l.b16 %v2040
    %v2336 = vunpack.c.l.b16 %v2041
    %v2337 = vunpack.c.l.b16 %v2042
    %v2338 = vunpack.c.l.b16 %v2043
    %v2339 = vunpack.c.l.b16 %v2044
    %v2340 = vunpack.c.l.b16 %v2045
    %v2341 = vunpack.c.l.b16 %v2046
    %v2342 = vunpack.c.l.b16 %v2047
    %v2343 = vunpack.c.l.b16 %v2048
    %v2344 = vunpack.c.l.b16 %v2049
    %v2345 = vunpack.c.l.b16 %v2050
    %v2346 = vunpack.c.l.b16 %v2051
    %v2347 = vunpack.c.l.b16 %v2052
    %v2348 = vunpack.c.l.b16 %v2053
    %v2349 = vunpack.c.l.b16 %v2054
    %v2350 = vunpack.c.l.b16 %v2055
    %v2351 = vpack.c.b16 %v2208, %v2207
    %v2352 = vpack.c.b16 %v2210, %v2209
    %v2353 = vpack.c.b16 %v2212, %v2211
    %v2354 = vpack.c.b16 %v2214, %v2213
    %v2355 = vpack.c.b16 %v2216, %v2215
    %v2356 = vpack.c.b16 %v2218, %v2217
    %v2357 = vpack.c.b16 %v2220, %v2219
    %v2358 = vpack.c.b16 %v2222, %v2221
    %v2359 = vpack.c.b16 %v2224, %v2223
    %v2360 = vpack.c.b16 %v2226, %v2225
    %v2361 = vpack.c.b16 %v2228, %v2227
    %v2362 = vpack.c.b16 %v2230, %v2229
    %v2363 = vpack.c.b16 %v2232, %v2231
    %v2364 = vpack.c.b16 %v2234, %v2233
    %v2365 = vpack.c.b16 %v2236, %v2235
    %v2366 = vpack.c.b16 %v2238, %v2237
    %v2367 = vpack.c.b16 %v2240, %v2239
    %v2368 = vpack.c.b16 %v2242, %v2241
    %v2369 = vpack.c.b16 %v2244, %v2243
    %v2370 = vpack.c.b16 %v2246, %v2245
    %v2371 = vpack.c.b16 %v2248, %v2247
    %v2372 = vpack.c.b16 %v2250, %v2249
    %v2373 = vpack.c.b16 %v2252, %v2251
    %v2374 = vpack.c.b16 %v2254, %v2253
    %v2375 = vpack.c.b16 %v2256, %v2255
    %v2376 = vpack.c.b16 %v2258, %v2257
    %v2377 = vpack.c.b16 %v2260, %v2259
    %v2378 = vpack.c.b16 %v2262, %v2261
    %v2379 = vpack.c.b16 %v2264, %v2263
    %v2380 = vpack.c.b16 %v2266, %v2265
    %v2381 = vpack.c.b16 %v2268, %v2267
    %v2382 = vpack.c.b16 %v2270, %v2269
    %v2383 = vpack.c.b16 %v2272, %v2271
    %v2384 = vpack.c.b16 %v2274, %v2273
    %v2385 = vpack.c.b16 %v2276, %v2275
    %v2386 = vpack.c.b16 %v2278, %v2277
    %v2387 = vpack.c.b16 %v2280, %v2279
    %v2388 = vpack.c.b16 %v2282, %v2281
    %v2389 = vpack.c.b16 %v2284, %v2283
    %v2390 = vpack.c.b16 %v2286, %v2285
    %v2391 = vpack.c.b16 %v2288, %v2287
    %v2392 = vpack.c.b16 %v2290, %v2289
    %v2393 = vpack.c.b16 %v2292, %v2291
    %v2394 = vpack.c.b16 %v2294, %v2293
    %v2395 = vpack.c.b16 %v2296, %v2295
    %v2396 = vpack.c.b16 %v2298, %v2297
    %v2397 = vpack.c.b16 %v2300, %v2299
    %v2398 = vpack.c.b16 %v2302, %v2301
    %v2399 = vpack.c.b16 %v2304, %v2303
    %v2400 = vpack.c.b16 %v2306, %v2305
    %v2401 = vpack.c.b16 %v2308, %v2307
    %v2402 = vpack.c.b16 %v2310, %v2309
    %v2403 = vpack.c.b16 %v2312, %v2311
    %v2404 = vpack.c.b16 %v2314, %v2313
    %v2405 = vpack.c.b16 %v2316, %v2315
    %v2406 = vpack.c.b16 %v2318, %v2317
    %v2407 = vpack.c.b16 %v2320, %v2319
    %v2408 = vpack.c.b16 %v2322, %v2321
    %v2409 = vpack.c.b16 %v2324, %v2323
    %v2410 = vpack.c.b16 %v2326, %v2325
    %v2411 = vpack.c.b16 %v2328, %v2327
    %v2412 = vpack.c.b16 %v2330, %v2329
    %v2413 = vpack.c.b16 %v2332, %v2331
    %v2414 = vpack.c.b16 %v2334, %v2333
    %v2415 = vpack.c.b16 %v2336, %v2335
    %v2416 = vpack.c.b16 %v2338, %v2337
    %v2417 = vpack.c.b16 %v2340, %v2339
    %v2418 = vpack.c.b16 %v2342, %v2341
    %v2419 = vpack.c.b16 %v2344, %v2343
    %v2420 = vpack.c.b16 %v2346, %v2345
    %v2421 = vpack.c.b16 %v2348, %v2347
    %v2422 = vpack.c.b16 %v2350, %v2349
    %2495 = vmatprep.subr.bf16.mxu0 0
    %2496 = vmatpush1.bf16.msra.mxu0 %v2351
    %2497 = vmatprep.subr.bf16.mxu0 0
    %2498 = vmatpush1.bf16.msra.mxu0 %v2352
    %2499 = vmatprep.subr.bf16.mxu0 0
    %2500 = vmatpush1.bf16.msra.mxu0 %v2353
    %2501 = vmatprep.subr.bf16.mxu0 0
    %2502 = vmatpush1.bf16.msra.mxu0 %v2354
    %2503 = vmatprep.subr.bf16.mxu0 0
    %2504 = vmatpush1.bf16.msra.mxu0 %v2355
    %2505 = vmatprep.subr.bf16.mxu0 0
    %2506 = vmatpush1.bf16.msra.mxu0 %v2356
    %2507 = vmatprep.subr.bf16.mxu0 0
    %2508 = vmatpush1.bf16.msra.mxu0 %v2357
    %2509 = vmatprep.subr.bf16.mxu0 0
    %2510 = vmatpush1.bf16.msra.mxu0 %v2358
    %2511 = vmatprep.subr.bf16.mxu0 0
    %2512 = vmatpush1.bf16.msra.mxu0 %v2359
    %2513 = vmatprep.subr.bf16.mxu0 0
    %2514 = vmatpush1.bf16.msra.mxu0 %v2360
    %2515 = vmatprep.subr.bf16.mxu0 0
    %2516 = vmatpush1.bf16.msra.mxu0 %v2361
    %2517 = vmatprep.subr.bf16.mxu0 0
    %2518 = vmatpush1.bf16.msra.mxu0 %v2362
    %2519 = vmatprep.subr.bf16.mxu0 0
    %2520 = vmatpush1.bf16.msra.mxu0 %v2363
    %2521 = vmatprep.subr.bf16.mxu0 0
    %2522 = vmatpush1.bf16.msra.mxu0 %v2364
    %2523 = vmatprep.subr.bf16.mxu0 0
    %2524 = vmatpush1.bf16.msra.mxu0 %v2365
    %2525 = vmatprep.subr.bf16.mxu0 0
    %2526 = vmatpush1.bf16.msra.mxu0 %v2366
    %2527 = vmatprep.mubr.bf16.mxu0 %v1904
    %2528 = vmatmul.mubr.bf16.gmra.mrb[0].mxu0 %v1903
    %v2529 = vpop.f32.mrb[0].mxu0
    %v2530 = vadd.f32 %v2061, %v2529
    %v2531 = vpop.f32.mrb[0].mxu0
    %v2532 = vpop.f32.mrb[0].mxu0
    %v2533 = vpop.f32.mrb[0].mxu0
    %2534 = vdwg.mxu0
    %2535 = vmatprep.subr.bf16.mxu0 0
    %2536 = vmatpush1.bf16.msra.mxu0 %v2367
    %2537 = vmatprep.subr.bf16.mxu0 0
    %2538 = vmatpush1.bf16.msra.mxu0 %v2368
    %2539 = vmatprep.subr.bf16.mxu0 0
    %2540 = vmatpush1.bf16.msra.mxu0 %v2369
    %2541 = vmatprep.subr.bf16.mxu0 0
    %2542 = vmatpush1.bf16.msra.mxu0 %v2370
    %2543 = vmatprep.subr.bf16.mxu0 0
    %2544 = vmatpush1.bf16.msra.mxu0 %v2371
    %2545 = vmatprep.subr.bf16.mxu0 0
    %2546 = vmatpush1.bf16.msra.mxu0 %v2372
    %2547 = vmatprep.subr.bf16.mxu0 0
    %2548 = vmatpush1.bf16.msra.mxu0 %v2373
    %2549 = vmatprep.subr.bf16.mxu0 0
    %2550 = vmatpush1.bf16.msra.mxu0 %v2374
    %2551 = vmatprep.subr.bf16.mxu0 0
    %2552 = vmatpush1.bf16.msra.mxu0 %v2375
    %2553 = vmatprep.subr.bf16.mxu0 0
    %2554 = vmatpush1.bf16.msra.mxu0 %v2376
    %2555 = vmatprep.subr.bf16.mxu0 0
    %2556 = vmatpush1.bf16.msra.mxu0 %v2377
    %2557 = vmatprep.subr.bf16.mxu0 0
    %2558 = vmatpush1.bf16.msra.mxu0 %v2378
    %2559 = vmatprep.subr.bf16.mxu0 0
    %2560 = vmatpush1.bf16.msra.mxu0 %v2379
    %2561 = vmatprep.subr.bf16.mxu0 0
    %2562 = vmatpush1.bf16.msra.mxu0 %v2380
    %2563 = vmatprep.subr.bf16.mxu0 0
    %2564 = vmatpush1.bf16.msra.mxu0 %v2381
    %2565 = vmatprep.subr.bf16.mxu0 0
    %2566 = vmatpush1.bf16.msra.mxu0 %v2382
    %2567 = vmatprep.mubr.bf16.mxu0 %v1906
    %2568 = vmatmul.mubr.bf16.gmra.mrb[0].mxu0 %v1905
    %v2569 = vpop.f32.mrb[0].mxu0
    %v2570 = vadd.f32 %v2530, %v2569
    %v2571 = vpop.f32.mrb[0].mxu0
    %v2572 = vpop.f32.mrb[0].mxu0
    %v2573 = vpop.f32.mrb[0].mxu0
    %2574 = vdwg.mxu0
    %2575 = vmatprep.subr.bf16.mxu0 0
    %2576 = vmatpush1.bf16.msra.mxu0 %v2383
    %2577 = vmatprep.subr.bf16.mxu0 0
    %2578 = vmatpush1.bf16.msra.mxu0 %v2384
    %2579 = vmatprep.subr.bf16.mxu0 0
    %2580 = vmatpush1.bf16.msra.mxu0 %v2385
    %2581 = vmatprep.subr.bf16.mxu0 0
    %2582 = vmatpush1.bf16.msra.mxu0 %v2386
    %2583 = vmatprep.subr.bf16.mxu0 0
    %2584 = vmatpush1.bf16.msra.mxu0 %v2387
    %2585 = vmatprep.subr.bf16.mxu0 0
    %2586 = vmatpush1.bf16.msra.mxu0 %v2388
    %2587 = vmatprep.subr.bf16.mxu0 0
    %2588 = vmatpush1.bf16.msra.mxu0 %v2389
    %2589 = vmatprep.subr.bf16.mxu0 0
    %2590 = vmatpush1.bf16.msra.mxu0 %v2390
    %2591 = vmatprep.subr.bf16.mxu0 0
    %2592 = vmatpush1.bf16.msra.mxu0 %v2391
    %2593 = vmatprep.subr.bf16.mxu0 0
    %2594 = vmatpush1.bf16.msra.mxu0 %v2392
    %2595 = vmatprep.subr.bf16.mxu0 0
    %2596 = vmatpush1.bf16.msra.mxu0 %v2393
    %2597 = vmatprep.subr.bf16.mxu0 0
    %2598 = vmatpush1.bf16.msra.mxu0 %v2394
    %2599 = vmatprep.subr.bf16.mxu0 0
    %2600 = vmatpush1.bf16.msra.mxu0 %v2395
    %2601 = vmatprep.subr.bf16.mxu0 0
    %2602 = vmatpush1.bf16.msra.mxu0 %v2396
    %2603 = vmatprep.subr.bf16.mxu0 0
    %2604 = vmatpush1.bf16.msra.mxu0 %v2397
    %2605 = vmatprep.subr.bf16.mxu0 0
    %2606 = vmatpush1.bf16.msra.mxu0 %v2398
    %2607 = vmatprep.mubr.bf16.mxu0 %v1908
    %2608 = vmatmul.mubr.bf16.gmra.mrb[0].mxu0 %v1907
    %v2609 = vpop.f32.mrb[0].mxu0
    %v2610 = vadd.f32 %v2570, %v2609
    %v2611 = vpop.f32.mrb[0].mxu0
    %v2612 = vpop.f32.mrb[0].mxu0
    %v2613 = vpop.f32.mrb[0].mxu0
    %2614 = vdwg.mxu0
    %2615 = vmatprep.subr.bf16.mxu0 0
    %2616 = vmatpush1.bf16.msra.mxu0 %v2399
    %2617 = vmatprep.subr.bf16.mxu0 0
    %2618 = vmatpush1.bf16.msra.mxu0 %v2400
    %2619 = vmatprep.subr.bf16.mxu0 0
    %2620 = vmatpush1.bf16.msra.mxu0 %v2401
    %2621 = vmatprep.subr.bf16.mxu0 0
    %2622 = vmatpush1.bf16.msra.mxu0 %v2402
    %2623 = vmatprep.subr.bf16.mxu0 0
    %2624 = vmatpush1.bf16.msra.mxu0 %v2403
    %2625 = vmatprep.subr.bf16.mxu0 0
    %2626 = vmatpush1.bf16.msra.mxu0 %v2404
    %2627 = vmatprep.subr.bf16.mxu0 0
    %2628 = vmatpush1.bf16.msra.mxu0 %v2405
    %2629 = vmatprep.subr.bf16.mxu0 0
    %2630 = vmatpush1.bf16.msra.mxu0 %v2406
    %2631 = vmatprep.subr.bf16.mxu0 0
    %2632 = vmatpush1.bf16.msra.mxu0 %v2407
    %2633 = vmatprep.subr.bf16.mxu0 0
    %2634 = vmatpush1.bf16.msra.mxu0 %v2408
    %2635 = vmatprep.subr.bf16.mxu0 0
    %2636 = vmatpush1.bf16.msra.mxu0 %v2409
    %2637 = vmatprep.subr.bf16.mxu0 0
    %2638 = vmatpush1.bf16.msra.mxu0 %v2410
    %2639 = vmatprep.subr.bf16.mxu0 0
    %2640 = vmatpush1.bf16.msra.mxu0 %v2411
    %2641 = vmatprep.subr.bf16.mxu0 0
    %2642 = vmatpush1.bf16.msra.mxu0 %v2412
    %2643 = vmatprep.subr.bf16.mxu0 0
    %2644 = vmatpush1.bf16.msra.mxu0 %v2413
    %2645 = vmatprep.subr.bf16.mxu0 0
    %2646 = vmatpush1.bf16.msra.mxu0 %v2414
    %2647 = vmatprep.mubr.bf16.mxu0 %v1910
    %2648 = vmatmul.mubr.bf16.gmra.mrb[0].mxu0 %v1909
    %v2649 = vpop.f32.mrb[0].mxu0
    %v2650 = vadd.f32 %v2610, %v2649
    %v2651 = vpop.f32.mrb[0].mxu0
    %v2652 = vpop.f32.mrb[0].mxu0
    %v2653 = vpop.f32.mrb[0].mxu0
    %2654 = vdwg.mxu0
    %2655 = vmatprep.subr.bf16.mxu0 0
    %2656 = vmatpush1.bf16.msra.mxu0 %v2415
    %2657 = vmatprep.subr.bf16.mxu0 0
    %2658 = vmatpush1.bf16.msra.mxu0 %v2416
    %2659 = vmatprep.subr.bf16.mxu0 0
    %2660 = vmatpush1.bf16.msra.mxu0 %v2417
    %2661 = vmatprep.subr.bf16.mxu0 0
    %2662 = vmatpush1.bf16.msra.mxu0 %v2418
    %2663 = vmatprep.subr.bf16.mxu0 0
    %2664 = vmatpush1.bf16.msra.mxu0 %v2419
    %2665 = vmatprep.subr.bf16.mxu0 0
    %2666 = vmatpush1.bf16.msra.mxu0 %v2420
    %2667 = vmatprep.subr.bf16.mxu0 0
    %2668 = vmatpush1.bf16.msra.mxu0 %v2421
    %2669 = vmatprep.subr.bf16.mxu0 0
    %2670 = vmatpush1.bf16.msra.mxu0 %v2422
    %2671 = vmatprep.subr.bf16.mxu0 0
    %2672 = vmatpush1.bf16.msra.mxu0 0
    %2673 = vmatprep.subr.bf16.mxu0 0
    %2674 = vmatpush1.bf16.msra.mxu0 0
    %2675 = vmatprep.subr.bf16.mxu0 0
    %2676 = vmatpush1.bf16.msra.mxu0 0
    %2677 = vmatprep.subr.bf16.mxu0 0
    %2678 = vmatpush1.bf16.msra.mxu0 0
    %2679 = vmatprep.subr.bf16.mxu0 0
    %2680 = vmatpush1.bf16.msra.mxu0 0
    %2681 = vmatprep.subr.bf16.mxu0 0
    %2682 = vmatpush1.bf16.msra.mxu0 0
    %2683 = vmatprep.subr.bf16.mxu0 0
    %2684 = vmatpush1.bf16.msra.mxu0 0
    %2685 = vmatprep.subr.bf16.mxu0 0
    %2686 = vmatpush1.bf16.msra.mxu0 0
    %2687 = vmatprep.mubr.bf16.mxu0 0
    %2688 = vmatmul.mubr.bf16.gmra.mrb[0].mxu0 %v1911
    %v2689 = vpop.f32.mrb[0].mxu0
    %v2690 = vadd.f32 %v2650, %v2689
    %v2691 = vpop.f32.mrb[0].mxu0
    %v2692 = vpop.f32.mrb[0].mxu0
    %v2693 = vpop.f32.mrb[0].mxu0
    %2694 = vdwg.mxu0
    %v2695 = vmul.f32 %v2690, 0.2
    %v2696 = vmax.f32 %v2690, %v2695
    %v2697 = vld [vmem:[#allocation18] sm:$0x1]
    %v2699 = vlaneseq
    %v2700 = vshrl.u32 %v2699, 7
    %v2701 = vsub.s32 0, %v2700
    %v2702 = vrot.slane %v2697, %v2701
    %v2704 = vadd.f32 %v2696, %v2702
    %2705 = vst [vmem:[#allocation7] sm:$0xff] 0.0
    %2706 = vst [vmem:[#allocation7 + $0x8] sm:$0xff] 0.0
    %2707 = vst [vmem:[#allocation7 + $0x10] sm:$0xff] 0.0
    %2708 = vst [vmem:[#allocation7 + $0x18] sm:$0xff] 0.0
    %2709 = vst [vmem:[#allocation7 + $0x5] sm:$0x3] %v2704
    %2710 = vst [vmem:[#allocation7 + $0x7] sm:$0xc] %v2704
    %2711 = vst [vmem:[#allocation7 + $0x11] sm:$0x30] %v2704
    %2712 = vst [vmem:[#allocation7 + $0x13] sm:$0xc0] %v2704
    %v2713 = vld [vmem:[#allocation7] sm:$0x1]
    %2714 = vst [vmem:[#allocation8] sm:$0x1] %v2713
    %v2715 = vld [vmem:[#allocation7 + $0x10] sm:$0x1]
    %2716 = vst [vmem:[#allocation8 + $0x1] sm:$0x1] %v2715
    %v2717 = vld [vmem:[#allocation7 + $0x1] sm:$0x1]
    %2718 = vst [vmem:[#allocation8 + $0x2] sm:$0x1] %v2717
    %v2719 = vld [vmem:[#allocation7 + $0x11] sm:$0x1]
    %2720 = vst [vmem:[#allocation8 + $0x3] sm:$0x1] %v2719
    %v2721 = vld [vmem:[#allocation7 + $0x2] sm:$0x1]
    %2722 = vst [vmem:[#allocation8 + $0x4] sm:$0x1] %v2721
    %v2723 = vld [vmem:[#allocation7 + $0x12] sm:$0x1]
    %2724 = vst [vmem:[#allocation8 + $0x5] sm:$0x1] %v2723
    %v2725 = vld [vmem:[#allocation7 + $0x4] sm:$0x1]
    %2726 = vst [vmem:[#allocation8 + $0x6] sm:$0x1] %v2725
    %v2727 = vld [vmem:[#allocation7 + $0x14] sm:$0x1]
    %2728 = vst [vmem:[#allocation8 + $0x7] sm:$0x1] %v2727
    %v2729 = vld [vmem:[#allocation7 + $0x5] sm:$0x1]
    %2730 = vst [vmem:[#allocation8 + $0x8] sm:$0x1] %v2729
    %v2731 = vld [vmem:[#allocation7 + $0x15] sm:$0x1]
    %2732 = vst [vmem:[#allocation8 + $0x9] sm:$0x1] %v2731
    %v2733 = vld [vmem:[#allocation7 + $0x6] sm:$0x1]
    %2734 = vst [vmem:[#allocation8 + $0xa] sm:$0x1] %v2733
    %v2735 = vld [vmem:[#allocation7 + $0x16] sm:$0x1]
    %2736 = vst [vmem:[#allocation8 + $0xb] sm:$0x1] %v2735
    %v2737 = vld [vmem:[#allocation7 + $0x8] sm:$0x1]
    %2738 = vst [vmem:[#allocation8 + $0xc] sm:$0x1] %v2737
    %v2739 = vld [vmem:[#allocation7 + $0x18] sm:$0x1]
    %2740 = vst [vmem:[#allocation8 + $0xd] sm:$0x1] %v2739
    %v2741 = vld [vmem:[#allocation7 + $0x9] sm:$0x1]
    %2742 = vst [vmem:[#allocation8 + $0xe] sm:$0x1] %v2741
    %v2743 = vld [vmem:[#allocation7 + $0x19] sm:$0x1]
    %2744 = vst [vmem:[#allocation8 + $0xf] sm:$0x1] %v2743
    %v2745 = vld [vmem:[#allocation7 + $0xa] sm:$0x1]
    %2746 = vst [vmem:[#allocation8 + $0x10] sm:$0x1] %v2745
    %v2747 = vld [vmem:[#allocation7 + $0x1a] sm:$0x1]
    %2748 = vst [vmem:[#allocation8 + $0x11] sm:$0x1] %v2747
    %v2749 = vld [vmem:[#allocation8] sm:$0xff]
    %v2750 = vld [vmem:[#allocation8 + $0x8] sm:$0xff]
    %v2751 = vld [vmem:[#allocation8 + $0x10] sm:$0x3]
    %v2755 = vcombine.high %v2749, %v2749
    %v2757 = vunpack.c.l.s4 1983009808
    %v2758 = vunpack.c.0.s8 %v2757
    %v2759 = vlaneseq
    %v2760 = vshrl.u32 %v2759, 7
    %v2761 = vsub.s32 %v2758, %v2760
    %v2762 = vrot.slane %v2749, %v2761
    %v2764 = vunpack.c.l.s4 1983009808
    %v2765 = vunpack.c.0.s8 %v2764
    %v2766 = vlaneseq
    %v2767 = vshrl.u32 %v2766, 7
    %v2768 = vsub.s32 %v2765, %v2767
    %v2769 = vrot.slane %v2755, %v2768
    %v2770 = vcombine.high %v2762, %v2762
    %v2771 = vcombine.high %v2769, %v2769
    %v2772 = vcombine.high %v2750, %v2750
    %v2774 = vunpack.c.l.s4 1983009808
    %v2775 = vunpack.c.0.s8 %v2774
    %v2776 = vlaneseq
    %v2777 = vshrl.u32 %v2776, 7
    %v2778 = vsub.s32 %v2775, %v2777
    %v2779 = vrot.slane %v2750, %v2778
    %v2781 = vunpack.c.l.s4 1983009808
    %v2782 = vunpack.c.0.s8 %v2781
    %v2783 = vlaneseq
    %v2784 = vshrl.u32 %v2783, 7
    %v2785 = vsub.s32 %v2782, %v2784
    %v2786 = vrot.slane %v2772, %v2785
    %v2787 = vcombine.high %v2779, %v2779
    %v2788 = vcombine.high %v2786, %v2786
    %v2790 = vunpack.c.l.s4 1983009808
    %v2791 = vunpack.c.0.s8 %v2790
    %v2792 = vlaneseq
    %v2793 = vshrl.u32 %v2792, 7
    %v2794 = vsub.s32 %v2791, %v2793
    %v2795 = vrot.slane %v2751, %v2794
    %v2805 = vpack.c.bf16 %v2762, %v2762
    %v2806 = vpack.c.bf16 %v2770, %v2770
    %v2807 = vpack.c.bf16 %v2769, %v2769
    %v2808 = vpack.c.bf16 %v2771, %v2771
    %v2809 = vpack.c.bf16 %v2779, %v2779
    %v2810 = vpack.c.bf16 %v2787, %v2787
    %v2811 = vpack.c.bf16 %v2786, %v2786
    %v2812 = vpack.c.bf16 %v2788, %v2788
    %v2813 = vpack.c.bf16 %v2795, %v2795
    %v2814 = vld [vmem:[#allocation20] sm:$0xf]
    %v2815 = vld [vmem:[#allocation20 + $0x4] sm:$0xf]
    %v2816 = vld [vmem:[#allocation20 + $0x8] sm:$0xf]
    %v2817 = vld [vmem:[#allocation20 + $0xc] sm:$0xf]
    %v2818 = vld [vmem:[#allocation20 + $0x10] sm:$0xf]
    %v2819 = vld [vmem:[#allocation20 + $0x14] sm:$0xf]
    %v2820 = vld [vmem:[#allocation20 + $0x18] sm:$0xf]
    %v2821 = vld [vmem:[#allocation20 + $0x1c] sm:$0xf]
    %v2822 = vld [vmem:[#allocation20 + $0x20] sm:$0xf]
    %v2823 = vld [vmem:[#allocation20 + $0x24] sm:$0xf]
    %v2824 = vld [vmem:[#allocation20 + $0x28] sm:$0xf]
    %v2825 = vld [vmem:[#allocation20 + $0x2c] sm:$0xf]
    %v2826 = vld [vmem:[#allocation20 + $0x30] sm:$0xf]
    %v2827 = vld [vmem:[#allocation20 + $0x34] sm:$0xf]
    %v2828 = vld [vmem:[#allocation20 + $0x38] sm:$0xf]
    %v2829 = vld [vmem:[#allocation20 + $0x3c] sm:$0xf]
    %v2830 = vld [vmem:[#allocation20 + $0x40] sm:$0xf]
    %v2831 = vld [vmem:[#allocation20 + $0x44] sm:$0xf]
    %v2832 = vld [vmem:[#allocation20 + $0x48] sm:$0xf]
    %v2833 = vld [vmem:[#allocation20 + $0x4c] sm:$0xf]
    %v2834 = vld [vmem:[#allocation20 + $0x50] sm:$0xf]
    %v2835 = vld [vmem:[#allocation20 + $0x54] sm:$0xf]
    %v2836 = vld [vmem:[#allocation20 + $0x58] sm:$0xf]
    %v2837 = vld [vmem:[#allocation20 + $0x5c] sm:$0xf]
    %v2838 = vld [vmem:[#allocation20 + $0x60] sm:$0xf]
    %v2839 = vld [vmem:[#allocation20 + $0x64] sm:$0xf]
    %v2840 = vld [vmem:[#allocation20 + $0x68] sm:$0xf]
    %v2841 = vld [vmem:[#allocation20 + $0x6c] sm:$0xf]
    %v2842 = vld [vmem:[#allocation20 + $0x70] sm:$0xf]
    %v2843 = vld [vmem:[#allocation20 + $0x74] sm:$0xf]
    %v2844 = vld [vmem:[#allocation20 + $0x78] sm:$0xf]
    %v2845 = vld [vmem:[#allocation20 + $0x7c] sm:$0xf]
    %v2846 = vld [vmem:[#allocation20 + $0x80] sm:$0xf]
    %v2847 = vld [vmem:[#allocation20 + $0x84] sm:$0xf]
    %v2848 = vld [vmem:[#allocation20 + $0x88] sm:$0xf]
    %v2849 = vld [vmem:[#allocation20 + $0x8c] sm:$0xf]
    %v2850 = vld [vmem:[#allocation20 + $0x90] sm:$0xf]
    %v2851 = vld [vmem:[#allocation20 + $0x94] sm:$0xf]
    %v2852 = vld [vmem:[#allocation20 + $0x98] sm:$0xf]
    %v2853 = vld [vmem:[#allocation20 + $0x9c] sm:$0xf]
    %v2854 = vld [vmem:[#allocation20 + $0xa0] sm:$0xf]
    %v2855 = vld [vmem:[#allocation20 + $0xa4] sm:$0xf]
    %v2856 = vld [vmem:[#allocation20 + $0xa8] sm:$0xf]
    %v2857 = vld [vmem:[#allocation20 + $0xac] sm:$0xf]
    %v2858 = vld [vmem:[#allocation20 + $0xb0] sm:$0xf]
    %v2859 = vld [vmem:[#allocation20 + $0xb4] sm:$0xf]
    %v2860 = vld [vmem:[#allocation20 + $0xb8] sm:$0xf]
    %v2861 = vld [vmem:[#allocation20 + $0xbc] sm:$0xf]
    %v2862 = vld [vmem:[#allocation20 + $0xc0] sm:$0xf]
    %v2863 = vld [vmem:[#allocation20 + $0xc4] sm:$0xf]
    %v2864 = vld [vmem:[#allocation20 + $0xc8] sm:$0xf]
    %v2865 = vld [vmem:[#allocation20 + $0xcc] sm:$0xf]
    %v2866 = vld [vmem:[#allocation20 + $0xd0] sm:$0xf]
    %v2867 = vld [vmem:[#allocation20 + $0xd4] sm:$0xf]
    %v2868 = vld [vmem:[#allocation20 + $0xd8] sm:$0xf]
    %v2869 = vld [vmem:[#allocation20 + $0xdc] sm:$0xf]
    %v2870 = vld [vmem:[#allocation20 + $0xe0] sm:$0xf]
    %v2871 = vld [vmem:[#allocation20 + $0xe4] sm:$0xf]
    %v2872 = vld [vmem:[#allocation20 + $0xe8] sm:$0xf]
    %v2873 = vld [vmem:[#allocation20 + $0xec] sm:$0xf]
    %v2874 = vld [vmem:[#allocation20 + $0xf0] sm:$0xf]
    %v2875 = vld [vmem:[#allocation20 + $0xf4] sm:$0xf]
    %v2876 = vld [vmem:[#allocation20 + $0xf8] sm:$0xf]
    %v2877 = vld [vmem:[#allocation20 + $0xfc] sm:$0xf]
    %v2878 = vld [vmem:[#allocation20 + $0x100] sm:$0xf]
    %v2879 = vld [vmem:[#allocation20 + $0x104] sm:$0xf]
    %v2880 = vld [vmem:[#allocation20 + $0x108] sm:$0xf]
    %v2881 = vld [vmem:[#allocation20 + $0x10c] sm:$0xf]
    %v2882 = vld [vmem:[#allocation20 + $0x110] sm:$0xf]
    %v2883 = vld [vmem:[#allocation20 + $0x114] sm:$0xf]
    %v2884 = vld [vmem:[#allocation20 + $0x118] sm:$0xf]
    %v2885 = vld [vmem:[#allocation20 + $0x11c] sm:$0xf]
    %v2886 = vld [vmem:[#allocation20 + $0x120] sm:$0xf]
    %v2887 = vld [vmem:[#allocation20 + $0x124] sm:$0xf]
    %v2888 = vld [vmem:[#allocation20 + $0x128] sm:$0xf]
    %v2889 = vld [vmem:[#allocation20 + $0x12c] sm:$0xf]
    %v2890 = vld [vmem:[#allocation20 + $0x130] sm:$0xf]
    %v2891 = vld [vmem:[#allocation20 + $0x134] sm:$0xf]
    %v2892 = vld [vmem:[#allocation20 + $0x138] sm:$0xf]
    %v2893 = vld [vmem:[#allocation20 + $0x13c] sm:$0xf]
    %v2894 = vld [vmem:[#allocation20 + $0x140] sm:$0xf]
    %v2895 = vld [vmem:[#allocation20 + $0x144] sm:$0xf]
    %v2896 = vld [vmem:[#allocation20 + $0x148] sm:$0xf]
    %v2897 = vld [vmem:[#allocation20 + $0x14c] sm:$0xf]
    %v2898 = vld [vmem:[#allocation20 + $0x150] sm:$0xf]
    %v2899 = vld [vmem:[#allocation20 + $0x154] sm:$0xf]
    %v2900 = vld [vmem:[#allocation20 + $0x158] sm:$0xf]
    %v2901 = vld [vmem:[#allocation20 + $0x15c] sm:$0xf]
    %v2902 = vld [vmem:[#allocation20 + $0x160] sm:$0xf]
    %v2903 = vld [vmem:[#allocation20 + $0x164] sm:$0xf]
    %v2904 = vld [vmem:[#allocation20 + $0x168] sm:$0xf]
    %v2905 = vld [vmem:[#allocation20 + $0x16c] sm:$0xf]
    %v2906 = vld [vmem:[#allocation20 + $0x170] sm:$0xf]
    %v2907 = vld [vmem:[#allocation20 + $0x174] sm:$0xf]
    %v2908 = vld [vmem:[#allocation20 + $0x178] sm:$0xf]
    %v2909 = vld [vmem:[#allocation20 + $0x17c] sm:$0xf]
    %v2910 = vld [vmem:[#allocation20 + $0x180] sm:$0xf]
    %v2911 = vld [vmem:[#allocation20 + $0x184] sm:$0xf]
    %v2912 = vld [vmem:[#allocation20 + $0x188] sm:$0xf]
    %v2913 = vld [vmem:[#allocation20 + $0x18c] sm:$0xf]
    %v2914 = vld [vmem:[#allocation20 + $0x190] sm:$0xf]
    %v2915 = vld [vmem:[#allocation20 + $0x194] sm:$0xf]
    %v2916 = vld [vmem:[#allocation20 + $0x198] sm:$0xf]
    %v2917 = vld [vmem:[#allocation20 + $0x19c] sm:$0xf]
    %v2918 = vld [vmem:[#allocation20 + $0x1a0] sm:$0xf]
    %v2919 = vld [vmem:[#allocation20 + $0x1a4] sm:$0xf]
    %v2920 = vld [vmem:[#allocation20 + $0x1a8] sm:$0xf]
    %v2921 = vld [vmem:[#allocation20 + $0x1ac] sm:$0xf]
    %v2922 = vld [vmem:[#allocation20 + $0x1b0] sm:$0xf]
    %v2923 = vld [vmem:[#allocation20 + $0x1b4] sm:$0xf]
    %v2924 = vld [vmem:[#allocation20 + $0x1b8] sm:$0xf]
    %v2925 = vld [vmem:[#allocation20 + $0x1bc] sm:$0xf]
    %v2926 = vld [vmem:[#allocation20 + $0x1c0] sm:$0xf]
    %v2927 = vld [vmem:[#allocation20 + $0x1c4] sm:$0xf]
    %v2928 = vld [vmem:[#allocation20 + $0x1c8] sm:$0xf]
    %v2929 = vld [vmem:[#allocation20 + $0x1cc] sm:$0xf]
    %v2930 = vld [vmem:[#allocation20 + $0x1d0] sm:$0xf]
    %v2931 = vld [vmem:[#allocation20 + $0x1d4] sm:$0xf]
    %v2932 = vld [vmem:[#allocation20 + $0x1d8] sm:$0xf]
    %v2933 = vld [vmem:[#allocation20 + $0x1dc] sm:$0xf]
    %v2934 = vld [vmem:[#allocation20 + $0x1e0] sm:$0xf]
    %v2935 = vld [vmem:[#allocation20 + $0x1e4] sm:$0xf]
    %v2936 = vld [vmem:[#allocation20 + $0x1e8] sm:$0xf]
    %v2937 = vld [vmem:[#allocation20 + $0x1ec] sm:$0xf]
    %v2938 = vld [vmem:[#allocation20 + $0x1f0] sm:$0xf]
    %v2939 = vld [vmem:[#allocation20 + $0x1f4] sm:$0xf]
    %v2940 = vld [vmem:[#allocation20 + $0x1f8] sm:$0xf]
    %v2941 = vld [vmem:[#allocation20 + $0x1fc] sm:$0xf]
    %v2942 = vld [vmem:[#allocation20 + $0x200] sm:$0xf]
    %v2943 = vld [vmem:[#allocation20 + $0x204] sm:$0xf]
    %v2944 = vld [vmem:[#allocation20 + $0x208] sm:$0xf]
    %v2945 = vld [vmem:[#allocation20 + $0x20c] sm:$0xf]
    %v2946 = vld [vmem:[#allocation20 + $0x210] sm:$0xf]
    %v2947 = vld [vmem:[#allocation20 + $0x214] sm:$0xf]
    %v2948 = vld [vmem:[#allocation20 + $0x218] sm:$0xf]
    %v2949 = vld [vmem:[#allocation20 + $0x21c] sm:$0xf]
    %v2950 = vld [vmem:[#allocation20 + $0x220] sm:$0xf]
    %v2951 = vld [vmem:[#allocation20 + $0x224] sm:$0xf]
    %v2952 = vld [vmem:[#allocation20 + $0x228] sm:$0xf]
    %v2953 = vld [vmem:[#allocation20 + $0x22c] sm:$0xf]
    %v2954 = vld [vmem:[#allocation20 + $0x230] sm:$0xf]
    %v2955 = vld [vmem:[#allocation20 + $0x234] sm:$0xf]
    %v2956 = vld [vmem:[#allocation20 + $0x238] sm:$0xf]
    %v2957 = vld [vmem:[#allocation20 + $0x23c] sm:$0xf]
    %v2958 = vld [vmem:[#allocation21] sm:$0x1]
    %v2960 = vlaneseq
    %v2961 = vshrl.u32 %v2960, 7
    %v2962 = vsub.s32 0, %v2961
    %v2963 = vrot.slane %v2958, %v2962
    %v3109 = vunpack.c.l.b16 %v2814
    %v3110 = vunpack.c.l.b16 %v2815
    %v3111 = vunpack.c.l.b16 %v2816
    %v3112 = vunpack.c.l.b16 %v2817
    %v3113 = vunpack.c.l.b16 %v2818
    %v3114 = vunpack.c.l.b16 %v2819
    %v3115 = vunpack.c.l.b16 %v2820
    %v3116 = vunpack.c.l.b16 %v2821
    %v3117 = vunpack.c.l.b16 %v2822
    %v3118 = vunpack.c.l.b16 %v2823
    %v3119 = vunpack.c.l.b16 %v2824
    %v3120 = vunpack.c.l.b16 %v2825
    %v3121 = vunpack.c.l.b16 %v2826
    %v3122 = vunpack.c.l.b16 %v2827
    %v3123 = vunpack.c.l.b16 %v2828
    %v3124 = vunpack.c.l.b16 %v2829
    %v3125 = vunpack.c.l.b16 %v2830
    %v3126 = vunpack.c.l.b16 %v2831
    %v3127 = vunpack.c.l.b16 %v2832
    %v3128 = vunpack.c.l.b16 %v2833
    %v3129 = vunpack.c.l.b16 %v2834
    %v3130 = vunpack.c.l.b16 %v2835
    %v3131 = vunpack.c.l.b16 %v2836
    %v3132 = vunpack.c.l.b16 %v2837
    %v3133 = vunpack.c.l.b16 %v2838
    %v3134 = vunpack.c.l.b16 %v2839
    %v3135 = vunpack.c.l.b16 %v2840
    %v3136 = vunpack.c.l.b16 %v2841
    %v3137 = vunpack.c.l.b16 %v2842
    %v3138 = vunpack.c.l.b16 %v2843
    %v3139 = vunpack.c.l.b16 %v2844
    %v3140 = vunpack.c.l.b16 %v2845
    %v3141 = vunpack.c.l.b16 %v2846
    %v3142 = vunpack.c.l.b16 %v2847
    %v3143 = vunpack.c.l.b16 %v2848
    %v3144 = vunpack.c.l.b16 %v2849
    %v3145 = vunpack.c.l.b16 %v2850
    %v3146 = vunpack.c.l.b16 %v2851
    %v3147 = vunpack.c.l.b16 %v2852
    %v3148 = vunpack.c.l.b16 %v2853
    %v3149 = vunpack.c.l.b16 %v2854
    %v3150 = vunpack.c.l.b16 %v2855
    %v3151 = vunpack.c.l.b16 %v2856
    %v3152 = vunpack.c.l.b16 %v2857
    %v3153 = vunpack.c.l.b16 %v2858
    %v3154 = vunpack.c.l.b16 %v2859
    %v3155 = vunpack.c.l.b16 %v2860
    %v3156 = vunpack.c.l.b16 %v2861
    %v3157 = vunpack.c.l.b16 %v2862
    %v3158 = vunpack.c.l.b16 %v2863
    %v3159 = vunpack.c.l.b16 %v2864
    %v3160 = vunpack.c.l.b16 %v2865
    %v3161 = vunpack.c.l.b16 %v2866
    %v3162 = vunpack.c.l.b16 %v2867
    %v3163 = vunpack.c.l.b16 %v2868
    %v3164 = vunpack.c.l.b16 %v2869
    %v3165 = vunpack.c.l.b16 %v2870
    %v3166 = vunpack.c.l.b16 %v2871
    %v3167 = vunpack.c.l.b16 %v2872
    %v3168 = vunpack.c.l.b16 %v2873
    %v3169 = vunpack.c.l.b16 %v2874
    %v3170 = vunpack.c.l.b16 %v2875
    %v3171 = vunpack.c.l.b16 %v2876
    %v3172 = vunpack.c.l.b16 %v2877
    %v3173 = vunpack.c.l.b16 %v2878
    %v3174 = vunpack.c.l.b16 %v2879
    %v3175 = vunpack.c.l.b16 %v2880
    %v3176 = vunpack.c.l.b16 %v2881
    %v3177 = vunpack.c.l.b16 %v2882
    %v3178 = vunpack.c.l.b16 %v2883
    %v3179 = vunpack.c.l.b16 %v2884
    %v3180 = vunpack.c.l.b16 %v2885
    %v3181 = vunpack.c.l.b16 %v2886
    %v3182 = vunpack.c.l.b16 %v2887
    %v3183 = vunpack.c.l.b16 %v2888
    %v3184 = vunpack.c.l.b16 %v2889
    %v3185 = vunpack.c.l.b16 %v2890
    %v3186 = vunpack.c.l.b16 %v2891
    %v3187 = vunpack.c.l.b16 %v2892
    %v3188 = vunpack.c.l.b16 %v2893
    %v3189 = vunpack.c.l.b16 %v2894
    %v3190 = vunpack.c.l.b16 %v2895
    %v3191 = vunpack.c.l.b16 %v2896
    %v3192 = vunpack.c.l.b16 %v2897
    %v3193 = vunpack.c.l.b16 %v2898
    %v3194 = vunpack.c.l.b16 %v2899
    %v3195 = vunpack.c.l.b16 %v2900
    %v3196 = vunpack.c.l.b16 %v2901
    %v3197 = vunpack.c.l.b16 %v2902
    %v3198 = vunpack.c.l.b16 %v2903
    %v3199 = vunpack.c.l.b16 %v2904
    %v3200 = vunpack.c.l.b16 %v2905
    %v3201 = vunpack.c.l.b16 %v2906
    %v3202 = vunpack.c.l.b16 %v2907
    %v3203 = vunpack.c.l.b16 %v2908
    %v3204 = vunpack.c.l.b16 %v2909
    %v3205 = vunpack.c.l.b16 %v2910
    %v3206 = vunpack.c.l.b16 %v2911
    %v3207 = vunpack.c.l.b16 %v2912
    %v3208 = vunpack.c.l.b16 %v2913
    %v3209 = vunpack.c.l.b16 %v2914
    %v3210 = vunpack.c.l.b16 %v2915
    %v3211 = vunpack.c.l.b16 %v2916
    %v3212 = vunpack.c.l.b16 %v2917
    %v3213 = vunpack.c.l.b16 %v2918
    %v3214 = vunpack.c.l.b16 %v2919
    %v3215 = vunpack.c.l.b16 %v2920
    %v3216 = vunpack.c.l.b16 %v2921
    %v3217 = vunpack.c.l.b16 %v2922
    %v3218 = vunpack.c.l.b16 %v2923
    %v3219 = vunpack.c.l.b16 %v2924
    %v3220 = vunpack.c.l.b16 %v2925
    %v3221 = vunpack.c.l.b16 %v2926
    %v3222 = vunpack.c.l.b16 %v2927
    %v3223 = vunpack.c.l.b16 %v2928
    %v3224 = vunpack.c.l.b16 %v2929
    %v3225 = vunpack.c.l.b16 %v2930
    %v3226 = vunpack.c.l.b16 %v2931
    %v3227 = vunpack.c.l.b16 %v2932
    %v3228 = vunpack.c.l.b16 %v2933
    %v3229 = vunpack.c.l.b16 %v2934
    %v3230 = vunpack.c.l.b16 %v2935
    %v3231 = vunpack.c.l.b16 %v2936
    %v3232 = vunpack.c.l.b16 %v2937
    %v3233 = vunpack.c.l.b16 %v2938
    %v3234 = vunpack.c.l.b16 %v2939
    %v3235 = vunpack.c.l.b16 %v2940
    %v3236 = vunpack.c.l.b16 %v2941
    %v3237 = vunpack.c.l.b16 %v2942
    %v3238 = vunpack.c.l.b16 %v2943
    %v3239 = vunpack.c.l.b16 %v2944
    %v3240 = vunpack.c.l.b16 %v2945
    %v3241 = vunpack.c.l.b16 %v2946
    %v3242 = vunpack.c.l.b16 %v2947
    %v3243 = vunpack.c.l.b16 %v2948
    %v3244 = vunpack.c.l.b16 %v2949
    %v3245 = vunpack.c.l.b16 %v2950
    %v3246 = vunpack.c.l.b16 %v2951
    %v3247 = vunpack.c.l.b16 %v2952
    %v3248 = vunpack.c.l.b16 %v2953
    %v3249 = vunpack.c.l.b16 %v2954
    %v3250 = vunpack.c.l.b16 %v2955
    %v3251 = vunpack.c.l.b16 %v2956
    %v3252 = vunpack.c.l.b16 %v2957
    %v3253 = vpack.c.b16 %v3110, %v3109
    %v3254 = vpack.c.b16 %v3112, %v3111
    %v3255 = vpack.c.b16 %v3114, %v3113
    %v3256 = vpack.c.b16 %v3116, %v3115
    %v3257 = vpack.c.b16 %v3118, %v3117
    %v3258 = vpack.c.b16 %v3120, %v3119
    %v3259 = vpack.c.b16 %v3122, %v3121
    %v3260 = vpack.c.b16 %v3124, %v3123
    %v3261 = vpack.c.b16 %v3126, %v3125
    %v3262 = vpack.c.b16 %v3128, %v3127
    %v3263 = vpack.c.b16 %v3130, %v3129
    %v3264 = vpack.c.b16 %v3132, %v3131
    %v3265 = vpack.c.b16 %v3134, %v3133
    %v3266 = vpack.c.b16 %v3136, %v3135
    %v3267 = vpack.c.b16 %v3138, %v3137
    %v3268 = vpack.c.b16 %v3140, %v3139
    %v3269 = vpack.c.b16 %v3142, %v3141
    %v3270 = vpack.c.b16 %v3144, %v3143
    %v3271 = vpack.c.b16 %v3146, %v3145
    %v3272 = vpack.c.b16 %v3148, %v3147
    %v3273 = vpack.c.b16 %v3150, %v3149
    %v3274 = vpack.c.b16 %v3152, %v3151
    %v3275 = vpack.c.b16 %v3154, %v3153
    %v3276 = vpack.c.b16 %v3156, %v3155
    %v3277 = vpack.c.b16 %v3158, %v3157
    %v3278 = vpack.c.b16 %v3160, %v3159
    %v3279 = vpack.c.b16 %v3162, %v3161
    %v3280 = vpack.c.b16 %v3164, %v3163
    %v3281 = vpack.c.b16 %v3166, %v3165
    %v3282 = vpack.c.b16 %v3168, %v3167
    %v3283 = vpack.c.b16 %v3170, %v3169
    %v3284 = vpack.c.b16 %v3172, %v3171
    %v3285 = vpack.c.b16 %v3174, %v3173
    %v3286 = vpack.c.b16 %v3176, %v3175
    %v3287 = vpack.c.b16 %v3178, %v3177
    %v3288 = vpack.c.b16 %v3180, %v3179
    %v3289 = vpack.c.b16 %v3182, %v3181
    %v3290 = vpack.c.b16 %v3184, %v3183
    %v3291 = vpack.c.b16 %v3186, %v3185
    %v3292 = vpack.c.b16 %v3188, %v3187
    %v3293 = vpack.c.b16 %v3190, %v3189
    %v3294 = vpack.c.b16 %v3192, %v3191
    %v3295 = vpack.c.b16 %v3194, %v3193
    %v3296 = vpack.c.b16 %v3196, %v3195
    %v3297 = vpack.c.b16 %v3198, %v3197
    %v3298 = vpack.c.b16 %v3200, %v3199
    %v3299 = vpack.c.b16 %v3202, %v3201
    %v3300 = vpack.c.b16 %v3204, %v3203
    %v3301 = vpack.c.b16 %v3206, %v3205
    %v3302 = vpack.c.b16 %v3208, %v3207
    %v3303 = vpack.c.b16 %v3210, %v3209
    %v3304 = vpack.c.b16 %v3212, %v3211
    %v3305 = vpack.c.b16 %v3214, %v3213
    %v3306 = vpack.c.b16 %v3216, %v3215
    %v3307 = vpack.c.b16 %v3218, %v3217
    %v3308 = vpack.c.b16 %v3220, %v3219
    %v3309 = vpack.c.b16 %v3222, %v3221
    %v3310 = vpack.c.b16 %v3224, %v3223
    %v3311 = vpack.c.b16 %v3226, %v3225
    %v3312 = vpack.c.b16 %v3228, %v3227
    %v3313 = vpack.c.b16 %v3230, %v3229
    %v3314 = vpack.c.b16 %v3232, %v3231
    %v3315 = vpack.c.b16 %v3234, %v3233
    %v3316 = vpack.c.b16 %v3236, %v3235
    %v3317 = vpack.c.b16 %v3238, %v3237
    %v3318 = vpack.c.b16 %v3240, %v3239
    %v3319 = vpack.c.b16 %v3242, %v3241
    %v3320 = vpack.c.b16 %v3244, %v3243
    %v3321 = vpack.c.b16 %v3246, %v3245
    %v3322 = vpack.c.b16 %v3248, %v3247
    %v3323 = vpack.c.b16 %v3250, %v3249
    %v3324 = vpack.c.b16 %v3252, %v3251
    %3397 = vmatprep.subr.bf16.mxu0 0
    %3398 = vmatpush1.bf16.msra.mxu0 %v3253
    %3399 = vmatprep.subr.bf16.mxu0 0
    %3400 = vmatpush1.bf16.msra.mxu0 %v3254
    %3401 = vmatprep.subr.bf16.mxu0 0
    %3402 = vmatpush1.bf16.msra.mxu0 %v3255
    %3403 = vmatprep.subr.bf16.mxu0 0
    %3404 = vmatpush1.bf16.msra.mxu0 %v3256
    %3405 = vmatprep.subr.bf16.mxu0 0
    %3406 = vmatpush1.bf16.msra.mxu0 %v3257
    %3407 = vmatprep.subr.bf16.mxu0 0
    %3408 = vmatpush1.bf16.msra.mxu0 %v3258
    %3409 = vmatprep.subr.bf16.mxu0 0
    %3410 = vmatpush1.bf16.msra.mxu0 %v3259
    %3411 = vmatprep.subr.bf16.mxu0 0
    %3412 = vmatpush1.bf16.msra.mxu0 %v3260
    %3413 = vmatprep.subr.bf16.mxu0 0
    %3414 = vmatpush1.bf16.msra.mxu0 %v3261
    %3415 = vmatprep.subr.bf16.mxu0 0
    %3416 = vmatpush1.bf16.msra.mxu0 %v3262
    %3417 = vmatprep.subr.bf16.mxu0 0
    %3418 = vmatpush1.bf16.msra.mxu0 %v3263
    %3419 = vmatprep.subr.bf16.mxu0 0
    %3420 = vmatpush1.bf16.msra.mxu0 %v3264
    %3421 = vmatprep.subr.bf16.mxu0 0
    %3422 = vmatpush1.bf16.msra.mxu0 %v3265
    %3423 = vmatprep.subr.bf16.mxu0 0
    %3424 = vmatpush1.bf16.msra.mxu0 %v3266
    %3425 = vmatprep.subr.bf16.mxu0 0
    %3426 = vmatpush1.bf16.msra.mxu0 %v3267
    %3427 = vmatprep.subr.bf16.mxu0 0
    %3428 = vmatpush1.bf16.msra.mxu0 %v3268
    %3429 = vmatprep.mubr.bf16.mxu0 %v2806
    %3430 = vmatmul.mubr.bf16.gmra.mrb[0].mxu0 %v2805
    %v3431 = vpop.f32.mrb[0].mxu0
    %v3432 = vadd.f32 %v2963, %v3431
    %v3433 = vpop.f32.mrb[0].mxu0
    %v3434 = vpop.f32.mrb[0].mxu0
    %v3435 = vpop.f32.mrb[0].mxu0
    %3436 = vdwg.mxu0
    %3437 = vmatprep.subr.bf16.mxu0 0
    %3438 = vmatpush1.bf16.msra.mxu0 %v3269
    %3439 = vmatprep.subr.bf16.mxu0 0
    %3440 = vmatpush1.bf16.msra.mxu0 %v3270
    %3441 = vmatprep.subr.bf16.mxu0 0
    %3442 = vmatpush1.bf16.msra.mxu0 %v3271
    %3443 = vmatprep.subr.bf16.mxu0 0
    %3444 = vmatpush1.bf16.msra.mxu0 %v3272
    %3445 = vmatprep.subr.bf16.mxu0 0
    %3446 = vmatpush1.bf16.msra.mxu0 %v3273
    %3447 = vmatprep.subr.bf16.mxu0 0
    %3448 = vmatpush1.bf16.msra.mxu0 %v3274
    %3449 = vmatprep.subr.bf16.mxu0 0
    %3450 = vmatpush1.bf16.msra.mxu0 %v3275
    %3451 = vmatprep.subr.bf16.mxu0 0
    %3452 = vmatpush1.bf16.msra.mxu0 %v3276
    %3453 = vmatprep.subr.bf16.mxu0 0
    %3454 = vmatpush1.bf16.msra.mxu0 %v3277
    %3455 = vmatprep.subr.bf16.mxu0 0
    %3456 = vmatpush1.bf16.msra.mxu0 %v3278
    %3457 = vmatprep.subr.bf16.mxu0 0
    %3458 = vmatpush1.bf16.msra.mxu0 %v3279
    %3459 = vmatprep.subr.bf16.mxu0 0
    %3460 = vmatpush1.bf16.msra.mxu0 %v3280
    %3461 = vmatprep.subr.bf16.mxu0 0
    %3462 = vmatpush1.bf16.msra.mxu0 %v3281
    %3463 = vmatprep.subr.bf16.mxu0 0
    %3464 = vmatpush1.bf16.msra.mxu0 %v3282
    %3465 = vmatprep.subr.bf16.mxu0 0
    %3466 = vmatpush1.bf16.msra.mxu0 %v3283
    %3467 = vmatprep.subr.bf16.mxu0 0
    %3468 = vmatpush1.bf16.msra.mxu0 %v3284
    %3469 = vmatprep.mubr.bf16.mxu0 %v2808
    %3470 = vmatmul.mubr.bf16.gmra.mrb[0].mxu0 %v2807
    %v3471 = vpop.f32.mrb[0].mxu0
    %v3472 = vadd.f32 %v3432, %v3471
    %v3473 = vpop.f32.mrb[0].mxu0
    %v3474 = vpop.f32.mrb[0].mxu0
    %v3475 = vpop.f32.mrb[0].mxu0
    %3476 = vdwg.mxu0
    %3477 = vmatprep.subr.bf16.mxu0 0
    %3478 = vmatpush1.bf16.msra.mxu0 %v3285
    %3479 = vmatprep.subr.bf16.mxu0 0
    %3480 = vmatpush1.bf16.msra.mxu0 %v3286
    %3481 = vmatprep.subr.bf16.mxu0 0
    %3482 = vmatpush1.bf16.msra.mxu0 %v3287
    %3483 = vmatprep.subr.bf16.mxu0 0
    %3484 = vmatpush1.bf16.msra.mxu0 %v3288
    %3485 = vmatprep.subr.bf16.mxu0 0
    %3486 = vmatpush1.bf16.msra.mxu0 %v3289
    %3487 = vmatprep.subr.bf16.mxu0 0
    %3488 = vmatpush1.bf16.msra.mxu0 %v3290
    %3489 = vmatprep.subr.bf16.mxu0 0
    %3490 = vmatpush1.bf16.msra.mxu0 %v3291
    %3491 = vmatprep.subr.bf16.mxu0 0
    %3492 = vmatpush1.bf16.msra.mxu0 %v3292
    %3493 = vmatprep.subr.bf16.mxu0 0
    %3494 = vmatpush1.bf16.msra.mxu0 %v3293
    %3495 = vmatprep.subr.bf16.mxu0 0
    %3496 = vmatpush1.bf16.msra.mxu0 %v3294
    %3497 = vmatprep.subr.bf16.mxu0 0
    %3498 = vmatpush1.bf16.msra.mxu0 %v3295
    %3499 = vmatprep.subr.bf16.mxu0 0
    %3500 = vmatpush1.bf16.msra.mxu0 %v3296
    %3501 = vmatprep.subr.bf16.mxu0 0
    %3502 = vmatpush1.bf16.msra.mxu0 %v3297
    %3503 = vmatprep.subr.bf16.mxu0 0
    %3504 = vmatpush1.bf16.msra.mxu0 %v3298
    %3505 = vmatprep.subr.bf16.mxu0 0
    %3506 = vmatpush1.bf16.msra.mxu0 %v3299
    %3507 = vmatprep.subr.bf16.mxu0 0
    %3508 = vmatpush1.bf16.msra.mxu0 %v3300
    %3509 = vmatprep.mubr.bf16.mxu0 %v2810
    %3510 = vmatmul.mubr.bf16.gmra.mrb[0].mxu0 %v2809
    %v3511 = vpop.f32.mrb[0].mxu0
    %v3512 = vadd.f32 %v3472, %v3511
    %v3513 = vpop.f32.mrb[0].mxu0
    %v3514 = vpop.f32.mrb[0].mxu0
    %v3515 = vpop.f32.mrb[0].mxu0
    %3516 = vdwg.mxu0
    %3517 = vmatprep.subr.bf16.mxu0 0
    %3518 = vmatpush1.bf16.msra.mxu0 %v3301
    %3519 = vmatprep.subr.bf16.mxu0 0
    %3520 = vmatpush1.bf16.msra.mxu0 %v3302
    %3521 = vmatprep.subr.bf16.mxu0 0
    %3522 = vmatpush1.bf16.msra.mxu0 %v3303
    %3523 = vmatprep.subr.bf16.mxu0 0
    %3524 = vmatpush1.bf16.msra.mxu0 %v3304
    %3525 = vmatprep.subr.bf16.mxu0 0
    %3526 = vmatpush1.bf16.msra.mxu0 %v3305
    %3527 = vmatprep.subr.bf16.mxu0 0
    %3528 = vmatpush1.bf16.msra.mxu0 %v3306
    %3529 = vmatprep.subr.bf16.mxu0 0
    %3530 = vmatpush1.bf16.msra.mxu0 %v3307
    %3531 = vmatprep.subr.bf16.mxu0 0
    %3532 = vmatpush1.bf16.msra.mxu0 %v3308
    %3533 = vmatprep.subr.bf16.mxu0 0
    %3534 = vmatpush1.bf16.msra.mxu0 %v3309
    %3535 = vmatprep.subr.bf16.mxu0 0
    %3536 = vmatpush1.bf16.msra.mxu0 %v3310
    %3537 = vmatprep.subr.bf16.mxu0 0
    %3538 = vmatpush1.bf16.msra.mxu0 %v3311
    %3539 = vmatprep.subr.bf16.mxu0 0
    %3540 = vmatpush1.bf16.msra.mxu0 %v3312
    %3541 = vmatprep.subr.bf16.mxu0 0
    %3542 = vmatpush1.bf16.msra.mxu0 %v3313
    %3543 = vmatprep.subr.bf16.mxu0 0
    %3544 = vmatpush1.bf16.msra.mxu0 %v3314
    %3545 = vmatprep.subr.bf16.mxu0 0
    %3546 = vmatpush1.bf16.msra.mxu0 %v3315
    %3547 = vmatprep.subr.bf16.mxu0 0
    %3548 = vmatpush1.bf16.msra.mxu0 %v3316
    %3549 = vmatprep.mubr.bf16.mxu0 %v2812
    %3550 = vmatmul.mubr.bf16.gmra.mrb[0].mxu0 %v2811
    %v3551 = vpop.f32.mrb[0].mxu0
    %v3552 = vadd.f32 %v3512, %v3551
    %v3553 = vpop.f32.mrb[0].mxu0
    %v3554 = vpop.f32.mrb[0].mxu0
    %v3555 = vpop.f32.mrb[0].mxu0
    %3556 = vdwg.mxu0
    %3557 = vmatprep.subr.bf16.mxu0 0
    %3558 = vmatpush1.bf16.msra.mxu0 %v3317
    %3559 = vmatprep.subr.bf16.mxu0 0
    %3560 = vmatpush1.bf16.msra.mxu0 %v3318
    %3561 = vmatprep.subr.bf16.mxu0 0
    %3562 = vmatpush1.bf16.msra.mxu0 %v3319
    %3563 = vmatprep.subr.bf16.mxu0 0
    %3564 = vmatpush1.bf16.msra.mxu0 %v3320
    %3565 = vmatprep.subr.bf16.mxu0 0
    %3566 = vmatpush1.bf16.msra.mxu0 %v3321
    %3567 = vmatprep.subr.bf16.mxu0 0
    %3568 = vmatpush1.bf16.msra.mxu0 %v3322
    %3569 = vmatprep.subr.bf16.mxu0 0
    %3570 = vmatpush1.bf16.msra.mxu0 %v3323
    %3571 = vmatprep.subr.bf16.mxu0 0
    %3572 = vmatpush1.bf16.msra.mxu0 %v3324
    %3573 = vmatprep.subr.bf16.mxu0 0
    %3574 = vmatpush1.bf16.msra.mxu0 0
    %3575 = vmatprep.subr.bf16.mxu0 0
    %3576 = vmatpush1.bf16.msra.mxu0 0
    %3577 = vmatprep.subr.bf16.mxu0 0
    %3578 = vmatpush1.bf16.msra.mxu0 0
    %3579 = vmatprep.subr.bf16.mxu0 0
    %3580 = vmatpush1.bf16.msra.mxu0 0
    %3581 = vmatprep.subr.bf16.mxu0 0
    %3582 = vmatpush1.bf16.msra.mxu0 0
    %3583 = vmatprep.subr.bf16.mxu0 0
    %3584 = vmatpush1.bf16.msra.mxu0 0
    %3585 = vmatprep.subr.bf16.mxu0 0
    %3586 = vmatpush1.bf16.msra.mxu0 0
    %3587 = vmatprep.subr.bf16.mxu0 0
    %3588 = vmatpush1.bf16.msra.mxu0 0
    %3589 = vmatprep.mubr.bf16.mxu0 0
    %3590 = vmatmul.mubr.bf16.gmra.mrb[0].mxu0 %v2813
    %v3591 = vpop.f32.mrb[0].mxu0
    %v3592 = vadd.f32 %v3552, %v3591
    %v3593 = vpop.f32.mrb[0].mxu0
    %v3594 = vpop.f32.mrb[0].mxu0
    %v3595 = vpop.f32.mrb[0].mxu0
    %3596 = vdwg.mxu0
    %v3597 = vmul.f32 %v3592, 0.2
    %v3598 = vmax.f32 %v3592, %v3597
    %v3599 = vld [vmem:[#allocation23] sm:$0x1]
    %v3601 = vlaneseq
    %v3602 = vshrl.u32 %v3601, 7
    %v3603 = vsub.s32 0, %v3602
    %v3604 = vrot.slane %v3599, %v3603
    %v3606 = vadd.f32 %v3598, %v3604
    %v3607 = vpack.c.bf16 %v3606, %v3606
    %v3608 = vld [vmem:[%s12] sm:$0xf]
    %v3609 = vld [vmem:[%s12 + $0x4] sm:$0xf]
    %v3610 = vld [vmem:[%s12 + $0x8] sm:$0xf]
    %v3611 = vld [vmem:[%s12 + $0xc] sm:$0xf]
    %v3612 = vld [vmem:[%s12 + $0x10] sm:$0xf]
    %v3613 = vld [vmem:[%s12 + $0x14] sm:$0xf]
    %v3614 = vld [vmem:[%s12 + $0x18] sm:$0xf]
    %v3615 = vld [vmem:[%s12 + $0x1c] sm:$0xf]
    %v3616 = vld [vmem:[%s12 + $0x20] sm:$0xf]
    %v3617 = vld [vmem:[%s12 + $0x24] sm:$0xf]
    %v3618 = vld [vmem:[%s12 + $0x28] sm:$0xf]
    %v3619 = vld [vmem:[%s12 + $0x2c] sm:$0xf]
    %v3620 = vld [vmem:[%s12 + $0x30] sm:$0xf]
    %v3621 = vld [vmem:[%s12 + $0x34] sm:$0xf]
    %v3622 = vld [vmem:[%s12 + $0x38] sm:$0xf]
    %v3623 = vld [vmem:[%s12 + $0x3c] sm:$0xf]
    %v3624 = vld [vmem:[%s13] sm:$0x1]
    %v3626 = vlaneseq
    %v3627 = vshrl.u32 %v3626, 7
    %v3628 = vsub.s32 0, %v3627
    %v3629 = vrot.slane %v3624, %v3628
    %v3647 = vunpack.c.l.b16 %v3608
    %v3648 = vunpack.c.l.b16 %v3609
    %v3649 = vunpack.c.l.b16 %v3610
    %v3650 = vunpack.c.l.b16 %v3611
    %v3651 = vunpack.c.l.b16 %v3612
    %v3652 = vunpack.c.l.b16 %v3613
    %v3653 = vunpack.c.l.b16 %v3614
    %v3654 = vunpack.c.l.b16 %v3615
    %v3655 = vunpack.c.l.b16 %v3616
    %v3656 = vunpack.c.l.b16 %v3617
    %v3657 = vunpack.c.l.b16 %v3618
    %v3658 = vunpack.c.l.b16 %v3619
    %v3659 = vunpack.c.l.b16 %v3620
    %v3660 = vunpack.c.l.b16 %v3621
    %v3661 = vunpack.c.l.b16 %v3622
    %v3662 = vunpack.c.l.b16 %v3623
    %v3663 = vpack.c.b16 %v3648, %v3647
    %v3664 = vpack.c.b16 %v3650, %v3649
    %v3665 = vpack.c.b16 %v3652, %v3651
    %v3666 = vpack.c.b16 %v3654, %v3653
    %v3667 = vpack.c.b16 %v3656, %v3655
    %v3668 = vpack.c.b16 %v3658, %v3657
    %v3669 = vpack.c.b16 %v3660, %v3659
    %v3670 = vpack.c.b16 %v3662, %v3661
    %3679 = vmatprep.subr.bf16.mxu0 0
    %3680 = vmatpush1.bf16.msra.mxu0 %v3663
    %3681 = vmatprep.subr.bf16.mxu0 0
    %3682 = vmatpush1.bf16.msra.mxu0 %v3664
    %3683 = vmatprep.subr.bf16.mxu0 0
    %3684 = vmatpush1.bf16.msra.mxu0 %v3665
    %3685 = vmatprep.subr.bf16.mxu0 0
    %3686 = vmatpush1.bf16.msra.mxu0 %v3666
    %3687 = vmatprep.subr.bf16.mxu0 0
    %3688 = vmatpush1.bf16.msra.mxu0 %v3667
    %3689 = vmatprep.subr.bf16.mxu0 0
    %3690 = vmatpush1.bf16.msra.mxu0 %v3668
    %3691 = vmatprep.subr.bf16.mxu0 0
    %3692 = vmatpush1.bf16.msra.mxu0 %v3669
    %3693 = vmatprep.subr.bf16.mxu0 0
    %3694 = vmatpush1.bf16.msra.mxu0 %v3670
    %3695 = vmatprep.subr.bf16.mxu0 0
    %3696 = vmatpush1.bf16.msra.mxu0 0
    %3697 = vmatprep.subr.bf16.mxu0 0
    %3698 = vmatpush1.bf16.msra.mxu0 0
    %3699 = vmatprep.subr.bf16.mxu0 0
    %3700 = vmatpush1.bf16.msra.mxu0 0
    %3701 = vmatprep.subr.bf16.mxu0 0
    %3702 = vmatpush1.bf16.msra.mxu0 0
    %3703 = vmatprep.subr.bf16.mxu0 0
    %3704 = vmatpush1.bf16.msra.mxu0 0
    %3705 = vmatprep.subr.bf16.mxu0 0
    %3706 = vmatpush1.bf16.msra.mxu0 0
    %3707 = vmatprep.subr.bf16.mxu0 0
    %3708 = vmatpush1.bf16.msra.mxu0 0
    %3709 = vmatprep.subr.bf16.mxu0 0
    %3710 = vmatpush1.bf16.msra.mxu0 0
    %3711 = vmatprep.mubr.bf16.mxu0 0
    %3712 = vmatmul.mubr.bf16.gmra.mrb[0].mxu0 %v3607
    %v3713 = vpop.f32.mrb[0].mxu0
    %v3714 = vadd.f32 %v3629, %v3713
    %v3715 = vpop.f32.mrb[0].mxu0
    %v3716 = vpop.f32.mrb[0].mxu0
    %v3717 = vpop.f32.mrb[0].mxu0
    %3718 = vdwg.mxu0
    %v3719 = vlaneseq
    %v3720 = vand.u32 %v3719, 127
    %vm3721 = vcmp.ge.s32.totalorder %v3720, 1
    %vm3722 = vcmp.le.s32.totalorder %v3720, 10
    %vm3723 = vmand %vm3721, %vm3722
    %v3724 = vsub.f32 0.0, %v3714
    %v3725 = vmul.f32 %v3724, 1.442695
    %v3726 = vpow.pop %v3725
    %v3727 = vadd.f32 %v3726, 1.0
    %v3728 = vrcp.pop %v3727
    %v3729 = vmul.f32 1.0, %v3728
    %v3730 = vsel %vm3723, %v3714, -1e+30
    %vm3731 = vcmask 1041408
    %v3732 = vsel %vm3731, %v3730, -inf
    %3733 = vmax.xlane.f32.xlu0 %v3732
    %v3734 = vpop.xlane.xlu0 %3733
    %v3735 = vsub.f32 %v3730, %v3734
    %v3736 = vmul.f32 %v3735, 1.442695
    %v3737 = vpow.pop %v3736
    %v3738 = vsel %vm3731, %v3737, 0.0
    %3739 = vadd.xlane.f32.xlu0 %v3738
    %v3740 = vpop.xlane.xlu0 %3739
    %v3741 = vrcp.pop %v3740
    %v3742 = vmul.f32 %v3737, %v3741
    %vm3743 = vcmp.eq.s32.totalorder %v3720, 0
    %v3744 = vsel %vm3743, %v3729, %v3742
    %3745 = vst [vmem:[#allocation24] sm:$0x3] %v3744
    // Predicated region
    $region94: #{tpu_custom_call.1} parent=1 // pred_check
      _
    $region95: #{tpu_custom_call.1} parent=1 // pred_check_branch
      %3747 = sbr.rel (0) target = $region97
    $region96: #{tpu_custom_call.1} parent=1 // pred_region
      %s3749 = ssub.s32 32, 32
      %3750 = vsyncadd [#allocation11], %s3749
      %s3752 = sshll.u32 [#allocation24], 4
      %s3753 = int_to_ptr.vmem [resolvable:$true] %s3752
      %3755 = dma.vmem_to_hbm [thread:$0]  %s3753, 32, %s14, [#allocation11]
    $region97: #{tpu_custom_call.1} parent=1 // pred_fallthru
      _
    // Predicated region
    $region98: #{tpu_custom_call.1} parent=1 // pred_check
      _
    $region99: #{tpu_custom_call.1} parent=1 // pred_check_branch
      %3757 = sbr.rel (0) target = $region101
    $region100: #{tpu_custom_call.1} parent=1 // pred_region
      %3758 = dma.done [#allocation11], 32
    $region101: #{tpu_custom_call.1} parent=1 // pred_fallthru
      _
    %3759 = vsyncpa [#allocation10], 1
    %3760 = vsyncpa [#allocation13], 1
    %3761 = vsyncpa [#allocation16], 1
    %3762 = vsyncpa [#allocation19], 1
    %3763 = vsyncpa [#allocation22], 1
    %3764 = vsyncpa [#allocation11], 1

</llo_original>
